<compile_context>
chip_gen: v7x
topology: tpu7x:2x2x1
jax: 0.10.0
libtpu: 0.0.40
codegen_flags: <defaults>
</compile_context>

<pallas_src>
import math
import jax
import jax.numpy as jnp
from jax import lax
from jax.experimental import pallas as pl
from jax.experimental.pallas import tpu as pltpu

HID_DIM = 32
N_HEADS = 4
HEAD_DIM = HID_DIM // N_HEADS
PF_DIM = 64
N_LAYERS = 2
SCALE = math.sqrt(HEAD_DIM)   # NOTE: some references scale by sqrt(hid_dim); kept as head_dim.
LN_EPS = 1e-5
VEC_W = 4 * HID_DIM           # 128-lane packed bias/LN slab width


# ----------------------------- in-kernel helpers -----------------------------

def _layer_norm(x, g, b):
    mu = jnp.mean(x, axis=-1, keepdims=True)
    var = jnp.mean((x - mu) ** 2, axis=-1, keepdims=True)
    return (x - mu) * lax.rsqrt(var + LN_EPS) * g + b


def _mha(q_in, kv_in, add_mask, w, b):
    """Multi-head attention with packed weights.

    q_in [Tq,H]; kv_in [Tk,H]; add_mask broadcastable to [Tq,Tk] (0 or -1e10).
    w [H, 4H] = Wq|Wk|Wv|Wo (Wq pre-scaled by 1/sqrt(head_dim));
    b [1, 4H] = bq|bk|bv|bo (bq pre-scaled).
    Returns (out [Tq,H], attn [Tq, N_HEADS*Tk]) with heads concatenated on lanes.
    """
    H = HID_DIM
    # Full-width projections: one matmul for Q, one for K|V, one for the output.
    q = jnp.dot(q_in, w[:, 0:H], preferred_element_type=jnp.float32) + b[:, 0:H]
    kv = jnp.dot(kv_in, w[:, H:3 * H], preferred_element_type=jnp.float32) + b[:, H:3 * H]
    k = kv[:, 0:H]
    v = kv[:, H:2 * H]

    ctxs, attns = [], []
    for h in range(N_HEADS):
        sl = slice(h * HEAD_DIM, (h + 1) * HEAD_DIM)
        energy = lax.dot_general(q[:, sl], k[:, sl], (((1,), (1,)), ((), ())),
                                 preferred_element_type=jnp.float32) + add_mask
        attn = jax.nn.softmax(energy, axis=-1)
        attns.append(attn)
        ctxs.append(jnp.dot(attn, v[:, sl], preferred_element_type=jnp.float32))

    ctx = jnp.concatenate(ctxs, axis=-1)                       # [Tq, H]
    out = jnp.dot(ctx, w[:, 3 * H:4 * H],
                  preferred_element_type=jnp.float32) + b[:, 3 * H:4 * H]
    return out, jnp.concatenate(attns, axis=-1)                # [Tq, N_HEADS*Tk]


# ----------------------------- the Pallas kernel ------------------------------

def decoder_kernel(trg_ref, enc_ref, tmask_ref, smask_ref,
                   wattn_ref, wff1_ref, wff2_ref, vec_ref,
                   out_trg_ref, out_attn_ref):
    H = HID_DIM
    x = trg_ref[0]            # [T, H]
    enc = enc_ref[0]          # [S, H]

    # Additive masks, computed once (not per head): 1 -> 0.0 , 0 -> -1e10.
    tmask_add = jnp.where(tmask_ref[0, 0] == 0.0, -1e10, 0.0)   # [T, T]
    smask_add = jnp.where(smask_ref[0, 0] == 0.0, -1e10, 0.0)   # [1, S]

    attn_slab = None
    for l in range(N_LAYERS):                                   # unrolled layer stack
        vecs = vec_ref[l]                                       # [8, 128]
        b_self = vecs[0:1, :]                                   # bq|bk|bv|bo (self)
        b_cross = vecs[1:2, :]                                  # bq|bk|bv|bo (cross)
        g1, be1 = vecs[2:3, 0:H], vecs[2:3, H:2 * H]
        g2, be2 = vecs[2:3, 2 * H:3 * H], vecs[2:3, 3 * H:4 * H]
        g3, be3 = vecs[3:4, 0:H], vecs[3:4, H:2 * H]
        bf2 = vecs[3:4, 2 * H:3 * H]
        bf1 = vecs[4:5, 0:PF_DIM]

        # ---- masked self-attention + residual + LayerNorm (dropout = identity) ----
        sa, _ = _mha(x, x, tmask_add, wattn_ref[l, 0], b_self)
        x = _layer_norm(x + sa, g1, be1)

        # ---- encoder (cross) attention + residual + LayerNorm ----
        ca, attn_slab = _mha(x, enc, smask_add, wattn_ref[l, 1], b_cross)
        x = _layer_norm(x + ca, g2, be2)

        # ---- position-wise feed-forward + residual + LayerNorm ----
        hdn = jnp.maximum(
            jnp.dot(x, wff1_ref[l], preferred_element_type=jnp.float32) + bf1, 0.0)
        ff = jnp.dot(hdn, wff2_ref[l], preferred_element_type=jnp.float32) + bf2
        x = _layer_norm(x + ff, g3, be3)

    out_trg_ref[0] = x
    out_attn_ref[0] = attn_slab    # last layer's cross-attention, heads on lanes


# ----------------------------- wrapper / glue ---------------------------------

def pack_params(params):
    """Pack per-layer weights into 4 slabs stacked along a leading layer dim."""
    w_attn, w_ff1, w_ff2, vecs = [], [], [], []
    for p in params:
        slab_self = jnp.concatenate(
            [p["wq1"] / SCALE, p["wk1"], p["wv1"], p["wo1"]], axis=1)    # [H, 4H]
        slab_cross = jnp.concatenate(
            [p["wq2"] / SCALE, p["wk2"], p["wv2"], p["wo2"]], axis=1)    # [H, 4H]
        w_attn.append(jnp.stack([slab_self, slab_cross], axis=0))        # [2, H, 4H]
        w_ff1.append(p["wf1"])                                           # [H, PF]
        w_ff2.append(p["wf2"])                                           # [PF, H]

        zeros_h = jnp.zeros((1, HID_DIM), jnp.float32)
        row0 = jnp.concatenate([p["bq1"] / SCALE, p["bk1"], p["bv1"], p["bo1"]], axis=1)
        row1 = jnp.concatenate([p["bq2"] / SCALE, p["bk2"], p["bv2"], p["bo2"]], axis=1)
        row2 = jnp.concatenate([p["g1"], p["be1"], p["g2"], p["be2"]], axis=1)
        row3 = jnp.concatenate([p["g3"], p["be3"], p["bf2"], zeros_h], axis=1)
        row4 = jnp.concatenate(
            [p["bf1"], jnp.zeros((1, VEC_W - PF_DIM), jnp.float32)], axis=1)
        pad = jnp.zeros((3, VEC_W), jnp.float32)
        vecs.append(jnp.concatenate([row0, row1, row2, row3, row4, pad], axis=0))  # [8,128]

    return (jnp.stack(w_attn), jnp.stack(w_ff1), jnp.stack(w_ff2), jnp.stack(vecs))


def decoder_forward(trg, enc_src, trg_mask, src_mask, params):
    B, T, H = trg.shape
    S = enc_src.shape[1]
    w_attn, w_ff1, w_ff2, vecs = pack_params(params)

    in_specs = [
        pl.BlockSpec((1, T, H), lambda b: (b, 0, 0)),
        pl.BlockSpec((1, S, H), lambda b: (b, 0, 0)),
        pl.BlockSpec((1, 1, T, T), lambda b: (b, 0, 0, 0)),
        pl.BlockSpec((1, 1, 1, S), lambda b: (b, 0, 0, 0)),
        pl.BlockSpec(w_attn.shape, lambda b: (0, 0, 0, 0)),   # shared across the grid
        pl.BlockSpec(w_ff1.shape, lambda b: (0, 0, 0)),
        pl.BlockSpec(w_ff2.shape, lambda b: (0, 0, 0)),
        pl.BlockSpec(vecs.shape, lambda b: (0, 0, 0)),
    ]
    out_shape = (
        jax.ShapeDtypeStruct((B, T, H), jnp.float32),
        jax.ShapeDtypeStruct((B, T, N_HEADS * S), jnp.float32),   # lane-dense attn slab
    )
    out_specs = (
        pl.BlockSpec((1, T, H), lambda b: (b, 0, 0)),
        pl.BlockSpec((1, T, N_HEADS * S), lambda b: (b, 0, 0)),
    )

    out_trg, attn_packed = pl.pallas_call(
        decoder_kernel,
        out_shape=out_shape,
        grid_spec=pltpu.PrefetchScalarGridSpec(
            num_scalar_prefetch=0,
            grid=(B,),
            in_specs=in_specs,
            out_specs=out_specs,
        ),
        compiler_params=pltpu.CompilerParams(dimension_semantics=("parallel",)),
    )(trg, enc_src, trg_mask, src_mask, w_attn, w_ff1, w_ff2, vecs)

    # [B, T, NH*S] -> [B, NH, T, S] (matches PyTorch attention layout)
    attention = attn_packed.reshape(B, T, N_HEADS, S).transpose(0, 2, 1, 3)
    return out_trg, attention


# ----------------------------- deterministic params ---------------------------

def init_params(key):
    params = []
    for _ in range(N_LAYERS):
        p = {}

        def nxt():
            nonlocal key
            key, sub = jax.random.split(key)
            return sub

        def lin(in_d, out_d):
            w = jax.random.normal(nxt(), (in_d, out_d), jnp.float32) / math.sqrt(in_d)
            b = jax.random.normal(nxt(), (1, out_d), jnp.float32) * 0.01
            return w, b

        p["wq1"], p["bq1"] = lin(HID_DIM, HID_DIM)
        p["wk1"], p["bk1"] = lin(HID_DIM, HID_DIM)
        p["wv1"], p["bv1"] = lin(HID_DIM, HID_DIM)
        p["wo1"], p["bo1"] = lin(HID_DIM, HID_DIM)
        p["g1"] = jnp.ones((1, HID_DIM), jnp.float32)
        p["be1"] = jnp.zeros((1, HID_DIM), jnp.float32)

        p["wq2"], p["bq2"] = lin(HID_DIM, HID_DIM)
        p["wk2"], p["bk2"] = lin(HID_DIM, HID_DIM)
        p["wv2"], p["bv2"] = lin(HID_DIM, HID_DIM)
        p["wo2"], p["bo2"] = lin(HID_DIM, HID_DIM)
        p["g2"] = jnp.ones((1, HID_DIM), jnp.float32)
        p["be2"] = jnp.zeros((1, HID_DIM), jnp.float32)

        p["wf1"], p["bf1"] = lin(HID_DIM, PF_DIM)
        p["wf2"], p["bf2"] = lin(PF_DIM, HID_DIM)
        p["g3"] = jnp.ones((1, HID_DIM), jnp.float32)
        p["be3"] = jnp.zeros((1, HID_DIM), jnp.float32)

        params.append(p)
    return params


if __name__ == "__main__":
    B, T, S = 2, 8, 8
    key = jax.random.PRNGKey(0)
    k_trg, k_enc, k_param = jax.random.split(key, 3)

    trg = jax.random.normal(k_trg, (B, T, HID_DIM), jnp.float32)
    enc_src = jax.random.normal(k_enc, (B, S, HID_DIM), jnp.float32)
    # causal mask for self-attention, all-ones padding mask for cross-attention
    trg_mask = jnp.broadcast_to(jnp.tril(jnp.ones((T, T), jnp.float32)), (B, 1, T, T))
    src_mask = jnp.ones((B, 1, 1, S), jnp.float32)

    params = init_params(k_param)

    out_trg, out_attn = decoder_forward(trg, enc_src, trg_mask, src_mask, params)
    jax.block_until_ready((out_trg, out_attn))

    assert out_trg.shape == (B, T, HID_DIM)
    assert out_attn.shape == (B, N_HEADS, T, S)
    print("KERNEL_OK")
</pallas_src>

<mosaic_0001>
module attributes {stable_mosaic.version = 11 : i64} {
  func.func @decoder_kernel(%arg0: i32, %arg1: memref<1x8x32xf32, #tpu.memory_space<vmem>>, %arg2: memref<1x8x32xf32, #tpu.memory_space<vmem>>, %arg3: memref<1x1x8x8xf32, #tpu.memory_space<vmem>>, %arg4: memref<1x1x1x8xf32, #tpu.memory_space<vmem>>, %arg5: memref<2x2x32x128xf32, #tpu.memory_space<vmem>>, %arg6: memref<2x32x64xf32, #tpu.memory_space<vmem>>, %arg7: memref<2x64x32xf32, #tpu.memory_space<vmem>>, %arg8: memref<2x8x128xf32, #tpu.memory_space<vmem>>, %arg9: memref<1x8x32xf32, #tpu.memory_space<vmem>>, %arg10: memref<1x8x32xf32, #tpu.memory_space<vmem>>) attributes {dimension_semantics = [#tpu.dimension_semantics<parallel>], iteration_bounds = array<i64: 2>, scalar_prefetch = 0 : i64, scratch_operands = 0 : i64, tpu.core_type = #tpu.core_type<tc>, window_params = [{transform_indices = @transform_0, window_bounds = array<i64: 1, 8, 32>}, {transform_indices = @transform_1, window_bounds = array<i64: 1, 8, 32>}, {transform_indices = @transform_2, window_bounds = array<i64: 1, 1, 8, 8>}, {transform_indices = @transform_3, window_bounds = array<i64: 1, 1, 1, 8>}, {pipeline_mode = #tpu.pipeline_mode<synchronous>, transform_indices = @transform_4, window_bounds = array<i64: 2, 2, 32, 128>}, {pipeline_mode = #tpu.pipeline_mode<synchronous>, transform_indices = @transform_5, window_bounds = array<i64: 2, 32, 64>}, {pipeline_mode = #tpu.pipeline_mode<synchronous>, transform_indices = @transform_6, window_bounds = array<i64: 2, 64, 32>}, {pipeline_mode = #tpu.pipeline_mode<synchronous>, transform_indices = @transform_7, window_bounds = array<i64: 2, 8, 128>}, {transform_indices = @transform_8, window_bounds = array<i64: 1, 8, 32>}, {transform_indices = @transform_9, window_bounds = array<i64: 1, 8, 32>}]} {
    %c0 = arith.constant 0 : index
    %c0_0 = arith.constant 0 : index
    %c0_1 = arith.constant 0 : index
    %0 = vector.load %arg1[%c0, %c0_0, %c0_1] : memref<1x8x32xf32, #tpu.memory_space<vmem>>, vector<1x8x32xf32>
    %1 = vector.shape_cast %0 : vector<1x8x32xf32> to vector<8x32xf32>
    %c0_2 = arith.constant 0 : index
    %c0_3 = arith.constant 0 : index
    %c0_4 = arith.constant 0 : index
    %2 = vector.load %arg2[%c0_2, %c0_3, %c0_4] : memref<1x8x32xf32, #tpu.memory_space<vmem>>, vector<1x8x32xf32>
    %3 = vector.shape_cast %2 : vector<1x8x32xf32> to vector<8x32xf32>
    %c0_5 = arith.constant 0 : index
    %c0_6 = arith.constant 0 : index
    %c0_7 = arith.constant 0 : index
    %c0_8 = arith.constant 0 : index
    %4 = vector.load %arg3[%c0_5, %c0_6, %c0_7, %c0_8] : memref<1x1x8x8xf32, #tpu.memory_space<vmem>>, vector<1x1x8x8xf32>
    %5 = vector.shape_cast %4 : vector<1x1x8x8xf32> to vector<8x8xf32>
    %cst = arith.constant 0.000000e+00 : f32
    %6 = vector.broadcast %cst : f32 to vector<8x8xf32>
    %7 = arith.cmpf oeq, %5, %6 : vector<8x8xf32>
    %cst_9 = arith.constant -1.000000e+10 : f32
    %cst_10 = arith.constant 0.000000e+00 : f32
    %8 = vector.broadcast %cst_9 : f32 to vector<8x8xf32>
    %9 = vector.broadcast %cst_10 : f32 to vector<8x8xf32>
    %10 = arith.select %7, %8, %9 : vector<8x8xi1>, vector<8x8xf32>
    %c0_11 = arith.constant 0 : index
    %c0_12 = arith.constant 0 : index
    %c0_13 = arith.constant 0 : index
    %c0_14 = arith.constant 0 : index
    %11 = vector.load %arg4[%c0_11, %c0_12, %c0_13, %c0_14] : memref<1x1x1x8xf32, #tpu.memory_space<vmem>>, vector<1x1x1x8xf32>
    %12 = vector.shape_cast %11 : vector<1x1x1x8xf32> to vector<1x8xf32>
    %cst_15 = arith.constant 0.000000e+00 : f32
    %13 = vector.broadcast %cst_15 : f32 to vector<1x8xf32>
    %14 = arith.cmpf oeq, %12, %13 : vector<1x8xf32>
    %cst_16 = arith.constant -1.000000e+10 : f32
    %cst_17 = arith.constant 0.000000e+00 : f32
    %15 = vector.broadcast %cst_16 : f32 to vector<1x8xf32>
    %16 = vector.broadcast %cst_17 : f32 to vector<1x8xf32>
    %17 = arith.select %14, %15, %16 : vector<1x8xi1>, vector<1x8xf32>
    %c0_18 = arith.constant 0 : index
    %c0_19 = arith.constant 0 : index
    %c0_20 = arith.constant 0 : index
    %18 = vector.load %arg8[%c0_18, %c0_19, %c0_20] : memref<2x8x128xf32, #tpu.memory_space<vmem>>, vector<1x8x128xf32>
    %19 = vector.shape_cast %18 : vector<1x8x128xf32> to vector<8x128xf32>
    %20 = vector.extract_strided_slice %19 {offsets = [0, 0], sizes = [1, 128], strides = [1, 1]} : vector<8x128xf32> to vector<1x128xf32>
    %21 = vector.extract_strided_slice %19 {offsets = [1, 0], sizes = [1, 128], strides = [1, 1]} : vector<8x128xf32> to vector<1x128xf32>
    %22 = vector.extract_strided_slice %19 {offsets = [2, 0], sizes = [1, 32], strides = [1, 1]} : vector<8x128xf32> to vector<1x32xf32>
    %23 = vector.extract_strided_slice %19 {offsets = [2, 32], sizes = [1, 32], strides = [1, 1]} : vector<8x128xf32> to vector<1x32xf32>
    %24 = vector.extract_strided_slice %19 {offsets = [2, 64], sizes = [1, 32], strides = [1, 1]} : vector<8x128xf32> to vector<1x32xf32>
    %25 = vector.extract_strided_slice %19 {offsets = [2, 96], sizes = [1, 32], strides = [1, 1]} : vector<8x128xf32> to vector<1x32xf32>
    %26 = vector.extract_strided_slice %19 {offsets = [3, 0], sizes = [1, 32], strides = [1, 1]} : vector<8x128xf32> to vector<1x32xf32>
    %27 = vector.extract_strided_slice %19 {offsets = [3, 32], sizes = [1, 32], strides = [1, 1]} : vector<8x128xf32> to vector<1x32xf32>
    %28 = vector.extract_strided_slice %19 {offsets = [3, 64], sizes = [1, 32], strides = [1, 1]} : vector<8x128xf32> to vector<1x32xf32>
    %29 = vector.extract_strided_slice %19 {offsets = [4, 0], sizes = [1, 64], strides = [1, 1]} : vector<8x128xf32> to vector<1x64xf32>
    %c0_21 = arith.constant 0 : index
    %c0_22 = arith.constant 0 : index
    %c0_23 = arith.constant 0 : index
    %c0_24 = arith.constant 0 : index
    %30 = vector.load %arg5[%c0_21, %c0_22, %c0_23, %c0_24] : memref<2x2x32x128xf32, #tpu.memory_space<vmem>>, vector<1x1x32x128xf32>
    %31 = vector.shape_cast %30 : vector<1x1x32x128xf32> to vector<32x128xf32>
    %32 = vector.extract_strided_slice %31 {offsets = [0, 0], sizes = [32, 32], strides = [1, 1]} : vector<32x128xf32> to vector<32x32xf32>
    %cst_25 = arith.constant dense<0.000000e+00> : vector<8x32xf32>
    %33 = tpu.matmul %1, %32, %cst_25 {dimension_numbers = #tpu.dot_dimension_numbers<[1], [0], [0], [1], [0, 0, 1, 1], [], []>} : vector<8x32xf32>, vector<32x32xf32>, vector<8x32xf32> -> vector<8x32xf32>
    %34 = vector.extract_strided_slice %20 {offsets = [0, 0], sizes = [1, 32], strides = [1, 1]} : vector<1x128xf32> to vector<1x32xf32>
    %35 = vector.broadcast %34 : vector<1x32xf32> to vector<8x32xf32>
    %36 = arith.addf %33, %35 : vector<8x32xf32>
    %37 = vector.extract_strided_slice %31 {offsets = [0, 32], sizes = [32, 64], strides = [1, 1]} : vector<32x128xf32> to vector<32x64xf32>
    %cst_26 = arith.constant dense<0.000000e+00> : vector<8x64xf32>
    %38 = tpu.matmul %1, %37, %cst_26 {dimension_numbers = #tpu.dot_dimension_numbers<[1], [0], [0], [1], [0, 0, 1, 1], [], []>} : vector<8x32xf32>, vector<32x64xf32>, vector<8x64xf32> -> vector<8x64xf32>
    %39 = vector.extract_strided_slice %20 {offsets = [0, 32], sizes = [1, 64], strides = [1, 1]} : vector<1x128xf32> to vector<1x64xf32>
    %40 = vector.broadcast %39 : vector<1x64xf32> to vector<8x64xf32>
    %41 = arith.addf %38, %40 : vector<8x64xf32>
    %42 = vector.extract_strided_slice %41 {offsets = [0, 0], sizes = [8, 32], strides = [1, 1]} : vector<8x64xf32> to vector<8x32xf32>
    %43 = vector.extract_strided_slice %41 {offsets = [0, 32], sizes = [8, 32], strides = [1, 1]} : vector<8x64xf32> to vector<8x32xf32>
    %44 = vector.extract_strided_slice %36 {offsets = [0, 0], sizes = [8, 8], strides = [1, 1]} : vector<8x32xf32> to vector<8x8xf32>
    %45 = vector.extract_strided_slice %42 {offsets = [0, 0], sizes = [8, 8], strides = [1, 1]} : vector<8x32xf32> to vector<8x8xf32>
    %cst_27 = arith.constant dense<0.000000e+00> : vector<8x8xf32>
    %46 = tpu.matmul %44, %45, %cst_27 {dimension_numbers = #tpu.dot_dimension_numbers<[1], [1], [0], [0], [0, 0, 1, 0], [], []>} : vector<8x8xf32>, vector<8x8xf32>, vector<8x8xf32> -> vector<8x8xf32>
    %47 = arith.addf %46, %10 : vector<8x8xf32>
    %cst_28 = arith.constant dense<0xFF800000> : vector<8xf32>
    %48 = vector.multi_reduction <maximumf>, %47, %cst_28 [1] : vector<8x8xf32> to vector<8xf32>
    %cst_29 = arith.constant 0xFF800000 : f32
    %49 = vector.broadcast %cst_29 : f32 to vector<8xf32>
    %50 = arith.maximumf %49, %48 : vector<8xf32>
    %51 = vector.shape_cast %50 : vector<8xf32> to vector<8x1xf32>
    %52 = vector.broadcast %51 : vector<8x1xf32> to vector<8x8xf32>
    %53 = arith.subf %47, %52 : vector<8x8xf32>
    %54 = math.exp %53 : vector<8x8xf32>
    %cst_30 = arith.constant dense<0.000000e+00> : vector<8xf32>
    %55 = vector.multi_reduction <add>, %54, %cst_30 [1] : vector<8x8xf32> to vector<8xf32>
    %56 = vector.shape_cast %55 : vector<8xf32> to vector<8x1xf32>
    %57 = vector.broadcast %56 : vector<8x1xf32> to vector<8x8xf32>
    %58 = arith.divf %54, %57 : vector<8x8xf32>
    %59 = vector.extract_strided_slice %43 {offsets = [0, 0], sizes = [8, 8], strides = [1, 1]} : vector<8x32xf32> to vector<8x8xf32>
    %cst_31 = arith.constant dense<0.000000e+00> : vector<8x8xf32>
    %60 = tpu.matmul %58, %59, %cst_31 {dimension_numbers = #tpu.dot_dimension_numbers<[1], [0], [0], [1], [0, 0, 1, 1], [], []>} : vector<8x8xf32>, vector<8x8xf32>, vector<8x8xf32> -> vector<8x8xf32>
    %61 = vector.extract_strided_slice %36 {offsets = [0, 8], sizes = [8, 8], strides = [1, 1]} : vector<8x32xf32> to vector<8x8xf32>
    %62 = vector.extract_strided_slice %42 {offsets = [0, 8], sizes = [8, 8], strides = [1, 1]} : vector<8x32xf32> to vector<8x8xf32>
    %cst_32 = arith.constant dense<0.000000e+00> : vector<8x8xf32>
    %63 = tpu.matmul %61, %62, %cst_32 {dimension_numbers = #tpu.dot_dimension_numbers<[1], [1], [0], [0], [0, 0, 1, 0], [], []>} : vector<8x8xf32>, vector<8x8xf32>, vector<8x8xf32> -> vector<8x8xf32>
    %64 = arith.addf %63, %10 : vector<8x8xf32>
    %cst_33 = arith.constant dense<0xFF800000> : vector<8xf32>
    %65 = vector.multi_reduction <maximumf>, %64, %cst_33 [1] : vector<8x8xf32> to vector<8xf32>
    %cst_34 = arith.constant 0xFF800000 : f32
    %66 = vector.broadcast %cst_34 : f32 to vector<8xf32>
    %67 = arith.maximumf %66, %65 : vector<8xf32>
    %68 = vector.shape_cast %67 : vector<8xf32> to vector<8x1xf32>
    %69 = vector.broadcast %68 : vector<8x1xf32> to vector<8x8xf32>
    %70 = arith.subf %64, %69 : vector<8x8xf32>
    %71 = math.exp %70 : vector<8x8xf32>
    %cst_35 = arith.constant dense<0.000000e+00> : vector<8xf32>
    %72 = vector.multi_reduction <add>, %71, %cst_35 [1] : vector<8x8xf32> to vector<8xf32>
    %73 = vector.shape_cast %72 : vector<8xf32> to vector<8x1xf32>
    %74 = vector.broadcast %73 : vector<8x1xf32> to vector<8x8xf32>
    %75 = arith.divf %71, %74 : vector<8x8xf32>
    %76 = vector.extract_strided_slice %43 {offsets = [0, 8], sizes = [8, 8], strides = [1, 1]} : vector<8x32xf32> to vector<8x8xf32>
    %cst_36 = arith.constant dense<0.000000e+00> : vector<8x8xf32>
    %77 = tpu.matmul %75, %76, %cst_36 {dimension_numbers = #tpu.dot_dimension_numbers<[1], [0], [0], [1], [0, 0, 1, 1], [], []>} : vector<8x8xf32>, vector<8x8xf32>, vector<8x8xf32> -> vector<8x8xf32>
    %78 = vector.extract_strided_slice %36 {offsets = [0, 16], sizes = [8, 8], strides = [1, 1]} : vector<8x32xf32> to vector<8x8xf32>
    %79 = vector.extract_strided_slice %42 {offsets = [0, 16], sizes = [8, 8], strides = [1, 1]} : vector<8x32xf32> to vector<8x8xf32>
    %cst_37 = arith.constant dense<0.000000e+00> : vector<8x8xf32>
    %80 = tpu.matmul %78, %79, %cst_37 {dimension_numbers = #tpu.dot_dimension_numbers<[1], [1], [0], [0], [0, 0, 1, 0], [], []>} : vector<8x8xf32>, vector<8x8xf32>, vector<8x8xf32> -> vector<8x8xf32>
    %81 = arith.addf %80, %10 : vector<8x8xf32>
    %cst_38 = arith.constant dense<0xFF800000> : vector<8xf32>
    %82 = vector.multi_reduction <maximumf>, %81, %cst_38 [1] : vector<8x8xf32> to vector<8xf32>
    %cst_39 = arith.constant 0xFF800000 : f32
    %83 = vector.broadcast %cst_39 : f32 to vector<8xf32>
    %84 = arith.maximumf %83, %82 : vector<8xf32>
    %85 = vector.shape_cast %84 : vector<8xf32> to vector<8x1xf32>
    %86 = vector.broadcast %85 : vector<8x1xf32> to vector<8x8xf32>
    %87 = arith.subf %81, %86 : vector<8x8xf32>
    %88 = math.exp %87 : vector<8x8xf32>
    %cst_40 = arith.constant dense<0.000000e+00> : vector<8xf32>
    %89 = vector.multi_reduction <add>, %88, %cst_40 [1] : vector<8x8xf32> to vector<8xf32>
    %90 = vector.shape_cast %89 : vector<8xf32> to vector<8x1xf32>
    %91 = vector.broadcast %90 : vector<8x1xf32> to vector<8x8xf32>
    %92 = arith.divf %88, %91 : vector<8x8xf32>
    %93 = vector.extract_strided_slice %43 {offsets = [0, 16], sizes = [8, 8], strides = [1, 1]} : vector<8x32xf32> to vector<8x8xf32>
    %cst_41 = arith.constant dense<0.000000e+00> : vector<8x8xf32>
    %94 = tpu.matmul %92, %93, %cst_41 {dimension_numbers = #tpu.dot_dimension_numbers<[1], [0], [0], [1], [0, 0, 1, 1], [], []>} : vector<8x8xf32>, vector<8x8xf32>, vector<8x8xf32> -> vector<8x8xf32>
    %95 = vector.extract_strided_slice %36 {offsets = [0, 24], sizes = [8, 8], strides = [1, 1]} : vector<8x32xf32> to vector<8x8xf32>
    %96 = vector.extract_strided_slice %42 {offsets = [0, 24], sizes = [8, 8], strides = [1, 1]} : vector<8x32xf32> to vector<8x8xf32>
    %cst_42 = arith.constant dense<0.000000e+00> : vector<8x8xf32>
    %97 = tpu.matmul %95, %96, %cst_42 {dimension_numbers = #tpu.dot_dimension_numbers<[1], [1], [0], [0], [0, 0, 1, 0], [], []>} : vector<8x8xf32>, vector<8x8xf32>, vector<8x8xf32> -> vector<8x8xf32>
    %98 = arith.addf %97, %10 : vector<8x8xf32>
    %cst_43 = arith.constant dense<0xFF800000> : vector<8xf32>
    %99 = vector.multi_reduction <maximumf>, %98, %cst_43 [1] : vector<8x8xf32> to vector<8xf32>
    %cst_44 = arith.constant 0xFF800000 : f32
    %100 = vector.broadcast %cst_44 : f32 to vector<8xf32>
    %101 = arith.maximumf %100, %99 : vector<8xf32>
    %102 = vector.shape_cast %101 : vector<8xf32> to vector<8x1xf32>
    %103 = vector.broadcast %102 : vector<8x1xf32> to vector<8x8xf32>
    %104 = arith.subf %98, %103 : vector<8x8xf32>
    %105 = math.exp %104 : vector<8x8xf32>
    %cst_45 = arith.constant dense<0.000000e+00> : vector<8xf32>
    %106 = vector.multi_reduction <add>, %105, %cst_45 [1] : vector<8x8xf32> to vector<8xf32>
    %107 = vector.shape_cast %106 : vector<8xf32> to vector<8x1xf32>
    %108 = vector.broadcast %107 : vector<8x1xf32> to vector<8x8xf32>
    %109 = arith.divf %105, %108 : vector<8x8xf32>
    %110 = vector.extract_strided_slice %43 {offsets = [0, 24], sizes = [8, 8], strides = [1, 1]} : vector<8x32xf32> to vector<8x8xf32>
    %cst_46 = arith.constant dense<0.000000e+00> : vector<8x8xf32>
    %111 = tpu.matmul %109, %110, %cst_46 {dimension_numbers = #tpu.dot_dimension_numbers<[1], [0], [0], [1], [0, 0, 1, 1], [], []>} : vector<8x8xf32>, vector<8x8xf32>, vector<8x8xf32> -> vector<8x8xf32>
    %112 = tpu.concatenate %60, %77, %94, %111 in 1 : vector<8x8xf32>, vector<8x8xf32>, vector<8x8xf32>, vector<8x8xf32> -> vector<8x32xf32>
    %113 = vector.extract_strided_slice %31 {offsets = [0, 96], sizes = [32, 32], strides = [1, 1]} : vector<32x128xf32> to vector<32x32xf32>
    %cst_47 = arith.constant dense<0.000000e+00> : vector<8x32xf32>
    %114 = tpu.matmul %112, %113, %cst_47 {dimension_numbers = #tpu.dot_dimension_numbers<[1], [0], [0], [1], [0, 0, 1, 1], [], []>} : vector<8x32xf32>, vector<32x32xf32>, vector<8x32xf32> -> vector<8x32xf32>
    %115 = vector.extract_strided_slice %20 {offsets = [0, 96], sizes = [1, 32], strides = [1, 1]} : vector<1x128xf32> to vector<1x32xf32>
    %116 = vector.broadcast %115 : vector<1x32xf32> to vector<8x32xf32>
    %117 = arith.addf %114, %116 : vector<8x32xf32>
    %118 = arith.addf %1, %117 : vector<8x32xf32>
    %cst_48 = arith.constant dense<0.000000e+00> : vector<8xf32>
    %119 = vector.multi_reduction <add>, %118, %cst_48 [1] : vector<8x32xf32> to vector<8xf32>
    %120 = vector.shape_cast %119 : vector<8xf32> to vector<8x1xf32>
    %cst_49 = arith.constant 3.200000e+01 : f32
    %121 = vector.broadcast %cst_49 : f32 to vector<8x1xf32>
    %122 = arith.divf %120, %121 : vector<8x1xf32>
    %123 = vector.broadcast %122 : vector<8x1xf32> to vector<8x32xf32>
    %124 = arith.subf %118, %123 : vector<8x32xf32>
    %125 = arith.mulf %124, %124 : vector<8x32xf32>
    %cst_50 = arith.constant dense<0.000000e+00> : vector<8xf32>
    %126 = vector.multi_reduction <add>, %125, %cst_50 [1] : vector<8x32xf32> to vector<8xf32>
    %127 = vector.shape_cast %126 : vector<8xf32> to vector<8x1xf32>
    %cst_51 = arith.constant 3.200000e+01 : f32
    %128 = vector.broadcast %cst_51 : f32 to vector<8x1xf32>
    %129 = arith.divf %127, %128 : vector<8x1xf32>
    %130 = vector.broadcast %122 : vector<8x1xf32> to vector<8x32xf32>
    %131 = arith.subf %118, %130 : vector<8x32xf32>
    %cst_52 = arith.constant 9.99999974E-6 : f32
    %132 = vector.broadcast %cst_52 : f32 to vector<8x1xf32>
    %133 = arith.addf %129, %132 : vector<8x1xf32>
    %134 = math.rsqrt %133 : vector<8x1xf32>
    %135 = vector.broadcast %134 : vector<8x1xf32> to vector<8x32xf32>
    %136 = arith.mulf %131, %135 : vector<8x32xf32>
    %137 = vector.broadcast %22 : vector<1x32xf32> to vector<8x32xf32>
    %138 = arith.mulf %136, %137 : vector<8x32xf32>
    %139 = vector.broadcast %23 : vector<1x32xf32> to vector<8x32xf32>
    %140 = arith.addf %138, %139 : vector<8x32xf32>
    %c0_53 = arith.constant 0 : index
    %c1 = arith.constant 1 : index
    %c0_54 = arith.constant 0 : index
    %c0_55 = arith.constant 0 : index
    %141 = vector.load %arg5[%c0_53, %c1, %c0_54, %c0_55] : memref<2x2x32x128xf32, #tpu.memory_space<vmem>>, vector<1x1x32x128xf32>
    %142 = vector.shape_cast %141 : vector<1x1x32x128xf32> to vector<32x128xf32>
    %143 = vector.extract_strided_slice %142 {offsets = [0, 0], sizes = [32, 32], strides = [1, 1]} : vector<32x128xf32> to vector<32x32xf32>
    %cst_56 = arith.constant dense<0.000000e+00> : vector<8x32xf32>
    %144 = tpu.matmul %140, %143, %cst_56 {dimension_numbers = #tpu.dot_dimension_numbers<[1], [0], [0], [1], [0, 0, 1, 1], [], []>} : vector<8x32xf32>, vector<32x32xf32>, vector<8x32xf32> -> vector<8x32xf32>
    %145 = vector.extract_strided_slice %21 {offsets = [0, 0], sizes = [1, 32], strides = [1, 1]} : vector<1x128xf32> to vector<1x32xf32>
    %146 = vector.broadcast %145 : vector<1x32xf32> to vector<8x32xf32>
    %147 = arith.addf %144, %146 : vector<8x32xf32>
    %148 = vector.extract_strided_slice %142 {offsets = [0, 32], sizes = [32, 64], strides = [1, 1]} : vector<32x128xf32> to vector<32x64xf32>
    %cst_57 = arith.constant dense<0.000000e+00> : vector<8x64xf32>
    %149 = tpu.matmul %3, %148, %cst_57 {dimension_numbers = #tpu.dot_dimension_numbers<[1], [0], [0], [1], [0, 0, 1, 1], [], []>} : vector<8x32xf32>, vector<32x64xf32>, vector<8x64xf32> -> vector<8x64xf32>
    %150 = vector.extract_strided_slice %21 {offsets = [0, 32], sizes = [1, 64], strides = [1, 1]} : vector<1x128xf32> to vector<1x64xf32>
    %151 = vector.broadcast %150 : vector<1x64xf32> to vector<8x64xf32>
    %152 = arith.addf %149, %151 : vector<8x64xf32>
    %153 = vector.extract_strided_slice %152 {offsets = [0, 0], sizes = [8, 32], strides = [1, 1]} : vector<8x64xf32> to vector<8x32xf32>
    %154 = vector.extract_strided_slice %152 {offsets = [0, 32], sizes = [8, 32], strides = [1, 1]} : vector<8x64xf32> to vector<8x32xf32>
    %155 = vector.extract_strided_slice %147 {offsets = [0, 0], sizes = [8, 8], strides = [1, 1]} : vector<8x32xf32> to vector<8x8xf32>
    %156 = vector.extract_strided_slice %153 {offsets = [0, 0], sizes = [8, 8], strides = [1, 1]} : vector<8x32xf32> to vector<8x8xf32>
    %cst_58 = arith.constant dense<0.000000e+00> : vector<8x8xf32>
    %157 = tpu.matmul %155, %156, %cst_58 {dimension_numbers = #tpu.dot_dimension_numbers<[1], [1], [0], [0], [0, 0, 1, 0], [], []>} : vector<8x8xf32>, vector<8x8xf32>, vector<8x8xf32> -> vector<8x8xf32>
    %158 = vector.broadcast %17 : vector<1x8xf32> to vector<8x8xf32>
    %159 = arith.addf %157, %158 : vector<8x8xf32>
    %cst_59 = arith.constant dense<0xFF800000> : vector<8xf32>
    %160 = vector.multi_reduction <maximumf>, %159, %cst_59 [1] : vector<8x8xf32> to vector<8xf32>
    %cst_60 = arith.constant 0xFF800000 : f32
    %161 = vector.broadcast %cst_60 : f32 to vector<8xf32>
    %162 = arith.maximumf %161, %160 : vector<8xf32>
    %163 = vector.shape_cast %162 : vector<8xf32> to vector<8x1xf32>
    %164 = vector.broadcast %163 : vector<8x1xf32> to vector<8x8xf32>
    %165 = arith.subf %159, %164 : vector<8x8xf32>
    %166 = math.exp %165 : vector<8x8xf32>
    %cst_61 = arith.constant dense<0.000000e+00> : vector<8xf32>
    %167 = vector.multi_reduction <add>, %166, %cst_61 [1] : vector<8x8xf32> to vector<8xf32>
    %168 = vector.shape_cast %167 : vector<8xf32> to vector<8x1xf32>
    %169 = vector.broadcast %168 : vector<8x1xf32> to vector<8x8xf32>
    %170 = arith.divf %166, %169 : vector<8x8xf32>
    %171 = vector.extract_strided_slice %154 {offsets = [0, 0], sizes = [8, 8], strides = [1, 1]} : vector<8x32xf32> to vector<8x8xf32>
    %cst_62 = arith.constant dense<0.000000e+00> : vector<8x8xf32>
    %172 = tpu.matmul %170, %171, %cst_62 {dimension_numbers = #tpu.dot_dimension_numbers<[1], [0], [0], [1], [0, 0, 1, 1], [], []>} : vector<8x8xf32>, vector<8x8xf32>, vector<8x8xf32> -> vector<8x8xf32>
    %173 = vector.extract_strided_slice %147 {offsets = [0, 8], sizes = [8, 8], strides = [1, 1]} : vector<8x32xf32> to vector<8x8xf32>
    %174 = vector.extract_strided_slice %153 {offsets = [0, 8], sizes = [8, 8], strides = [1, 1]} : vector<8x32xf32> to vector<8x8xf32>
    %cst_63 = arith.constant dense<0.000000e+00> : vector<8x8xf32>
    %175 = tpu.matmul %173, %174, %cst_63 {dimension_numbers = #tpu.dot_dimension_numbers<[1], [1], [0], [0], [0, 0, 1, 0], [], []>} : vector<8x8xf32>, vector<8x8xf32>, vector<8x8xf32> -> vector<8x8xf32>
    %176 = vector.broadcast %17 : vector<1x8xf32> to vector<8x8xf32>
    %177 = arith.addf %175, %176 : vector<8x8xf32>
    %cst_64 = arith.constant dense<0xFF800000> : vector<8xf32>
    %178 = vector.multi_reduction <maximumf>, %177, %cst_64 [1] : vector<8x8xf32> to vector<8xf32>
    %cst_65 = arith.constant 0xFF800000 : f32
    %179 = vector.broadcast %cst_65 : f32 to vector<8xf32>
    %180 = arith.maximumf %179, %178 : vector<8xf32>
    %181 = vector.shape_cast %180 : vector<8xf32> to vector<8x1xf32>
    %182 = vector.broadcast %181 : vector<8x1xf32> to vector<8x8xf32>
    %183 = arith.subf %177, %182 : vector<8x8xf32>
    %184 = math.exp %183 : vector<8x8xf32>
    %cst_66 = arith.constant dense<0.000000e+00> : vector<8xf32>
    %185 = vector.multi_reduction <add>, %184, %cst_66 [1] : vector<8x8xf32> to vector<8xf32>
    %186 = vector.shape_cast %185 : vector<8xf32> to vector<8x1xf32>
    %187 = vector.broadcast %186 : vector<8x1xf32> to vector<8x8xf32>
    %188 = arith.divf %184, %187 : vector<8x8xf32>
    %189 = vector.extract_strided_slice %154 {offsets = [0, 8], sizes = [8, 8], strides = [1, 1]} : vector<8x32xf32> to vector<8x8xf32>
    %cst_67 = arith.constant dense<0.000000e+00> : vector<8x8xf32>
    %190 = tpu.matmul %188, %189, %cst_67 {dimension_numbers = #tpu.dot_dimension_numbers<[1], [0], [0], [1], [0, 0, 1, 1], [], []>} : vector<8x8xf32>, vector<8x8xf32>, vector<8x8xf32> -> vector<8x8xf32>
    %191 = vector.extract_strided_slice %147 {offsets = [0, 16], sizes = [8, 8], strides = [1, 1]} : vector<8x32xf32> to vector<8x8xf32>
    %192 = vector.extract_strided_slice %153 {offsets = [0, 16], sizes = [8, 8], strides = [1, 1]} : vector<8x32xf32> to vector<8x8xf32>
    %cst_68 = arith.constant dense<0.000000e+00> : vector<8x8xf32>
    %193 = tpu.matmul %191, %192, %cst_68 {dimension_numbers = #tpu.dot_dimension_numbers<[1], [1], [0], [0], [0, 0, 1, 0], [], []>} : vector<8x8xf32>, vector<8x8xf32>, vector<8x8xf32> -> vector<8x8xf32>
    %194 = vector.broadcast %17 : vector<1x8xf32> to vector<8x8xf32>
    %195 = arith.addf %193, %194 : vector<8x8xf32>
    %cst_69 = arith.constant dense<0xFF800000> : vector<8xf32>
    %196 = vector.multi_reduction <maximumf>, %195, %cst_69 [1] : vector<8x8xf32> to vector<8xf32>
    %cst_70 = arith.constant 0xFF800000 : f32
    %197 = vector.broadcast %cst_70 : f32 to vector<8xf32>
    %198 = arith.maximumf %197, %196 : vector<8xf32>
    %199 = vector.shape_cast %198 : vector<8xf32> to vector<8x1xf32>
    %200 = vector.broadcast %199 : vector<8x1xf32> to vector<8x8xf32>
    %201 = arith.subf %195, %200 : vector<8x8xf32>
    %202 = math.exp %201 : vector<8x8xf32>
    %cst_71 = arith.constant dense<0.000000e+00> : vector<8xf32>
    %203 = vector.multi_reduction <add>, %202, %cst_71 [1] : vector<8x8xf32> to vector<8xf32>
    %204 = vector.shape_cast %203 : vector<8xf32> to vector<8x1xf32>
    %205 = vector.broadcast %204 : vector<8x1xf32> to vector<8x8xf32>
    %206 = arith.divf %202, %205 : vector<8x8xf32>
    %207 = vector.extract_strided_slice %154 {offsets = [0, 16], sizes = [8, 8], strides = [1, 1]} : vector<8x32xf32> to vector<8x8xf32>
    %cst_72 = arith.constant dense<0.000000e+00> : vector<8x8xf32>
    %208 = tpu.matmul %206, %207, %cst_72 {dimension_numbers = #tpu.dot_dimension_numbers<[1], [0], [0], [1], [0, 0, 1, 1], [], []>} : vector<8x8xf32>, vector<8x8xf32>, vector<8x8xf32> -> vector<8x8xf32>
    %209 = vector.extract_strided_slice %147 {offsets = [0, 24], sizes = [8, 8], strides = [1, 1]} : vector<8x32xf32> to vector<8x8xf32>
    %210 = vector.extract_strided_slice %153 {offsets = [0, 24], sizes = [8, 8], strides = [1, 1]} : vector<8x32xf32> to vector<8x8xf32>
    %cst_73 = arith.constant dense<0.000000e+00> : vector<8x8xf32>
    %211 = tpu.matmul %209, %210, %cst_73 {dimension_numbers = #tpu.dot_dimension_numbers<[1], [1], [0], [0], [0, 0, 1, 0], [], []>} : vector<8x8xf32>, vector<8x8xf32>, vector<8x8xf32> -> vector<8x8xf32>
    %212 = vector.broadcast %17 : vector<1x8xf32> to vector<8x8xf32>
    %213 = arith.addf %211, %212 : vector<8x8xf32>
    %cst_74 = arith.constant dense<0xFF800000> : vector<8xf32>
    %214 = vector.multi_reduction <maximumf>, %213, %cst_74 [1] : vector<8x8xf32> to vector<8xf32>
    %cst_75 = arith.constant 0xFF800000 : f32
    %215 = vector.broadcast %cst_75 : f32 to vector<8xf32>
    %216 = arith.maximumf %215, %214 : vector<8xf32>
    %217 = vector.shape_cast %216 : vector<8xf32> to vector<8x1xf32>
    %218 = vector.broadcast %217 : vector<8x1xf32> to vector<8x8xf32>
    %219 = arith.subf %213, %218 : vector<8x8xf32>
    %220 = math.exp %219 : vector<8x8xf32>
    %cst_76 = arith.constant dense<0.000000e+00> : vector<8xf32>
    %221 = vector.multi_reduction <add>, %220, %cst_76 [1] : vector<8x8xf32> to vector<8xf32>
    %222 = vector.shape_cast %221 : vector<8xf32> to vector<8x1xf32>
    %223 = vector.broadcast %222 : vector<8x1xf32> to vector<8x8xf32>
    %224 = arith.divf %220, %223 : vector<8x8xf32>
    %225 = vector.extract_strided_slice %154 {offsets = [0, 24], sizes = [8, 8], strides = [1, 1]} : vector<8x32xf32> to vector<8x8xf32>
    %cst_77 = arith.constant dense<0.000000e+00> : vector<8x8xf32>
    %226 = tpu.matmul %224, %225, %cst_77 {dimension_numbers = #tpu.dot_dimension_numbers<[1], [0], [0], [1], [0, 0, 1, 1], [], []>} : vector<8x8xf32>, vector<8x8xf32>, vector<8x8xf32> -> vector<8x8xf32>
    %227 = tpu.concatenate %172, %190, %208, %226 in 1 : vector<8x8xf32>, vector<8x8xf32>, vector<8x8xf32>, vector<8x8xf32> -> vector<8x32xf32>
    %228 = vector.extract_strided_slice %142 {offsets = [0, 96], sizes = [32, 32], strides = [1, 1]} : vector<32x128xf32> to vector<32x32xf32>
    %cst_78 = arith.constant dense<0.000000e+00> : vector<8x32xf32>
    %229 = tpu.matmul %227, %228, %cst_78 {dimension_numbers = #tpu.dot_dimension_numbers<[1], [0], [0], [1], [0, 0, 1, 1], [], []>} : vector<8x32xf32>, vector<32x32xf32>, vector<8x32xf32> -> vector<8x32xf32>
    %230 = vector.extract_strided_slice %21 {offsets = [0, 96], sizes = [1, 32], strides = [1, 1]} : vector<1x128xf32> to vector<1x32xf32>
    %231 = vector.broadcast %230 : vector<1x32xf32> to vector<8x32xf32>
    %232 = arith.addf %229, %231 : vector<8x32xf32>
    %233 = arith.addf %140, %232 : vector<8x32xf32>
    %cst_79 = arith.constant dense<0.000000e+00> : vector<8xf32>
    %234 = vector.multi_reduction <add>, %233, %cst_79 [1] : vector<8x32xf32> to vector<8xf32>
    %235 = vector.shape_cast %234 : vector<8xf32> to vector<8x1xf32>
    %cst_80 = arith.constant 3.200000e+01 : f32
    %236 = vector.broadcast %cst_80 : f32 to vector<8x1xf32>
    %237 = arith.divf %235, %236 : vector<8x1xf32>
    %238 = vector.broadcast %237 : vector<8x1xf32> to vector<8x32xf32>
    %239 = arith.subf %233, %238 : vector<8x32xf32>
    %240 = arith.mulf %239, %239 : vector<8x32xf32>
    %cst_81 = arith.constant dense<0.000000e+00> : vector<8xf32>
    %241 = vector.multi_reduction <add>, %240, %cst_81 [1] : vector<8x32xf32> to vector<8xf32>
    %242 = vector.shape_cast %241 : vector<8xf32> to vector<8x1xf32>
    %cst_82 = arith.constant 3.200000e+01 : f32
    %243 = vector.broadcast %cst_82 : f32 to vector<8x1xf32>
    %244 = arith.divf %242, %243 : vector<8x1xf32>
    %245 = vector.broadcast %237 : vector<8x1xf32> to vector<8x32xf32>
    %246 = arith.subf %233, %245 : vector<8x32xf32>
    %cst_83 = arith.constant 9.99999974E-6 : f32
    %247 = vector.broadcast %cst_83 : f32 to vector<8x1xf32>
    %248 = arith.addf %244, %247 : vector<8x1xf32>
    %249 = math.rsqrt %248 : vector<8x1xf32>
    %250 = vector.broadcast %249 : vector<8x1xf32> to vector<8x32xf32>
    %251 = arith.mulf %246, %250 : vector<8x32xf32>
    %252 = vector.broadcast %24 : vector<1x32xf32> to vector<8x32xf32>
    %253 = arith.mulf %251, %252 : vector<8x32xf32>
    %254 = vector.broadcast %25 : vector<1x32xf32> to vector<8x32xf32>
    %255 = arith.addf %253, %254 : vector<8x32xf32>
    %c0_84 = arith.constant 0 : index
    %c0_85 = arith.constant 0 : index
    %c0_86 = arith.constant 0 : index
    %256 = vector.load %arg6[%c0_84, %c0_85, %c0_86] : memref<2x32x64xf32, #tpu.memory_space<vmem>>, vector<1x32x64xf32>
    %257 = vector.shape_cast %256 : vector<1x32x64xf32> to vector<32x64xf32>
    %cst_87 = arith.constant dense<0.000000e+00> : vector<8x64xf32>
    %258 = tpu.matmul %255, %257, %cst_87 {dimension_numbers = #tpu.dot_dimension_numbers<[1], [0], [0], [1], [0, 0, 1, 1], [], []>} : vector<8x32xf32>, vector<32x64xf32>, vector<8x64xf32> -> vector<8x64xf32>
    %259 = vector.broadcast %29 : vector<1x64xf32> to vector<8x64xf32>
    %260 = arith.addf %258, %259 : vector<8x64xf32>
    %cst_88 = arith.constant 0.000000e+00 : f32
    %261 = vector.broadcast %cst_88 : f32 to vector<8x64xf32>
    %262 = arith.maximumf %260, %261 : vector<8x64xf32>
    %c0_89 = arith.constant 0 : index
    %c0_90 = arith.constant 0 : index
    %c0_91 = arith.constant 0 : index
    %263 = vector.load %arg7[%c0_89, %c0_90, %c0_91] : memref<2x64x32xf32, #tpu.memory_space<vmem>>, vector<1x64x32xf32>
    %264 = vector.shape_cast %263 : vector<1x64x32xf32> to vector<64x32xf32>
    %cst_92 = arith.constant dense<0.000000e+00> : vector<8x32xf32>
    %265 = tpu.matmul %262, %264, %cst_92 {dimension_numbers = #tpu.dot_dimension_numbers<[1], [0], [0], [1], [0, 0, 1, 1], [], []>} : vector<8x64xf32>, vector<64x32xf32>, vector<8x32xf32> -> vector<8x32xf32>
    %266 = vector.broadcast %28 : vector<1x32xf32> to vector<8x32xf32>
    %267 = arith.addf %265, %266 : vector<8x32xf32>
    %268 = arith.addf %255, %267 : vector<8x32xf32>
    %cst_93 = arith.constant dense<0.000000e+00> : vector<8xf32>
    %269 = vector.multi_reduction <add>, %268, %cst_93 [1] : vector<8x32xf32> to vector<8xf32>
    %270 = vector.shape_cast %269 : vector<8xf32> to vector<8x1xf32>
    %cst_94 = arith.constant 3.200000e+01 : f32
    %271 = vector.broadcast %cst_94 : f32 to vector<8x1xf32>
    %272 = arith.divf %270, %271 : vector<8x1xf32>
    %273 = vector.broadcast %272 : vector<8x1xf32> to vector<8x32xf32>
    %274 = arith.subf %268, %273 : vector<8x32xf32>
    %275 = arith.mulf %274, %274 : vector<8x32xf32>
    %cst_95 = arith.constant dense<0.000000e+00> : vector<8xf32>
    %276 = vector.multi_reduction <add>, %275, %cst_95 [1] : vector<8x32xf32> to vector<8xf32>
    %277 = vector.shape_cast %276 : vector<8xf32> to vector<8x1xf32>
    %cst_96 = arith.constant 3.200000e+01 : f32
    %278 = vector.broadcast %cst_96 : f32 to vector<8x1xf32>
    %279 = arith.divf %277, %278 : vector<8x1xf32>
    %280 = vector.broadcast %272 : vector<8x1xf32> to vector<8x32xf32>
    %281 = arith.subf %268, %280 : vector<8x32xf32>
    %cst_97 = arith.constant 9.99999974E-6 : f32
    %282 = vector.broadcast %cst_97 : f32 to vector<8x1xf32>
    %283 = arith.addf %279, %282 : vector<8x1xf32>
    %284 = math.rsqrt %283 : vector<8x1xf32>
    %285 = vector.broadcast %284 : vector<8x1xf32> to vector<8x32xf32>
    %286 = arith.mulf %281, %285 : vector<8x32xf32>
    %287 = vector.broadcast %26 : vector<1x32xf32> to vector<8x32xf32>
    %288 = arith.mulf %286, %287 : vector<8x32xf32>
    %289 = vector.broadcast %27 : vector<1x32xf32> to vector<8x32xf32>
    %290 = arith.addf %288, %289 : vector<8x32xf32>
    %c1_98 = arith.constant 1 : index
    %c0_99 = arith.constant 0 : index
    %c0_100 = arith.constant 0 : index
    %291 = vector.load %arg8[%c1_98, %c0_99, %c0_100] : memref<2x8x128xf32, #tpu.memory_space<vmem>>, vector<1x8x128xf32>
    %292 = vector.shape_cast %291 : vector<1x8x128xf32> to vector<8x128xf32>
    %293 = vector.extract_strided_slice %292 {offsets = [0, 0], sizes = [1, 128], strides = [1, 1]} : vector<8x128xf32> to vector<1x128xf32>
    %294 = vector.extract_strided_slice %292 {offsets = [1, 0], sizes = [1, 128], strides = [1, 1]} : vector<8x128xf32> to vector<1x128xf32>
    %295 = vector.extract_strided_slice %292 {offsets = [2, 0], sizes = [1, 32], strides = [1, 1]} : vector<8x128xf32> to vector<1x32xf32>
    %296 = vector.extract_strided_slice %292 {offsets = [2, 32], sizes = [1, 32], strides = [1, 1]} : vector<8x128xf32> to vector<1x32xf32>
    %297 = vector.extract_strided_slice %292 {offsets = [2, 64], sizes = [1, 32], strides = [1, 1]} : vector<8x128xf32> to vector<1x32xf32>
    %298 = vector.extract_strided_slice %292 {offsets = [2, 96], sizes = [1, 32], strides = [1, 1]} : vector<8x128xf32> to vector<1x32xf32>
    %299 = vector.extract_strided_slice %292 {offsets = [3, 0], sizes = [1, 32], strides = [1, 1]} : vector<8x128xf32> to vector<1x32xf32>
    %300 = vector.extract_strided_slice %292 {offsets = [3, 32], sizes = [1, 32], strides = [1, 1]} : vector<8x128xf32> to vector<1x32xf32>
    %301 = vector.extract_strided_slice %292 {offsets = [3, 64], sizes = [1, 32], strides = [1, 1]} : vector<8x128xf32> to vector<1x32xf32>
    %302 = vector.extract_strided_slice %292 {offsets = [4, 0], sizes = [1, 64], strides = [1, 1]} : vector<8x128xf32> to vector<1x64xf32>
    %c1_101 = arith.constant 1 : index
    %c0_102 = arith.constant 0 : index
    %c0_103 = arith.constant 0 : index
    %c0_104 = arith.constant 0 : index
    %303 = vector.load %arg5[%c1_101, %c0_102, %c0_103, %c0_104] : memref<2x2x32x128xf32, #tpu.memory_space<vmem>>, vector<1x1x32x128xf32>
    %304 = vector.shape_cast %303 : vector<1x1x32x128xf32> to vector<32x128xf32>
    %305 = vector.extract_strided_slice %304 {offsets = [0, 0], sizes = [32, 32], strides = [1, 1]} : vector<32x128xf32> to vector<32x32xf32>
    %cst_105 = arith.constant dense<0.000000e+00> : vector<8x32xf32>
    %306 = tpu.matmul %290, %305, %cst_105 {dimension_numbers = #tpu.dot_dimension_numbers<[1], [0], [0], [1], [0, 0, 1, 1], [], []>} : vector<8x32xf32>, vector<32x32xf32>, vector<8x32xf32> -> vector<8x32xf32>
    %307 = vector.extract_strided_slice %293 {offsets = [0, 0], sizes = [1, 32], strides = [1, 1]} : vector<1x128xf32> to vector<1x32xf32>
    %308 = vector.broadcast %307 : vector<1x32xf32> to vector<8x32xf32>
    %309 = arith.addf %306, %308 : vector<8x32xf32>
    %310 = vector.extract_strided_slice %304 {offsets = [0, 32], sizes = [32, 64], strides = [1, 1]} : vector<32x128xf32> to vector<32x64xf32>
    %cst_106 = arith.constant dense<0.000000e+00> : vector<8x64xf32>
    %311 = tpu.matmul %290, %310, %cst_106 {dimension_numbers = #tpu.dot_dimension_numbers<[1], [0], [0], [1], [0, 0, 1, 1], [], []>} : vector<8x32xf32>, vector<32x64xf32>, vector<8x64xf32> -> vector<8x64xf32>
    %312 = vector.extract_strided_slice %293 {offsets = [0, 32], sizes = [1, 64], strides = [1, 1]} : vector<1x128xf32> to vector<1x64xf32>
    %313 = vector.broadcast %312 : vector<1x64xf32> to vector<8x64xf32>
    %314 = arith.addf %311, %313 : vector<8x64xf32>
    %315 = vector.extract_strided_slice %314 {offsets = [0, 0], sizes = [8, 32], strides = [1, 1]} : vector<8x64xf32> to vector<8x32xf32>
    %316 = vector.extract_strided_slice %314 {offsets = [0, 32], sizes = [8, 32], strides = [1, 1]} : vector<8x64xf32> to vector<8x32xf32>
    %317 = vector.extract_strided_slice %309 {offsets = [0, 0], sizes = [8, 8], strides = [1, 1]} : vector<8x32xf32> to vector<8x8xf32>
    %318 = vector.extract_strided_slice %315 {offsets = [0, 0], sizes = [8, 8], strides = [1, 1]} : vector<8x32xf32> to vector<8x8xf32>
    %cst_107 = arith.constant dense<0.000000e+00> : vector<8x8xf32>
    %319 = tpu.matmul %317, %318, %cst_107 {dimension_numbers = #tpu.dot_dimension_numbers<[1], [1], [0], [0], [0, 0, 1, 0], [], []>} : vector<8x8xf32>, vector<8x8xf32>, vector<8x8xf32> -> vector<8x8xf32>
    %320 = arith.addf %319, %10 : vector<8x8xf32>
    %cst_108 = arith.constant dense<0xFF800000> : vector<8xf32>
    %321 = vector.multi_reduction <maximumf>, %320, %cst_108 [1] : vector<8x8xf32> to vector<8xf32>
    %cst_109 = arith.constant 0xFF800000 : f32
    %322 = vector.broadcast %cst_109 : f32 to vector<8xf32>
    %323 = arith.maximumf %322, %321 : vector<8xf32>
    %324 = vector.shape_cast %323 : vector<8xf32> to vector<8x1xf32>
    %325 = vector.broadcast %324 : vector<8x1xf32> to vector<8x8xf32>
    %326 = arith.subf %320, %325 : vector<8x8xf32>
    %327 = math.exp %326 : vector<8x8xf32>
    %cst_110 = arith.constant dense<0.000000e+00> : vector<8xf32>
    %328 = vector.multi_reduction <add>, %327, %cst_110 [1] : vector<8x8xf32> to vector<8xf32>
    %329 = vector.shape_cast %328 : vector<8xf32> to vector<8x1xf32>
    %330 = vector.broadcast %329 : vector<8x1xf32> to vector<8x8xf32>
    %331 = arith.divf %327, %330 : vector<8x8xf32>
    %332 = vector.extract_strided_slice %316 {offsets = [0, 0], sizes = [8, 8], strides = [1, 1]} : vector<8x32xf32> to vector<8x8xf32>
    %cst_111 = arith.constant dense<0.000000e+00> : vector<8x8xf32>
    %333 = tpu.matmul %331, %332, %cst_111 {dimension_numbers = #tpu.dot_dimension_numbers<[1], [0], [0], [1], [0, 0, 1, 1], [], []>} : vector<8x8xf32>, vector<8x8xf32>, vector<8x8xf32> -> vector<8x8xf32>
    %334 = vector.extract_strided_slice %309 {offsets = [0, 8], sizes = [8, 8], strides = [1, 1]} : vector<8x32xf32> to vector<8x8xf32>
    %335 = vector.extract_strided_slice %315 {offsets = [0, 8], sizes = [8, 8], strides = [1, 1]} : vector<8x32xf32> to vector<8x8xf32>
    %cst_112 = arith.constant dense<0.000000e+00> : vector<8x8xf32>
    %336 = tpu.matmul %334, %335, %cst_112 {dimension_numbers = #tpu.dot_dimension_numbers<[1], [1], [0], [0], [0, 0, 1, 0], [], []>} : vector<8x8xf32>, vector<8x8xf32>, vector<8x8xf32> -> vector<8x8xf32>
    %337 = arith.addf %336, %10 : vector<8x8xf32>
    %cst_113 = arith.constant dense<0xFF800000> : vector<8xf32>
    %338 = vector.multi_reduction <maximumf>, %337, %cst_113 [1] : vector<8x8xf32> to vector<8xf32>
    %cst_114 = arith.constant 0xFF800000 : f32
    %339 = vector.broadcast %cst_114 : f32 to vector<8xf32>
    %340 = arith.maximumf %339, %338 : vector<8xf32>
    %341 = vector.shape_cast %340 : vector<8xf32> to vector<8x1xf32>
    %342 = vector.broadcast %341 : vector<8x1xf32> to vector<8x8xf32>
    %343 = arith.subf %337, %342 : vector<8x8xf32>
    %344 = math.exp %343 : vector<8x8xf32>
    %cst_115 = arith.constant dense<0.000000e+00> : vector<8xf32>
    %345 = vector.multi_reduction <add>, %344, %cst_115 [1] : vector<8x8xf32> to vector<8xf32>
    %346 = vector.shape_cast %345 : vector<8xf32> to vector<8x1xf32>
    %347 = vector.broadcast %346 : vector<8x1xf32> to vector<8x8xf32>
    %348 = arith.divf %344, %347 : vector<8x8xf32>
    %349 = vector.extract_strided_slice %316 {offsets = [0, 8], sizes = [8, 8], strides = [1, 1]} : vector<8x32xf32> to vector<8x8xf32>
    %cst_116 = arith.constant dense<0.000000e+00> : vector<8x8xf32>
    %350 = tpu.matmul %348, %349, %cst_116 {dimension_numbers = #tpu.dot_dimension_numbers<[1], [0], [0], [1], [0, 0, 1, 1], [], []>} : vector<8x8xf32>, vector<8x8xf32>, vector<8x8xf32> -> vector<8x8xf32>
    %351 = vector.extract_strided_slice %309 {offsets = [0, 16], sizes = [8, 8], strides = [1, 1]} : vector<8x32xf32> to vector<8x8xf32>
    %352 = vector.extract_strided_slice %315 {offsets = [0, 16], sizes = [8, 8], strides = [1, 1]} : vector<8x32xf32> to vector<8x8xf32>
    %cst_117 = arith.constant dense<0.000000e+00> : vector<8x8xf32>
    %353 = tpu.matmul %351, %352, %cst_117 {dimension_numbers = #tpu.dot_dimension_numbers<[1], [1], [0], [0], [0, 0, 1, 0], [], []>} : vector<8x8xf32>, vector<8x8xf32>, vector<8x8xf32> -> vector<8x8xf32>
    %354 = arith.addf %353, %10 : vector<8x8xf32>
    %cst_118 = arith.constant dense<0xFF800000> : vector<8xf32>
    %355 = vector.multi_reduction <maximumf>, %354, %cst_118 [1] : vector<8x8xf32> to vector<8xf32>
    %cst_119 = arith.constant 0xFF800000 : f32
    %356 = vector.broadcast %cst_119 : f32 to vector<8xf32>
    %357 = arith.maximumf %356, %355 : vector<8xf32>
    %358 = vector.shape_cast %357 : vector<8xf32> to vector<8x1xf32>
    %359 = vector.broadcast %358 : vector<8x1xf32> to vector<8x8xf32>
    %360 = arith.subf %354, %359 : vector<8x8xf32>
    %361 = math.exp %360 : vector<8x8xf32>
    %cst_120 = arith.constant dense<0.000000e+00> : vector<8xf32>
    %362 = vector.multi_reduction <add>, %361, %cst_120 [1] : vector<8x8xf32> to vector<8xf32>
    %363 = vector.shape_cast %362 : vector<8xf32> to vector<8x1xf32>
    %364 = vector.broadcast %363 : vector<8x1xf32> to vector<8x8xf32>
    %365 = arith.divf %361, %364 : vector<8x8xf32>
    %366 = vector.extract_strided_slice %316 {offsets = [0, 16], sizes = [8, 8], strides = [1, 1]} : vector<8x32xf32> to vector<8x8xf32>
    %cst_121 = arith.constant dense<0.000000e+00> : vector<8x8xf32>
    %367 = tpu.matmul %365, %366, %cst_121 {dimension_numbers = #tpu.dot_dimension_numbers<[1], [0], [0], [1], [0, 0, 1, 1], [], []>} : vector<8x8xf32>, vector<8x8xf32>, vector<8x8xf32> -> vector<8x8xf32>
    %368 = vector.extract_strided_slice %309 {offsets = [0, 24], sizes = [8, 8], strides = [1, 1]} : vector<8x32xf32> to vector<8x8xf32>
    %369 = vector.extract_strided_slice %315 {offsets = [0, 24], sizes = [8, 8], strides = [1, 1]} : vector<8x32xf32> to vector<8x8xf32>
    %cst_122 = arith.constant dense<0.000000e+00> : vector<8x8xf32>
    %370 = tpu.matmul %368, %369, %cst_122 {dimension_numbers = #tpu.dot_dimension_numbers<[1], [1], [0], [0], [0, 0, 1, 0], [], []>} : vector<8x8xf32>, vector<8x8xf32>, vector<8x8xf32> -> vector<8x8xf32>
    %371 = arith.addf %370, %10 : vector<8x8xf32>
    %cst_123 = arith.constant dense<0xFF800000> : vector<8xf32>
    %372 = vector.multi_reduction <maximumf>, %371, %cst_123 [1] : vector<8x8xf32> to vector<8xf32>
    %cst_124 = arith.constant 0xFF800000 : f32
    %373 = vector.broadcast %cst_124 : f32 to vector<8xf32>
    %374 = arith.maximumf %373, %372 : vector<8xf32>
    %375 = vector.shape_cast %374 : vector<8xf32> to vector<8x1xf32>
    %376 = vector.broadcast %375 : vector<8x1xf32> to vector<8x8xf32>
    %377 = arith.subf %371, %376 : vector<8x8xf32>
    %378 = math.exp %377 : vector<8x8xf32>
    %cst_125 = arith.constant dense<0.000000e+00> : vector<8xf32>
    %379 = vector.multi_reduction <add>, %378, %cst_125 [1] : vector<8x8xf32> to vector<8xf32>
    %380 = vector.shape_cast %379 : vector<8xf32> to vector<8x1xf32>
    %381 = vector.broadcast %380 : vector<8x1xf32> to vector<8x8xf32>
    %382 = arith.divf %378, %381 : vector<8x8xf32>
    %383 = vector.extract_strided_slice %316 {offsets = [0, 24], sizes = [8, 8], strides = [1, 1]} : vector<8x32xf32> to vector<8x8xf32>
    %cst_126 = arith.constant dense<0.000000e+00> : vector<8x8xf32>
    %384 = tpu.matmul %382, %383, %cst_126 {dimension_numbers = #tpu.dot_dimension_numbers<[1], [0], [0], [1], [0, 0, 1, 1], [], []>} : vector<8x8xf32>, vector<8x8xf32>, vector<8x8xf32> -> vector<8x8xf32>
    %385 = tpu.concatenate %333, %350, %367, %384 in 1 : vector<8x8xf32>, vector<8x8xf32>, vector<8x8xf32>, vector<8x8xf32> -> vector<8x32xf32>
    %386 = vector.extract_strided_slice %304 {offsets = [0, 96], sizes = [32, 32], strides = [1, 1]} : vector<32x128xf32> to vector<32x32xf32>
    %cst_127 = arith.constant dense<0.000000e+00> : vector<8x32xf32>
    %387 = tpu.matmul %385, %386, %cst_127 {dimension_numbers = #tpu.dot_dimension_numbers<[1], [0], [0], [1], [0, 0, 1, 1], [], []>} : vector<8x32xf32>, vector<32x32xf32>, vector<8x32xf32> -> vector<8x32xf32>
    %388 = vector.extract_strided_slice %293 {offsets = [0, 96], sizes = [1, 32], strides = [1, 1]} : vector<1x128xf32> to vector<1x32xf32>
    %389 = vector.broadcast %388 : vector<1x32xf32> to vector<8x32xf32>
    %390 = arith.addf %387, %389 : vector<8x32xf32>
    %391 = arith.addf %290, %390 : vector<8x32xf32>
    %cst_128 = arith.constant dense<0.000000e+00> : vector<8xf32>
    %392 = vector.multi_reduction <add>, %391, %cst_128 [1] : vector<8x32xf32> to vector<8xf32>
    %393 = vector.shape_cast %392 : vector<8xf32> to vector<8x1xf32>
    %cst_129 = arith.constant 3.200000e+01 : f32
    %394 = vector.broadcast %cst_129 : f32 to vector<8x1xf32>
    %395 = arith.divf %393, %394 : vector<8x1xf32>
    %396 = vector.broadcast %395 : vector<8x1xf32> to vector<8x32xf32>
    %397 = arith.subf %391, %396 : vector<8x32xf32>
    %398 = arith.mulf %397, %397 : vector<8x32xf32>
    %cst_130 = arith.constant dense<0.000000e+00> : vector<8xf32>
    %399 = vector.multi_reduction <add>, %398, %cst_130 [1] : vector<8x32xf32> to vector<8xf32>
    %400 = vector.shape_cast %399 : vector<8xf32> to vector<8x1xf32>
    %cst_131 = arith.constant 3.200000e+01 : f32
    %401 = vector.broadcast %cst_131 : f32 to vector<8x1xf32>
    %402 = arith.divf %400, %401 : vector<8x1xf32>
    %403 = vector.broadcast %395 : vector<8x1xf32> to vector<8x32xf32>
    %404 = arith.subf %391, %403 : vector<8x32xf32>
    %cst_132 = arith.constant 9.99999974E-6 : f32
    %405 = vector.broadcast %cst_132 : f32 to vector<8x1xf32>
    %406 = arith.addf %402, %405 : vector<8x1xf32>
    %407 = math.rsqrt %406 : vector<8x1xf32>
    %408 = vector.broadcast %407 : vector<8x1xf32> to vector<8x32xf32>
    %409 = arith.mulf %404, %408 : vector<8x32xf32>
    %410 = vector.broadcast %295 : vector<1x32xf32> to vector<8x32xf32>
    %411 = arith.mulf %409, %410 : vector<8x32xf32>
    %412 = vector.broadcast %296 : vector<1x32xf32> to vector<8x32xf32>
    %413 = arith.addf %411, %412 : vector<8x32xf32>
    %c1_133 = arith.constant 1 : index
    %c1_134 = arith.constant 1 : index
    %c0_135 = arith.constant 0 : index
    %c0_136 = arith.constant 0 : index
    %414 = vector.load %arg5[%c1_133, %c1_134, %c0_135, %c0_136] : memref<2x2x32x128xf32, #tpu.memory_space<vmem>>, vector<1x1x32x128xf32>
    %415 = vector.shape_cast %414 : vector<1x1x32x128xf32> to vector<32x128xf32>
    %416 = vector.extract_strided_slice %415 {offsets = [0, 0], sizes = [32, 32], strides = [1, 1]} : vector<32x128xf32> to vector<32x32xf32>
    %cst_137 = arith.constant dense<0.000000e+00> : vector<8x32xf32>
    %417 = tpu.matmul %413, %416, %cst_137 {dimension_numbers = #tpu.dot_dimension_numbers<[1], [0], [0], [1], [0, 0, 1, 1], [], []>} : vector<8x32xf32>, vector<32x32xf32>, vector<8x32xf32> -> vector<8x32xf32>
    %418 = vector.extract_strided_slice %294 {offsets = [0, 0], sizes = [1, 32], strides = [1, 1]} : vector<1x128xf32> to vector<1x32xf32>
    %419 = vector.broadcast %418 : vector<1x32xf32> to vector<8x32xf32>
    %420 = arith.addf %417, %419 : vector<8x32xf32>
    %421 = vector.extract_strided_slice %415 {offsets = [0, 32], sizes = [32, 64], strides = [1, 1]} : vector<32x128xf32> to vector<32x64xf32>
    %cst_138 = arith.constant dense<0.000000e+00> : vector<8x64xf32>
    %422 = tpu.matmul %3, %421, %cst_138 {dimension_numbers = #tpu.dot_dimension_numbers<[1], [0], [0], [1], [0, 0, 1, 1], [], []>} : vector<8x32xf32>, vector<32x64xf32>, vector<8x64xf32> -> vector<8x64xf32>
    %423 = vector.extract_strided_slice %294 {offsets = [0, 32], sizes = [1, 64], strides = [1, 1]} : vector<1x128xf32> to vector<1x64xf32>
    %424 = vector.broadcast %423 : vector<1x64xf32> to vector<8x64xf32>
    %425 = arith.addf %422, %424 : vector<8x64xf32>
    %426 = vector.extract_strided_slice %425 {offsets = [0, 0], sizes = [8, 32], strides = [1, 1]} : vector<8x64xf32> to vector<8x32xf32>
    %427 = vector.extract_strided_slice %425 {offsets = [0, 32], sizes = [8, 32], strides = [1, 1]} : vector<8x64xf32> to vector<8x32xf32>
    %428 = vector.extract_strided_slice %420 {offsets = [0, 0], sizes = [8, 8], strides = [1, 1]} : vector<8x32xf32> to vector<8x8xf32>
    %429 = vector.extract_strided_slice %426 {offsets = [0, 0], sizes = [8, 8], strides = [1, 1]} : vector<8x32xf32> to vector<8x8xf32>
    %cst_139 = arith.constant dense<0.000000e+00> : vector<8x8xf32>
    %430 = tpu.matmul %428, %429, %cst_139 {dimension_numbers = #tpu.dot_dimension_numbers<[1], [1], [0], [0], [0, 0, 1, 0], [], []>} : vector<8x8xf32>, vector<8x8xf32>, vector<8x8xf32> -> vector<8x8xf32>
    %431 = vector.broadcast %17 : vector<1x8xf32> to vector<8x8xf32>
    %432 = arith.addf %430, %431 : vector<8x8xf32>
    %cst_140 = arith.constant dense<0xFF800000> : vector<8xf32>
    %433 = vector.multi_reduction <maximumf>, %432, %cst_140 [1] : vector<8x8xf32> to vector<8xf32>
    %cst_141 = arith.constant 0xFF800000 : f32
    %434 = vector.broadcast %cst_141 : f32 to vector<8xf32>
    %435 = arith.maximumf %434, %433 : vector<8xf32>
    %436 = vector.shape_cast %435 : vector<8xf32> to vector<8x1xf32>
    %437 = vector.broadcast %436 : vector<8x1xf32> to vector<8x8xf32>
    %438 = arith.subf %432, %437 : vector<8x8xf32>
    %439 = math.exp %438 : vector<8x8xf32>
    %cst_142 = arith.constant dense<0.000000e+00> : vector<8xf32>
    %440 = vector.multi_reduction <add>, %439, %cst_142 [1] : vector<8x8xf32> to vector<8xf32>
    %441 = vector.shape_cast %440 : vector<8xf32> to vector<8x1xf32>
    %442 = vector.broadcast %441 : vector<8x1xf32> to vector<8x8xf32>
    %443 = arith.divf %439, %442 : vector<8x8xf32>
    %444 = vector.extract_strided_slice %427 {offsets = [0, 0], sizes = [8, 8], strides = [1, 1]} : vector<8x32xf32> to vector<8x8xf32>
    %cst_143 = arith.constant dense<0.000000e+00> : vector<8x8xf32>
    %445 = tpu.matmul %443, %444, %cst_143 {dimension_numbers = #tpu.dot_dimension_numbers<[1], [0], [0], [1], [0, 0, 1, 1], [], []>} : vector<8x8xf32>, vector<8x8xf32>, vector<8x8xf32> -> vector<8x8xf32>
    %446 = vector.extract_strided_slice %420 {offsets = [0, 8], sizes = [8, 8], strides = [1, 1]} : vector<8x32xf32> to vector<8x8xf32>
    %447 = vector.extract_strided_slice %426 {offsets = [0, 8], sizes = [8, 8], strides = [1, 1]} : vector<8x32xf32> to vector<8x8xf32>
    %cst_144 = arith.constant dense<0.000000e+00> : vector<8x8xf32>
    %448 = tpu.matmul %446, %447, %cst_144 {dimension_numbers = #tpu.dot_dimension_numbers<[1], [1], [0], [0], [0, 0, 1, 0], [], []>} : vector<8x8xf32>, vector<8x8xf32>, vector<8x8xf32> -> vector<8x8xf32>
    %449 = vector.broadcast %17 : vector<1x8xf32> to vector<8x8xf32>
    %450 = arith.addf %448, %449 : vector<8x8xf32>
    %cst_145 = arith.constant dense<0xFF800000> : vector<8xf32>
    %451 = vector.multi_reduction <maximumf>, %450, %cst_145 [1] : vector<8x8xf32> to vector<8xf32>
    %cst_146 = arith.constant 0xFF800000 : f32
    %452 = vector.broadcast %cst_146 : f32 to vector<8xf32>
    %453 = arith.maximumf %452, %451 : vector<8xf32>
    %454 = vector.shape_cast %453 : vector<8xf32> to vector<8x1xf32>
    %455 = vector.broadcast %454 : vector<8x1xf32> to vector<8x8xf32>
    %456 = arith.subf %450, %455 : vector<8x8xf32>
    %457 = math.exp %456 : vector<8x8xf32>
    %cst_147 = arith.constant dense<0.000000e+00> : vector<8xf32>
    %458 = vector.multi_reduction <add>, %457, %cst_147 [1] : vector<8x8xf32> to vector<8xf32>
    %459 = vector.shape_cast %458 : vector<8xf32> to vector<8x1xf32>
    %460 = vector.broadcast %459 : vector<8x1xf32> to vector<8x8xf32>
    %461 = arith.divf %457, %460 : vector<8x8xf32>
    %462 = vector.extract_strided_slice %427 {offsets = [0, 8], sizes = [8, 8], strides = [1, 1]} : vector<8x32xf32> to vector<8x8xf32>
    %cst_148 = arith.constant dense<0.000000e+00> : vector<8x8xf32>
    %463 = tpu.matmul %461, %462, %cst_148 {dimension_numbers = #tpu.dot_dimension_numbers<[1], [0], [0], [1], [0, 0, 1, 1], [], []>} : vector<8x8xf32>, vector<8x8xf32>, vector<8x8xf32> -> vector<8x8xf32>
    %464 = vector.extract_strided_slice %420 {offsets = [0, 16], sizes = [8, 8], strides = [1, 1]} : vector<8x32xf32> to vector<8x8xf32>
    %465 = vector.extract_strided_slice %426 {offsets = [0, 16], sizes = [8, 8], strides = [1, 1]} : vector<8x32xf32> to vector<8x8xf32>
    %cst_149 = arith.constant dense<0.000000e+00> : vector<8x8xf32>
    %466 = tpu.matmul %464, %465, %cst_149 {dimension_numbers = #tpu.dot_dimension_numbers<[1], [1], [0], [0], [0, 0, 1, 0], [], []>} : vector<8x8xf32>, vector<8x8xf32>, vector<8x8xf32> -> vector<8x8xf32>
    %467 = vector.broadcast %17 : vector<1x8xf32> to vector<8x8xf32>
    %468 = arith.addf %466, %467 : vector<8x8xf32>
    %cst_150 = arith.constant dense<0xFF800000> : vector<8xf32>
    %469 = vector.multi_reduction <maximumf>, %468, %cst_150 [1] : vector<8x8xf32> to vector<8xf32>
    %cst_151 = arith.constant 0xFF800000 : f32
    %470 = vector.broadcast %cst_151 : f32 to vector<8xf32>
    %471 = arith.maximumf %470, %469 : vector<8xf32>
    %472 = vector.shape_cast %471 : vector<8xf32> to vector<8x1xf32>
    %473 = vector.broadcast %472 : vector<8x1xf32> to vector<8x8xf32>
    %474 = arith.subf %468, %473 : vector<8x8xf32>
    %475 = math.exp %474 : vector<8x8xf32>
    %cst_152 = arith.constant dense<0.000000e+00> : vector<8xf32>
    %476 = vector.multi_reduction <add>, %475, %cst_152 [1] : vector<8x8xf32> to vector<8xf32>
    %477 = vector.shape_cast %476 : vector<8xf32> to vector<8x1xf32>
    %478 = vector.broadcast %477 : vector<8x1xf32> to vector<8x8xf32>
    %479 = arith.divf %475, %478 : vector<8x8xf32>
    %480 = vector.extract_strided_slice %427 {offsets = [0, 16], sizes = [8, 8], strides = [1, 1]} : vector<8x32xf32> to vector<8x8xf32>
    %cst_153 = arith.constant dense<0.000000e+00> : vector<8x8xf32>
    %481 = tpu.matmul %479, %480, %cst_153 {dimension_numbers = #tpu.dot_dimension_numbers<[1], [0], [0], [1], [0, 0, 1, 1], [], []>} : vector<8x8xf32>, vector<8x8xf32>, vector<8x8xf32> -> vector<8x8xf32>
    %482 = vector.extract_strided_slice %420 {offsets = [0, 24], sizes = [8, 8], strides = [1, 1]} : vector<8x32xf32> to vector<8x8xf32>
    %483 = vector.extract_strided_slice %426 {offsets = [0, 24], sizes = [8, 8], strides = [1, 1]} : vector<8x32xf32> to vector<8x8xf32>
    %cst_154 = arith.constant dense<0.000000e+00> : vector<8x8xf32>
    %484 = tpu.matmul %482, %483, %cst_154 {dimension_numbers = #tpu.dot_dimension_numbers<[1], [1], [0], [0], [0, 0, 1, 0], [], []>} : vector<8x8xf32>, vector<8x8xf32>, vector<8x8xf32> -> vector<8x8xf32>
    %485 = vector.broadcast %17 : vector<1x8xf32> to vector<8x8xf32>
    %486 = arith.addf %484, %485 : vector<8x8xf32>
    %cst_155 = arith.constant dense<0xFF800000> : vector<8xf32>
    %487 = vector.multi_reduction <maximumf>, %486, %cst_155 [1] : vector<8x8xf32> to vector<8xf32>
    %cst_156 = arith.constant 0xFF800000 : f32
    %488 = vector.broadcast %cst_156 : f32 to vector<8xf32>
    %489 = arith.maximumf %488, %487 : vector<8xf32>
    %490 = vector.shape_cast %489 : vector<8xf32> to vector<8x1xf32>
    %491 = vector.broadcast %490 : vector<8x1xf32> to vector<8x8xf32>
    %492 = arith.subf %486, %491 : vector<8x8xf32>
    %493 = math.exp %492 : vector<8x8xf32>
    %cst_157 = arith.constant dense<0.000000e+00> : vector<8xf32>
    %494 = vector.multi_reduction <add>, %493, %cst_157 [1] : vector<8x8xf32> to vector<8xf32>
    %495 = vector.shape_cast %494 : vector<8xf32> to vector<8x1xf32>
    %496 = vector.broadcast %495 : vector<8x1xf32> to vector<8x8xf32>
    %497 = arith.divf %493, %496 : vector<8x8xf32>
    %498 = vector.extract_strided_slice %427 {offsets = [0, 24], sizes = [8, 8], strides = [1, 1]} : vector<8x32xf32> to vector<8x8xf32>
    %cst_158 = arith.constant dense<0.000000e+00> : vector<8x8xf32>
    %499 = tpu.matmul %497, %498, %cst_158 {dimension_numbers = #tpu.dot_dimension_numbers<[1], [0], [0], [1], [0, 0, 1, 1], [], []>} : vector<8x8xf32>, vector<8x8xf32>, vector<8x8xf32> -> vector<8x8xf32>
    %500 = tpu.concatenate %445, %463, %481, %499 in 1 : vector<8x8xf32>, vector<8x8xf32>, vector<8x8xf32>, vector<8x8xf32> -> vector<8x32xf32>
    %501 = vector.extract_strided_slice %415 {offsets = [0, 96], sizes = [32, 32], strides = [1, 1]} : vector<32x128xf32> to vector<32x32xf32>
    %cst_159 = arith.constant dense<0.000000e+00> : vector<8x32xf32>
    %502 = tpu.matmul %500, %501, %cst_159 {dimension_numbers = #tpu.dot_dimension_numbers<[1], [0], [0], [1], [0, 0, 1, 1], [], []>} : vector<8x32xf32>, vector<32x32xf32>, vector<8x32xf32> -> vector<8x32xf32>
    %503 = vector.extract_strided_slice %294 {offsets = [0, 96], sizes = [1, 32], strides = [1, 1]} : vector<1x128xf32> to vector<1x32xf32>
    %504 = vector.broadcast %503 : vector<1x32xf32> to vector<8x32xf32>
    %505 = arith.addf %502, %504 : vector<8x32xf32>
    %506 = tpu.concatenate %443, %461, %479, %497 in 1 : vector<8x8xf32>, vector<8x8xf32>, vector<8x8xf32>, vector<8x8xf32> -> vector<8x32xf32>
    %507 = arith.addf %413, %505 : vector<8x32xf32>
    %cst_160 = arith.constant dense<0.000000e+00> : vector<8xf32>
    %508 = vector.multi_reduction <add>, %507, %cst_160 [1] : vector<8x32xf32> to vector<8xf32>
    %509 = vector.shape_cast %508 : vector<8xf32> to vector<8x1xf32>
    %cst_161 = arith.constant 3.200000e+01 : f32
    %510 = vector.broadcast %cst_161 : f32 to vector<8x1xf32>
    %511 = arith.divf %509, %510 : vector<8x1xf32>
    %512 = vector.broadcast %511 : vector<8x1xf32> to vector<8x32xf32>
    %513 = arith.subf %507, %512 : vector<8x32xf32>
    %514 = arith.mulf %513, %513 : vector<8x32xf32>
    %cst_162 = arith.constant dense<0.000000e+00> : vector<8xf32>
    %515 = vector.multi_reduction <add>, %514, %cst_162 [1] : vector<8x32xf32> to vector<8xf32>
    %516 = vector.shape_cast %515 : vector<8xf32> to vector<8x1xf32>
    %cst_163 = arith.constant 3.200000e+01 : f32
    %517 = vector.broadcast %cst_163 : f32 to vector<8x1xf32>
    %518 = arith.divf %516, %517 : vector<8x1xf32>
    %519 = vector.broadcast %511 : vector<8x1xf32> to vector<8x32xf32>
    %520 = arith.subf %507, %519 : vector<8x32xf32>
    %cst_164 = arith.constant 9.99999974E-6 : f32
    %521 = vector.broadcast %cst_164 : f32 to vector<8x1xf32>
    %522 = arith.addf %518, %521 : vector<8x1xf32>
    %523 = math.rsqrt %522 : vector<8x1xf32>
    %524 = vector.broadcast %523 : vector<8x1xf32> to vector<8x32xf32>
    %525 = arith.mulf %520, %524 : vector<8x32xf32>
    %526 = vector.broadcast %297 : vector<1x32xf32> to vector<8x32xf32>
    %527 = arith.mulf %525, %526 : vector<8x32xf32>
    %528 = vector.broadcast %298 : vector<1x32xf32> to vector<8x32xf32>
    %529 = arith.addf %527, %528 : vector<8x32xf32>
    %c1_165 = arith.constant 1 : index
    %c0_166 = arith.constant 0 : index
    %c0_167 = arith.constant 0 : index
    %530 = vector.load %arg6[%c1_165, %c0_166, %c0_167] : memref<2x32x64xf32, #tpu.memory_space<vmem>>, vector<1x32x64xf32>
    %531 = vector.shape_cast %530 : vector<1x32x64xf32> to vector<32x64xf32>
    %cst_168 = arith.constant dense<0.000000e+00> : vector<8x64xf32>
    %532 = tpu.matmul %529, %531, %cst_168 {dimension_numbers = #tpu.dot_dimension_numbers<[1], [0], [0], [1], [0, 0, 1, 1], [], []>} : vector<8x32xf32>, vector<32x64xf32>, vector<8x64xf32> -> vector<8x64xf32>
    %533 = vector.broadcast %302 : vector<1x64xf32> to vector<8x64xf32>
    %534 = arith.addf %532, %533 : vector<8x64xf32>
    %cst_169 = arith.constant 0.000000e+00 : f32
    %535 = vector.broadcast %cst_169 : f32 to vector<8x64xf32>
    %536 = arith.maximumf %534, %535 : vector<8x64xf32>
    %c1_170 = arith.constant 1 : index
    %c0_171 = arith.constant 0 : index
    %c0_172 = arith.constant 0 : index
    %537 = vector.load %arg7[%c1_170, %c0_171, %c0_172] : memref<2x64x32xf32, #tpu.memory_space<vmem>>, vector<1x64x32xf32>
    %538 = vector.shape_cast %537 : vector<1x64x32xf32> to vector<64x32xf32>
    %cst_173 = arith.constant dense<0.000000e+00> : vector<8x32xf32>
    %539 = tpu.matmul %536, %538, %cst_173 {dimension_numbers = #tpu.dot_dimension_numbers<[1], [0], [0], [1], [0, 0, 1, 1], [], []>} : vector<8x64xf32>, vector<64x32xf32>, vector<8x32xf32> -> vector<8x32xf32>
    %540 = vector.broadcast %301 : vector<1x32xf32> to vector<8x32xf32>
    %541 = arith.addf %539, %540 : vector<8x32xf32>
    %542 = arith.addf %529, %541 : vector<8x32xf32>
    %cst_174 = arith.constant dense<0.000000e+00> : vector<8xf32>
    %543 = vector.multi_reduction <add>, %542, %cst_174 [1] : vector<8x32xf32> to vector<8xf32>
    %544 = vector.shape_cast %543 : vector<8xf32> to vector<8x1xf32>
    %cst_175 = arith.constant 3.200000e+01 : f32
    %545 = vector.broadcast %cst_175 : f32 to vector<8x1xf32>
    %546 = arith.divf %544, %545 : vector<8x1xf32>
    %547 = vector.broadcast %546 : vector<8x1xf32> to vector<8x32xf32>
    %548 = arith.subf %542, %547 : vector<8x32xf32>
    %549 = arith.mulf %548, %548 : vector<8x32xf32>
    %cst_176 = arith.constant dense<0.000000e+00> : vector<8xf32>
    %550 = vector.multi_reduction <add>, %549, %cst_176 [1] : vector<8x32xf32> to vector<8xf32>
    %551 = vector.shape_cast %550 : vector<8xf32> to vector<8x1xf32>
    %cst_177 = arith.constant 3.200000e+01 : f32
    %552 = vector.broadcast %cst_177 : f32 to vector<8x1xf32>
    %553 = arith.divf %551, %552 : vector<8x1xf32>
    %554 = vector.broadcast %546 : vector<8x1xf32> to vector<8x32xf32>
    %555 = arith.subf %542, %554 : vector<8x32xf32>
    %cst_178 = arith.constant 9.99999974E-6 : f32
    %556 = vector.broadcast %cst_178 : f32 to vector<8x1xf32>
    %557 = arith.addf %553, %556 : vector<8x1xf32>
    %558 = math.rsqrt %557 : vector<8x1xf32>
    %559 = vector.broadcast %558 : vector<8x1xf32> to vector<8x32xf32>
    %560 = arith.mulf %555, %559 : vector<8x32xf32>
    %561 = vector.broadcast %299 : vector<1x32xf32> to vector<8x32xf32>
    %562 = arith.mulf %560, %561 : vector<8x32xf32>
    %563 = vector.broadcast %300 : vector<1x32xf32> to vector<8x32xf32>
    %564 = arith.addf %562, %563 : vector<8x32xf32>
    %c0_179 = arith.constant 0 : index
    %c0_180 = arith.constant 0 : index
    %c0_181 = arith.constant 0 : index
    %565 = vector.load %arg9[%c0_179, %c0_180, %c0_181] : memref<1x8x32xf32, #tpu.memory_space<vmem>>, vector<1x8x32xf32>
    %566 = vector.shape_cast %565 : vector<1x8x32xf32> to vector<8x32xf32>
    %567 = vector.shape_cast %564 : vector<8x32xf32> to vector<1x8x32xf32>
    tpu.vector_store %arg9[%c0_179, %c0_180, %c0_181], %567 {strides = array<i32>} : memref<1x8x32xf32, #tpu.memory_space<vmem>>, vector<1x8x32xf32>,
    %c0_182 = arith.constant 0 : index
    %c0_183 = arith.constant 0 : index
    %c0_184 = arith.constant 0 : index
    %568 = vector.load %arg10[%c0_182, %c0_183, %c0_184] : memref<1x8x32xf32, #tpu.memory_space<vmem>>, vector<1x8x32xf32>
    %569 = vector.shape_cast %568 : vector<1x8x32xf32> to vector<8x32xf32>
    %570 = vector.shape_cast %506 : vector<8x32xf32> to vector<1x8x32xf32>
    tpu.vector_store %arg10[%c0_182, %c0_183, %c0_184], %570 {strides = array<i32>} : memref<1x8x32xf32, #tpu.memory_space<vmem>>, vector<1x8x32xf32>,
    return
  }
  func.func @transform_0(%arg0: i32) -> (i32, i32, i32) {
    %c0_i32 = arith.constant 0 : i32
    %c0_i32_0 = arith.constant 0 : i32
    %c0_i32_1 = arith.constant 0 : i32
    return %arg0, %c0_i32, %c0_i32_0 : i32, i32, i32
  }
  func.func @transform_1(%arg0: i32) -> (i32, i32, i32) {
    %c0_i32 = arith.constant 0 : i32
    %c0_i32_0 = arith.constant 0 : i32
    %c0_i32_1 = arith.constant 0 : i32
    return %arg0, %c0_i32, %c0_i32_0 : i32, i32, i32
  }
  func.func @transform_2(%arg0: i32) -> (i32, i32, i32, i32) {
    %c0_i32 = arith.constant 0 : i32
    %c0_i32_0 = arith.constant 0 : i32
    %c0_i32_1 = arith.constant 0 : i32
    %c0_i32_2 = arith.constant 0 : i32
    return %arg0, %c0_i32, %c0_i32_0, %c0_i32_1 : i32, i32, i32, i32
  }
  func.func @transform_3(%arg0: i32) -> (i32, i32, i32, i32) {
    %c0_i32 = arith.constant 0 : i32
    %c0_i32_0 = arith.constant 0 : i32
    %c0_i32_1 = arith.constant 0 : i32
    %c0_i32_2 = arith.constant 0 : i32
    return %arg0, %c0_i32, %c0_i32_0, %c0_i32_1 : i32, i32, i32, i32
  }
  func.func @transform_4(%arg0: i32) -> (i32, i32, i32, i32) {
    %c0_i32 = arith.constant 0 : i32
    %c0_i32_0 = arith.constant 0 : i32
    %c0_i32_1 = arith.constant 0 : i32
    %c0_i32_2 = arith.constant 0 : i32
    %c0_i32_3 = arith.constant 0 : i32
    return %c0_i32, %c0_i32_0, %c0_i32_1, %c0_i32_2 : i32, i32, i32, i32
  }
  func.func @transform_5(%arg0: i32) -> (i32, i32, i32) {
    %c0_i32 = arith.constant 0 : i32
    %c0_i32_0 = arith.constant 0 : i32
    %c0_i32_1 = arith.constant 0 : i32
    %c0_i32_2 = arith.constant 0 : i32
    return %c0_i32, %c0_i32_0, %c0_i32_1 : i32, i32, i32
  }
  func.func @transform_6(%arg0: i32) -> (i32, i32, i32) {
    %c0_i32 = arith.constant 0 : i32
    %c0_i32_0 = arith.constant 0 : i32
    %c0_i32_1 = arith.constant 0 : i32
    %c0_i32_2 = arith.constant 0 : i32
    return %c0_i32, %c0_i32_0, %c0_i32_1 : i32, i32, i32
  }
  func.func @transform_7(%arg0: i32) -> (i32, i32, i32) {
    %c0_i32 = arith.constant 0 : i32
    %c0_i32_0 = arith.constant 0 : i32
    %c0_i32_1 = arith.constant 0 : i32
    %c0_i32_2 = arith.constant 0 : i32
    return %c0_i32, %c0_i32_0, %c0_i32_1 : i32, i32, i32
  }
  func.func @transform_8(%arg0: i32) -> (i32, i32, i32) {
    %c0_i32 = arith.constant 0 : i32
    %c0_i32_0 = arith.constant 0 : i32
    %c0_i32_1 = arith.constant 0 : i32
    return %arg0, %c0_i32, %c0_i32_0 : i32, i32, i32
  }
  func.func @transform_9(%arg0: i32) -> (i32, i32, i32) {
    %c0_i32 = arith.constant 0 : i32
    %c0_i32_0 = arith.constant 0 : i32
    %c0_i32_1 = arith.constant 0 : i32
    return %arg0, %c0_i32, %c0_i32_0 : i32, i32, i32
  }
}

</mosaic_0001>

<llo_original>
// kernel: tpu_custom_call.1
$region0: #{tpu_custom_call.1}
  #allocation0 [shape = 'u32[]', space=smem, size = 0x4, offset = 0x4, fixed_abs, tag = 'smem constant byte address 0x4 - core index']
  #allocation1 [shape = 'u32[144,128]{1,0:T(1,128)}', space=vmem, size = 0x12000, scoped, tag = 'internal scratch']
  %s0 = inlined_call_operand.hbm [shape: f32[2,8,32], index: 0, kind: input, shape index: {}]
  %s1 = inlined_call_operand.hbm [shape: f32[2,8,32], index: 1, kind: input, shape index: {}]
  %s2 = inlined_call_operand.hbm [shape: f32[2,1,8,8], index: 2, kind: input, shape index: {}]
  %s3 = inlined_call_operand.vmem [shape: f32[2,1,1,8], index: 3, kind: input, shape index: {}]
  %s4 = inlined_call_operand.vmem [shape: f32[2,2,32,128], index: 4, kind: input, shape index: {}]
  %s5 = inlined_call_operand.vmem [shape: f32[2,32,64], index: 5, kind: input, shape index: {}]
  %s6 = inlined_call_operand.vmem [shape: f32[2,64,32], index: 6, kind: input, shape index: {}]
  %s7 = inlined_call_operand.vmem [shape: f32[2,8,128], index: 7, kind: input, shape index: {}]
  %s8 = inlined_call_operand.hbm [shape: f32[2,8,32], index: 8, kind: output, shape index: {0}]
  %s9 = inlined_call_operand.hbm [shape: f32[2,8,32], index: 9, kind: output, shape index: {1}]
  %10 = xla_tuple %s8, %s9
  %s11 = sld [smem:[#allocation0]]
  $region85: #{tpu_custom_call.1} parent=0
    _
  %s13 = ssub.s32 1, %s11
  %s14 = scalar_select 0, %s13, %s11
  $region1: #{tpu_custom_call.1} parent=0
    #allocation2 [shape = 'u8[8192]{0}', space=vmem, size = 0x2000, scoped, tag = 'input window, operand 0']
    #allocation3 [shape = 's32[2]{0}', space=sflag, size = 0x8, scoped, tag = 'scoped memory for tpu_custom_call.1']
    #allocation4 [shape = 's32[2]{0}', space=sflag, size = 0x8, scoped, tag = 'scoped memory for tpu_custom_call.1']
    #allocation5 [shape = 'u8[8192]{0}', space=vmem, size = 0x2000, scoped, tag = 'input window, operand 1']
    #allocation6 [shape = 's32[2]{0}', space=sflag, size = 0x8, scoped, tag = 'scoped memory for tpu_custom_call.1']
    #allocation7 [shape = 'u8[8192]{0}', space=vmem, size = 0x2000, scoped, tag = 'input window, operand 2']
    #allocation8 [shape = 'u8[8192]{0}', space=vmem, size = 0x2000, scoped, tag = 'output window, operand 0']
    #allocation9 [shape = 'u8[8192]{0}', space=vmem, size = 0x2000, scoped, tag = 'output window, operand 1']
    #allocation10 [shape = 's32[2]{0}', space=sflag, size = 0x8, scoped, tag = 'scoped memory for tpu_custom_call.1']
    %15 = vsyncpa [#allocation3], 0
    %s16 = scalar_lea.sflag [#allocation3], 1
    %17 = vsyncpa %s16, 0
    %18 = vsyncpa [#allocation6], 0
    %s19 = scalar_lea.sflag [#allocation6], 1
    %20 = vsyncpa %s19, 0
    %21 = vsyncpa [#allocation4], 0
    %s22 = scalar_lea.sflag [#allocation4], 1
    %23 = vsyncpa %s22, 0
    %24 = vsyncpa [#allocation10], 0
    %s25 = scalar_lea.sflag [#allocation10], 1
    %26 = vsyncpa %s25, 0
    loop: start=0, step=1, limit=4
    $region2: #{tpu_custom_call.1} parent=1 // loop_pre_header
      _
    $region3: #{tpu_custom_call.1} parent=1 // loop_header
      %s28 = sphi 0, %s32
      %p29 = scmp.ge.s32.totalorder %s28, 4
      %s38 = sphi 0, %s40
      %s41 = sphi 0, %s38
      %s42 = sphi 0, %s41
      %s58 = sphi 0, %s42
      %s64 = sphi 0, %s66
      %s67 = sphi 0, %s64
      %s68 = sphi 0, %s67
      %s84 = sphi 0, %s68
      %s90 = sphi 0, %s92
      %s93 = sphi 0, %s90
      %s94 = sphi 0, %s93
      %s110 = sphi 0, %s94
      %s116 = sphi 0, %s118
      %s119 = sphi 0, %s116
      %s120 = sphi 0, %s119
      %s136 = sphi 0, %s120
      %s140 = sphi 0, %s140
      %s142 = sphi 0, %s140
      %s143 = sphi 0, %s142
      %s157 = sphi 0, %s143
      %s161 = sphi 0, %s161
      %s163 = sphi 0, %s161
      %s164 = sphi 0, %s163
      %s178 = sphi 0, %s164
      %s182 = sphi 0, %s182
      %s184 = sphi 0, %s182
      %s185 = sphi 0, %s184
      %s199 = sphi 0, %s185
      %s203 = sphi 0, %s203
      %s205 = sphi 0, %s203
      %s206 = sphi 0, %s205
      %s220 = sphi 0, %s206
      %s226 = sphi 0, %s228
      %s229 = sphi 0, %s226
      %s230 = sphi 0, %s229
      %s246 = sphi 0, %s230
      %s252 = sphi 0, %s254
      %s255 = sphi 0, %s252
      %s256 = sphi 0, %s255
      %s272 = sphi 0, %s256
    $region4: #{tpu_custom_call.1} parent=1 // loop_header_branch
      %31 = sbr.rel (%p29) target = $region8
    $region5: #{tpu_custom_call.1} parent=1 // loop_body
      %s33 = ssub.s32 %s28, 1
      %s34 = ssub.s32 %s28, 2
      %s35 = sadd.s32 %s28, 1
      %s36 = ssub.s32 %s28, %s35
      %p37 = scmp.eq.s32.totalorder %s36, 0
      %s39 = sadd.s32 %s38, 1
      %s40 = scalar_select %p37, %s38, %s39
      %p43 = pneg %p37
      %p44 = scmp.eq.s32.totalorder %s28, 1
      %p45 = por %p43, %p44
      %p46 = scmp.ne.s32.totalorder %s38, %s41
      %p47 = scmp.eq.s32.totalorder %s28, 0
      %p48 = por %p46, %p47
      %p49 = scmp.ne.s32.totalorder %s38, %s41
      %p50 = scmp.eq.s32.totalorder %s33, 1
      %p51 = por %p49, %p50
      %p52 = scmp.ne.s32.totalorder %s41, %s42
      %p53 = scmp.eq.s32.totalorder %s33, 0
      %p54 = por %p52, %p53
      %p55 = scmp.ne.s32.totalorder %s41, %s42
      %p56 = scmp.eq.s32.totalorder %s34, 1
      %p57 = por %p55, %p56
      %p59 = scmp.ne.s32.totalorder %s42, %s58
      %p60 = scmp.eq.s32.totalorder %s34, 0
      %p61 = por %p59, %p60
      %s62 = ssub.s32 %s28, %s35
      %p63 = scmp.eq.s32.totalorder %s62, 0
      %s65 = sadd.s32 %s64, 1
      %s66 = scalar_select %p63, %s64, %s65
      %p69 = pneg %p63
      %p70 = scmp.eq.s32.totalorder %s28, 1
      %p71 = por %p69, %p70
      %p72 = scmp.ne.s32.totalorder %s64, %s67
      %p73 = scmp.eq.s32.totalorder %s28, 0
      %p74 = por %p72, %p73
      %p75 = scmp.ne.s32.totalorder %s64, %s67
      %p76 = scmp.eq.s32.totalorder %s33, 1
      %p77 = por %p75, %p76
      %p78 = scmp.ne.s32.totalorder %s67, %s68
      %p79 = scmp.eq.s32.totalorder %s33, 0
      %p80 = por %p78, %p79
      %p81 = scmp.ne.s32.totalorder %s67, %s68
      %p82 = scmp.eq.s32.totalorder %s34, 1
      %p83 = por %p81, %p82
      %p85 = scmp.ne.s32.totalorder %s68, %s84
      %p86 = scmp.eq.s32.totalorder %s34, 0
      %p87 = por %p85, %p86
      %s88 = ssub.s32 %s28, %s35
      %p89 = scmp.eq.s32.totalorder %s88, 0
      %s91 = sadd.s32 %s90, 1
      %s92 = scalar_select %p89, %s90, %s91
      %p95 = pneg %p89
      %p96 = scmp.eq.s32.totalorder %s28, 1
      %p97 = por %p95, %p96
      %p98 = scmp.ne.s32.totalorder %s90, %s93
      %p99 = scmp.eq.s32.totalorder %s28, 0
      %p100 = por %p98, %p99
      %p101 = scmp.ne.s32.totalorder %s90, %s93
      %p102 = scmp.eq.s32.totalorder %s33, 1
      %p103 = por %p101, %p102
      %p104 = scmp.ne.s32.totalorder %s93, %s94
      %p105 = scmp.eq.s32.totalorder %s33, 0
      %p106 = por %p104, %p105
      %p107 = scmp.ne.s32.totalorder %s93, %s94
      %p108 = scmp.eq.s32.totalorder %s34, 1
      %p109 = por %p107, %p108
      %p111 = scmp.ne.s32.totalorder %s94, %s110
      %p112 = scmp.eq.s32.totalorder %s34, 0
      %p113 = por %p111, %p112
      %s114 = ssub.s32 %s28, %s35
      %p115 = scmp.eq.s32.totalorder %s114, 0
      %s117 = sadd.s32 %s116, 1
      %s118 = scalar_select %p115, %s116, %s117
      %p121 = pneg %p115
      %p122 = scmp.eq.s32.totalorder %s28, 1
      %p123 = por %p121, %p122
      %p124 = scmp.ne.s32.totalorder %s116, %s119
      %p125 = scmp.eq.s32.totalorder %s28, 0
      %p126 = por %p124, %p125
      %p127 = scmp.ne.s32.totalorder %s116, %s119
      %p128 = scmp.eq.s32.totalorder %s33, 1
      %p129 = por %p127, %p128
      %p130 = scmp.ne.s32.totalorder %s119, %s120
      %p131 = scmp.eq.s32.totalorder %s33, 0
      %p132 = por %p130, %p131
      %p133 = scmp.ne.s32.totalorder %s119, %s120
      %p134 = scmp.eq.s32.totalorder %s34, 1
      %p135 = por %p133, %p134
      %p137 = scmp.ne.s32.totalorder %s120, %s136
      %p138 = scmp.eq.s32.totalorder %s34, 0
      %p139 = por %p137, %p138
      %s141 = sadd.s32 %s140, 1
      %p144 = scmp.eq.s32.totalorder %s28, 1
      %p145 = scmp.ne.s32.totalorder %s140, %s142
      %p146 = scmp.eq.s32.totalorder %s28, 0
      %p147 = por %p145, %p146
      %p148 = scmp.ne.s32.totalorder %s140, %s142
      %p149 = scmp.eq.s32.totalorder %s33, 1
      %p150 = por %p148, %p149
      %p151 = scmp.ne.s32.totalorder %s142, %s143
      %p152 = scmp.eq.s32.totalorder %s33, 0
      %p153 = por %p151, %p152
      %p154 = scmp.ne.s32.totalorder %s142, %s143
      %p155 = scmp.eq.s32.totalorder %s34, 1
      %p156 = por %p154, %p155
      %p158 = scmp.ne.s32.totalorder %s143, %s157
      %p159 = scmp.eq.s32.totalorder %s34, 0
      %p160 = por %p158, %p159
      %s162 = sadd.s32 %s161, 1
      %p165 = scmp.eq.s32.totalorder %s28, 1
      %p166 = scmp.ne.s32.totalorder %s161, %s163
      %p167 = scmp.eq.s32.totalorder %s28, 0
      %p168 = por %p166, %p167
      %p169 = scmp.ne.s32.totalorder %s161, %s163
      %p170 = scmp.eq.s32.totalorder %s33, 1
      %p171 = por %p169, %p170
      %p172 = scmp.ne.s32.totalorder %s163, %s164
      %p173 = scmp.eq.s32.totalorder %s33, 0
      %p174 = por %p172, %p173
      %p175 = scmp.ne.s32.totalorder %s163, %s164
      %p176 = scmp.eq.s32.totalorder %s34, 1
      %p177 = por %p175, %p176
      %p179 = scmp.ne.s32.totalorder %s164, %s178
      %p180 = scmp.eq.s32.totalorder %s34, 0
      %p181 = por %p179, %p180
      %s183 = sadd.s32 %s182, 1
      %p186 = scmp.eq.s32.totalorder %s28, 1
      %p187 = scmp.ne.s32.totalorder %s182, %s184
      %p188 = scmp.eq.s32.totalorder %s28, 0
      %p189 = por %p187, %p188
      %p190 = scmp.ne.s32.totalorder %s182, %s184
      %p191 = scmp.eq.s32.totalorder %s33, 1
      %p192 = por %p190, %p191
      %p193 = scmp.ne.s32.totalorder %s184, %s185
      %p194 = scmp.eq.s32.totalorder %s33, 0
      %p195 = por %p193, %p194
      %p196 = scmp.ne.s32.totalorder %s184, %s185
      %p197 = scmp.eq.s32.totalorder %s34, 1
      %p198 = por %p196, %p197
      %p200 = scmp.ne.s32.totalorder %s185, %s199
      %p201 = scmp.eq.s32.totalorder %s34, 0
      %p202 = por %p200, %p201
      %s204 = sadd.s32 %s203, 1
      %p207 = scmp.eq.s32.totalorder %s28, 1
      %p208 = scmp.ne.s32.totalorder %s203, %s205
      %p209 = scmp.eq.s32.totalorder %s28, 0
      %p210 = por %p208, %p209
      %p211 = scmp.ne.s32.totalorder %s203, %s205
      %p212 = scmp.eq.s32.totalorder %s33, 1
      %p213 = por %p211, %p212
      %p214 = scmp.ne.s32.totalorder %s205, %s206
      %p215 = scmp.eq.s32.totalorder %s33, 0
      %p216 = por %p214, %p215
      %p217 = scmp.ne.s32.totalorder %s205, %s206
      %p218 = scmp.eq.s32.totalorder %s34, 1
      %p219 = por %p217, %p218
      %p221 = scmp.ne.s32.totalorder %s206, %s220
      %p222 = scmp.eq.s32.totalorder %s34, 0
      %p223 = por %p221, %p222
      %s224 = ssub.s32 %s28, %s35
      %p225 = scmp.eq.s32.totalorder %s224, 0
      %s227 = sadd.s32 %s226, 1
      %s228 = scalar_select %p225, %s226, %s227
      %p231 = pneg %p225
      %p232 = scmp.eq.s32.totalorder %s28, 1
      %p233 = por %p231, %p232
      %p234 = scmp.ne.s32.totalorder %s226, %s229
      %p235 = scmp.eq.s32.totalorder %s28, 0
      %p236 = por %p234, %p235
      %p237 = scmp.ne.s32.totalorder %s226, %s229
      %p238 = scmp.eq.s32.totalorder %s33, 1
      %p239 = por %p237, %p238
      %p240 = scmp.ne.s32.totalorder %s229, %s230
      %p241 = scmp.eq.s32.totalorder %s33, 0
      %p242 = por %p240, %p241
      %p243 = scmp.ne.s32.totalorder %s229, %s230
      %p244 = scmp.eq.s32.totalorder %s34, 1
      %p245 = por %p243, %p244
      %p247 = scmp.ne.s32.totalorder %s230, %s246
      %p248 = scmp.eq.s32.totalorder %s34, 0
      %p249 = por %p247, %p248
      %s250 = ssub.s32 %s28, %s35
      %p251 = scmp.eq.s32.totalorder %s250, 0
      %s253 = sadd.s32 %s252, 1
      %s254 = scalar_select %p251, %s252, %s253
      %p257 = pneg %p251
      %p258 = scmp.eq.s32.totalorder %s28, 1
      %p259 = por %p257, %p258
      %p260 = scmp.ne.s32.totalorder %s252, %s255
      %p261 = scmp.eq.s32.totalorder %s28, 0
      %p262 = por %p260, %p261
      %p263 = scmp.ne.s32.totalorder %s252, %s255
      %p264 = scmp.eq.s32.totalorder %s33, 1
      %p265 = por %p263, %p264
      %p266 = scmp.ne.s32.totalorder %s255, %s256
      %p267 = scmp.eq.s32.totalorder %s33, 0
      %p268 = por %p266, %p267
      %p269 = scmp.ne.s32.totalorder %s255, %s256
      %p270 = scmp.eq.s32.totalorder %s34, 1
      %p271 = por %p269, %p270
      %p273 = scmp.ne.s32.totalorder %s256, %s272
      %p274 = scmp.eq.s32.totalorder %s34, 0
      %p275 = por %p273, %p274
      %p276 = scmp.le.s32.totalorder 1, %s28
      %p277 = scmp.lt.s32.totalorder %s28, 3
      %p278 = pnand %p276, %p277
      %p279 = pneg %p278
      // Predicated region
      $region9: #{tpu_custom_call.1} parent=5 // pred_check
        _
      $region10: #{tpu_custom_call.1} parent=5 // pred_check_branch
        %281 = sbr.rel (%p278) target = $region12
      $region11: #{tpu_custom_call.1} parent=5 // pred_region
        %s282 = ssub.s32 %s28, 1
        // Predicated region
        $region13: #{tpu_custom_call.1} parent=11 // pred_check
          %p283 = pneg %p153
        $region14: #{tpu_custom_call.1} parent=11 // pred_check_branch
          %285 = sbr.rel (%p283) target = $region16
        $region15: #{tpu_custom_call.1} parent=11 // pred_region
          _
        $region16: #{tpu_custom_call.1} parent=11 // pred_fallthru
          _
        // Predicated region
        $region17: #{tpu_custom_call.1} parent=11 // pred_check
          %p286 = pneg %p174
        $region18: #{tpu_custom_call.1} parent=11 // pred_check_branch
          %288 = sbr.rel (%p286) target = $region20
        $region19: #{tpu_custom_call.1} parent=11 // pred_region
          _
        $region20: #{tpu_custom_call.1} parent=11 // pred_fallthru
          _
        // Predicated region
        $region21: #{tpu_custom_call.1} parent=11 // pred_check
          %p289 = pneg %p195
        $region22: #{tpu_custom_call.1} parent=11 // pred_check_branch
          %291 = sbr.rel (%p289) target = $region24
        $region23: #{tpu_custom_call.1} parent=11 // pred_region
          _
        $region24: #{tpu_custom_call.1} parent=11 // pred_fallthru
          _
        // Predicated region
        $region25: #{tpu_custom_call.1} parent=11 // pred_check
          %p292 = pneg %p216
        $region26: #{tpu_custom_call.1} parent=11 // pred_check_branch
          %294 = sbr.rel (%p292) target = $region28
        $region27: #{tpu_custom_call.1} parent=11 // pred_region
          _
        $region28: #{tpu_custom_call.1} parent=11 // pred_fallthru
          _
      $region12: #{tpu_custom_call.1} parent=5 // pred_fallthru
        _
      %p295 = scmp.lt.s32.totalorder %s28, 2
      // Predicated region
      $region29: #{tpu_custom_call.1} parent=5 // pred_check
        %p296 = pneg %p295
      $region30: #{tpu_custom_call.1} parent=5 // pred_check_branch
        %298 = sbr.rel (%p296) target = $region32
      $region31: #{tpu_custom_call.1} parent=5 // pred_region
        // Predicated region
        $region33: #{tpu_custom_call.1} parent=31 // pred_check
          %p299 = pneg %p48
        $region34: #{tpu_custom_call.1} parent=31 // pred_check_branch
          %301 = sbr.rel (%p299) target = $region36
        $region35: #{tpu_custom_call.1} parent=31 // pred_region
          %s302 = sand.u32 %s38, 1
          %s303 = scalar_lea.sflag [#allocation3], %s302
          %s304 = sand.u32 %s38, 1
          %s305 = smul.addr %s304, 8
          %s306 = scalar_lea.vmem [#allocation2], %s305
          %s308 = ssub.s32 128, 128
          %309 = vsyncadd %s303, %s308
          %s310 = smul.addr %s28, 128
          %s311 = scalar_lea.hbm %s0, %s310
          %s313 = sshll.u32 %s306, 4
          %s314 = int_to_ptr.vmem [resolvable:$true] %s313
          %316 = dma.hbm_to_vmem [thread:$0]  %s311, 128, %s314, %s303
        $region36: #{tpu_custom_call.1} parent=31 // pred_fallthru
          _
        // Predicated region
        $region37: #{tpu_custom_call.1} parent=31 // pred_check
          %p317 = pneg %p74
        $region38: #{tpu_custom_call.1} parent=31 // pred_check_branch
          %319 = sbr.rel (%p317) target = $region40
        $region39: #{tpu_custom_call.1} parent=31 // pred_region
          %s320 = sand.u32 %s28, 1
          %s321 = scalar_lea.sflag [#allocation6], %s320
          %s322 = sand.u32 %s64, 1
          %s323 = smul.addr %s322, 8
          %s324 = scalar_lea.vmem [#allocation5], %s323
          %s326 = ssub.s32 128, 128
          %327 = vsyncadd %s321, %s326
          %s328 = smul.addr %s28, 128
          %s329 = scalar_lea.hbm %s1, %s328
          %s331 = sshll.u32 %s324, 4
          %s332 = int_to_ptr.vmem [resolvable:$true] %s331
          %334 = dma.hbm_to_vmem [thread:$0]  %s329, 128, %s332, %s321
        $region40: #{tpu_custom_call.1} parent=31 // pred_fallthru
          _
        // Predicated region
        $region41: #{tpu_custom_call.1} parent=31 // pred_check
          %p335 = pneg %p100
        $region42: #{tpu_custom_call.1} parent=31 // pred_check_branch
          %337 = sbr.rel (%p335) target = $region44
        $region43: #{tpu_custom_call.1} parent=31 // pred_region
          %s338 = sand.u32 %s28, 1
          %s339 = scalar_lea.sflag [#allocation6], %s338
          %s340 = sand.u32 %s90, 1
          %s341 = smul.addr %s340, 8
          %s342 = scalar_lea.vmem [#allocation7], %s341
          %s344 = ssub.s32 128, 128
          %345 = vsyncadd %s339, %s344
          %s346 = smul.addr %s28, 128
          %s347 = scalar_lea.hbm %s2, %s346
          %s349 = sshll.u32 %s342, 4
          %s350 = int_to_ptr.vmem [resolvable:$true] %s349
          %352 = dma.hbm_to_vmem [thread:$0]  %s347, 128, %s350, %s339
        $region44: #{tpu_custom_call.1} parent=31 // pred_fallthru
          _
        // Predicated region
        $region45: #{tpu_custom_call.1} parent=31 // pred_check
          %p353 = pneg %p126
        $region46: #{tpu_custom_call.1} parent=31 // pred_check_branch
          %355 = sbr.rel (%p353) target = $region48
        $region47: #{tpu_custom_call.1} parent=31 // pred_region
          %p356 = scmp.lt.s32.totalorder %s28, 1
          %s357 = scalar_select %p356, %s28, 1
          %s358 = scalar_lea.vmem %s3, %s357
        $region48: #{tpu_custom_call.1} parent=31 // pred_fallthru
          _
      $region32: #{tpu_custom_call.1} parent=5 // pred_fallthru
        _
      %p359 = scmp.le.s32.totalorder 1, %s28
      %p360 = scmp.lt.s32.totalorder %s28, 3
      %p361 = pnand %p359, %p360
      %p362 = pneg %p361
      // Predicated region
      $region49: #{tpu_custom_call.1} parent=5 // pred_check
        _
      $region50: #{tpu_custom_call.1} parent=5 // pred_check_branch
        %364 = sbr.rel (%p361) target = $region52
      $region51: #{tpu_custom_call.1} parent=5 // pred_region
        %s365 = ssub.s32 %s28, 1
        %s366 = sand.u32 %s41, 1
        %s367 = scalar_lea.sflag [#allocation3], %s366
        %s368 = sand.u32 %s41, 1
        %s369 = smul.addr %s368, 8
        %s370 = scalar_lea.vmem [#allocation2], %s369
        // Predicated region
        $region53: #{tpu_custom_call.1} parent=51 // pred_check
          %p371 = pneg %p54
        $region54: #{tpu_custom_call.1} parent=51 // pred_check_branch
          %373 = sbr.rel (%p371) target = $region56
        $region55: #{tpu_custom_call.1} parent=51 // pred_region
          %374 = dma.done %s367, 128
        $region56: #{tpu_custom_call.1} parent=51 // pred_fallthru
          _
        %s375 = sand.u32 %s33, 1
        %s376 = scalar_lea.sflag [#allocation6], %s375
        %s377 = sand.u32 %s67, 1
        %s378 = smul.addr %s377, 8
        %s379 = scalar_lea.vmem [#allocation5], %s378
        // Predicated region
        $region57: #{tpu_custom_call.1} parent=51 // pred_check
          %p380 = pneg %p80
        $region58: #{tpu_custom_call.1} parent=51 // pred_check_branch
          %382 = sbr.rel (%p380) target = $region60
        $region59: #{tpu_custom_call.1} parent=51 // pred_region
          %383 = dma.done %s376, 128
        $region60: #{tpu_custom_call.1} parent=51 // pred_fallthru
          _
        %s384 = sand.u32 %s33, 1
        %s385 = scalar_lea.sflag [#allocation6], %s384
        %s386 = sand.u32 %s93, 1
        %s387 = smul.addr %s386, 8
        %s388 = scalar_lea.vmem [#allocation7], %s387
        // Predicated region
        $region61: #{tpu_custom_call.1} parent=51 // pred_check
          %p389 = pneg %p106
        $region62: #{tpu_custom_call.1} parent=51 // pred_check_branch
          %391 = sbr.rel (%p389) target = $region64
        $region63: #{tpu_custom_call.1} parent=51 // pred_region
          %392 = dma.done %s385, 128
        $region64: #{tpu_custom_call.1} parent=51 // pred_fallthru
          _
        %s393 = sand.u32 %s41, 1
        %s394 = scalar_lea.sflag [#allocation3], %s393
        %s395 = sand.u32 %s41, 1
        %s396 = smul.addr %s395, 8
        %s397 = scalar_lea.vmem [#allocation2], %s396
        %p398 = pneg %p54
        %p399 = pneg %p51
        %s400 = sand.u32 %s33, 1
        %s401 = scalar_lea.sflag [#allocation6], %s400
        %s402 = sand.u32 %s67, 1
        %s403 = smul.addr %s402, 8
        %s404 = scalar_lea.vmem [#allocation5], %s403
        %p405 = pneg %p80
        %p406 = pneg %p77
        %s407 = sand.u32 %s33, 1
        %s408 = scalar_lea.sflag [#allocation6], %s407
        %s409 = sand.u32 %s93, 1
        %s410 = smul.addr %s409, 8
        %s411 = scalar_lea.vmem [#allocation7], %s410
        %p412 = pneg %p106
        %p413 = pneg %p103
        %p414 = scmp.lt.s32.totalorder %s33, 1
        %s415 = scalar_select %p414, %s33, 1
        %s416 = scalar_lea.vmem %s3, %s415
        %p417 = pneg %p132
        %p418 = pneg %p129
        %p419 = pneg %p153
        %p420 = pneg %p150
        %p421 = pneg %p174
        %p422 = pneg %p171
        %p423 = pneg %p195
        %p424 = pneg %p192
        %p425 = pneg %p216
        %p426 = pneg %p213
        %p427 = pneg %p242
        %p428 = pneg %p239
        %s429 = sand.u32 %s229, 1
        %s430 = scalar_lea.sflag [#allocation4], %s429
        %s431 = sand.u32 %s229, 1
        %s432 = smul.addr %s431, 8
        %s433 = scalar_lea.vmem [#allocation8], %s432
        %p434 = pneg %p268
        %p435 = pneg %p265
        %s436 = sand.u32 %s255, 1
        %s437 = scalar_lea.sflag [#allocation10], %s436
        %s438 = sand.u32 %s255, 1
        %s439 = smul.addr %s438, 8
        %s440 = scalar_lea.vmem [#allocation9], %s439
        %p441 = scmp.lt.s32.totalorder %s33, 1
        %s442 = scalar_select %p441, %s33, 1
        %s443 = scalar_lea.vmem %s3, %s442
        %v444 = vld [vmem:[%s370] sm:$0xff]
        %v445 = vld [vmem:[%s379] sm:$0xff]
        %v446 = vld [vmem:[%s388] sm:$0xff]
        %vm447 = vcmp.eq.f32.partialorder %v446, 0.0
        %v448 = vsel %vm447, -1e+10, 0.0
        %v449 = vld [vmem:[%s443] sm:$0x1]
        %vm450 = vcmp.eq.f32.partialorder %v449, 0.0
        %v451 = vsel %vm450, -1e+10, 0.0
        %v452 = vld [vmem:[%s7] sm:$0xff]
        %v453 = vld [vmem:[%s4] sm:$0xff]
        %v454 = vld [vmem:[%s4 + $0x8] sm:$0xff]
        %v455 = vld [vmem:[%s4 + $0x10] sm:$0xff]
        %v456 = vld [vmem:[%s4 + $0x18] sm:$0xff]
        %v457 = vlaneseq
        %v458 = vshrl.u32 %v457, 7
        %v459 = vsub.s32 0, %v458
        %v460 = vrot.slane %v452, %v459
        %vm461 = vcmask 261120
        %v463 = vsel %vm461, %v444, 0
        %465 = vmatprep.subr.mxu0 0.0
        %466 = vmatpush1.msra.mxu0 %v453
        %467 = vmatprep.subr.mxu0 0.0
        %468 = vmatpush1.msra.mxu0 %v454
        %469 = vmatprep.subr.mxu0 0.0
        %470 = vmatpush1.msra.mxu0 %v455
        %471 = vmatprep.subr.mxu0 0.0
        %472 = vmatpush1.msra.mxu0 %v456
        %473 = vmatprep.subr.mxu0 0.0
        %474 = vmatpush1.msra.mxu0 0.0
        %475 = vmatprep.subr.mxu0 0.0
        %476 = vmatpush1.msra.mxu0 0.0
        %477 = vmatprep.subr.mxu0 0.0
        %478 = vmatpush1.msra.mxu0 0.0
        %479 = vmatprep.subr.mxu0 0.0
        %480 = vmatpush1.msra.mxu0 0.0
        %481 = vmatprep.subr.mxu0 0.0
        %482 = vmatpush1.msra.mxu0 0.0
        %483 = vmatprep.subr.mxu0 0.0
        %484 = vmatpush1.msra.mxu0 0.0
        %485 = vmatprep.subr.mxu0 0.0
        %486 = vmatpush1.msra.mxu0 0.0
        %487 = vmatprep.subr.mxu0 0.0
        %488 = vmatpush1.msra.mxu0 0.0
        %489 = vmatprep.subr.mxu0 0.0
        %490 = vmatpush1.msra.mxu0 0.0
        %491 = vmatprep.subr.mxu0 0.0
        %492 = vmatpush1.msra.mxu0 0.0
        %493 = vmatprep.subr.mxu0 0.0
        %494 = vmatpush1.msra.mxu0 0.0
        %495 = vmatprep.subr.mxu0 0.0
        %496 = vmatpush1.msra.mxu0 0.0
        %497 = vmatprep.subr.mxu0 0.0
        %498 = vmatpush1.msra.mxu0 0.0
        %499 = vmatprep.subr.mxu0 0.0
        %500 = vmatpush1.msra.mxu0 0.0
        %501 = vmatprep.subr.mxu0 0.0
        %502 = vmatpush1.msra.mxu0 0.0
        %503 = vmatprep.subr.mxu0 0.0
        %504 = vmatpush1.msra.mxu0 0.0
        %505 = vmatprep.subr.mxu0 0.0
        %506 = vmatpush1.msra.mxu0 0.0
        %507 = vmatprep.subr.mxu0 0.0
        %508 = vmatpush1.msra.mxu0 0.0
        %509 = vmatprep.subr.mxu0 0.0
        %510 = vmatpush1.msra.mxu0 0.0
        %511 = vmatprep.subr.mxu0 0.0
        %512 = vmatpush1.msra.mxu0 0.0
        %513 = vmatprep.subr.mxu0 0.0
        %514 = vmatpush1.msra.mxu0 0.0
        %515 = vmatprep.subr.mxu0 0.0
        %516 = vmatpush1.msra.mxu0 0.0
        %517 = vmatprep.subr.mxu0 0.0
        %518 = vmatpush1.msra.mxu0 0.0
        %519 = vmatprep.subr.mxu0 0.0
        %520 = vmatpush1.msra.mxu0 0.0
        %521 = vmatprep.subr.mxu0 0.0
        %522 = vmatpush1.msra.mxu0 0.0
        %523 = vmatprep.subr.mxu0 0.0
        %524 = vmatpush1.msra.mxu0 0.0
        %525 = vmatprep.subr.mxu0 0.0
        %526 = vmatpush1.msra.mxu0 0.0
        %527 = vmatprep.subr.mxu0 0.0
        %528 = vmatpush1.msra.mxu0 0.0
        %529 = vmatprep.mubr.f32.mxu0 0.0
        %530 = vmatmul.mubr.f32.gmra.mrb[0].mxu0 %v463
        %v531 = vpop.f32.mrb[0].mxu0
        %v532 = vadd.f32 %v460, %v531
        %v533 = vpop.f32.mrb[0].mxu0
        %534 = vdwg.mxu0
        %539 = vrot.lane.b32.xlu0 %v453, 96
        %v540 = vpop.permute.xlu0 %539
        %541 = vrot.lane.b32.xlu0 %v454, 96
        %v542 = vpop.permute.xlu0 %541
        %543 = vrot.lane.b32.xlu0 %v455, 96
        %v544 = vpop.permute.xlu0 %543
        %545 = vrot.lane.b32.xlu0 %v456, 96
        %v546 = vpop.permute.xlu0 %545
        %552 = vrot.lane.b32.xlu0 %v460, 96
        %v553 = vpop.permute.xlu0 %552
        %555 = vmatprep.subr.mxu0 0.0
        %556 = vmatpush1.msra.mxu0 %v540
        %557 = vmatprep.subr.mxu0 0.0
        %558 = vmatpush1.msra.mxu0 %v542
        %559 = vmatprep.subr.mxu0 0.0
        %560 = vmatpush1.msra.mxu0 %v544
        %561 = vmatprep.subr.mxu0 0.0
        %562 = vmatpush1.msra.mxu0 %v546
        %563 = vmatprep.subr.mxu0 0.0
        %564 = vmatpush1.msra.mxu0 0.0
        %565 = vmatprep.subr.mxu0 0.0
        %566 = vmatpush1.msra.mxu0 0.0
        %567 = vmatprep.subr.mxu0 0.0
        %568 = vmatpush1.msra.mxu0 0.0
        %569 = vmatprep.subr.mxu0 0.0
        %570 = vmatpush1.msra.mxu0 0.0
        %571 = vmatprep.subr.mxu0 0.0
        %572 = vmatpush1.msra.mxu0 0.0
        %573 = vmatprep.subr.mxu0 0.0
        %574 = vmatpush1.msra.mxu0 0.0
        %575 = vmatprep.subr.mxu0 0.0
        %576 = vmatpush1.msra.mxu0 0.0
        %577 = vmatprep.subr.mxu0 0.0
        %578 = vmatpush1.msra.mxu0 0.0
        %579 = vmatprep.subr.mxu0 0.0
        %580 = vmatpush1.msra.mxu0 0.0
        %581 = vmatprep.subr.mxu0 0.0
        %582 = vmatpush1.msra.mxu0 0.0
        %583 = vmatprep.subr.mxu0 0.0
        %584 = vmatpush1.msra.mxu0 0.0
        %585 = vmatprep.subr.mxu0 0.0
        %586 = vmatpush1.msra.mxu0 0.0
        %587 = vmatprep.subr.mxu0 0.0
        %588 = vmatpush1.msra.mxu0 0.0
        %589 = vmatprep.subr.mxu0 0.0
        %590 = vmatpush1.msra.mxu0 0.0
        %591 = vmatprep.subr.mxu0 0.0
        %592 = vmatpush1.msra.mxu0 0.0
        %593 = vmatprep.subr.mxu0 0.0
        %594 = vmatpush1.msra.mxu0 0.0
        %595 = vmatprep.subr.mxu0 0.0
        %596 = vmatpush1.msra.mxu0 0.0
        %597 = vmatprep.subr.mxu0 0.0
        %598 = vmatpush1.msra.mxu0 0.0
        %599 = vmatprep.subr.mxu0 0.0
        %600 = vmatpush1.msra.mxu0 0.0
        %601 = vmatprep.subr.mxu0 0.0
        %602 = vmatpush1.msra.mxu0 0.0
        %603 = vmatprep.subr.mxu0 0.0
        %604 = vmatpush1.msra.mxu0 0.0
        %605 = vmatprep.subr.mxu0 0.0
        %606 = vmatpush1.msra.mxu0 0.0
        %607 = vmatprep.subr.mxu0 0.0
        %608 = vmatpush1.msra.mxu0 0.0
        %609 = vmatprep.subr.mxu0 0.0
        %610 = vmatpush1.msra.mxu0 0.0
        %611 = vmatprep.subr.mxu0 0.0
        %612 = vmatpush1.msra.mxu0 0.0
        %613 = vmatprep.subr.mxu0 0.0
        %614 = vmatpush1.msra.mxu0 0.0
        %615 = vmatprep.subr.mxu0 0.0
        %616 = vmatpush1.msra.mxu0 0.0
        %617 = vmatprep.subr.mxu0 0.0
        %618 = vmatpush1.msra.mxu0 0.0
        %619 = vmatprep.mubr.f32.mxu0 0.0
        %620 = vmatmul.mubr.f32.gmra.mrb[0].mxu0 %v463
        %v621 = vpop.f32.mrb[0].mxu0
        %v622 = vadd.f32 %v553, %v621
        %v623 = vpop.f32.mrb[0].mxu0
        %624 = vdwg.mxu0
        %vm625 = vcmask 64512
        %v627 = vsel %vm625, %v532, 0
        %v630 = vsel %vm625, %v622, 0
        %632 = vmatprep.subr.mxu0 0.0
        %633 = vmatpush1.xpose.msra.mxu0 %v630
        %634 = vmatprep.subr.mxu0 0.0
        %635 = vmatpush1.xpose.msra.mxu0 0.0
        %636 = vmatprep.subr.mxu0 0.0
        %637 = vmatpush1.xpose.msra.mxu0 0.0
        %638 = vmatprep.subr.mxu0 0.0
        %639 = vmatpush1.xpose.msra.mxu0 0.0
        %640 = vmatprep.subr.mxu0 0.0
        %641 = vmatpush1.xpose.msra.mxu0 0.0
        %642 = vmatprep.subr.mxu0 0.0
        %643 = vmatpush1.xpose.msra.mxu0 0.0
        %644 = vmatprep.subr.mxu0 0.0
        %645 = vmatpush1.xpose.msra.mxu0 0.0
        %646 = vmatprep.subr.mxu0 0.0
        %647 = vmatpush1.xpose.msra.mxu0 0.0
        %648 = vmatprep.subr.mxu0 0.0
        %649 = vmatpush1.xpose.msra.mxu0 0.0
        %650 = vmatprep.subr.mxu0 0.0
        %651 = vmatpush1.xpose.msra.mxu0 0.0
        %652 = vmatprep.subr.mxu0 0.0
        %653 = vmatpush1.xpose.msra.mxu0 0.0
        %654 = vmatprep.subr.mxu0 0.0
        %655 = vmatpush1.xpose.msra.mxu0 0.0
        %656 = vmatprep.subr.mxu0 0.0
        %657 = vmatpush1.xpose.msra.mxu0 0.0
        %658 = vmatprep.subr.mxu0 0.0
        %659 = vmatpush1.xpose.msra.mxu0 0.0
        %660 = vmatprep.subr.mxu0 0.0
        %661 = vmatpush1.xpose.msra.mxu0 0.0
        %662 = vmatprep.subr.mxu0 0.0
        %663 = vmatpush1.xpose.msra.mxu0 0.0
        %664 = vmatprep.subr.mxu0 0.0
        %665 = vmatpush1.xpose.msra.mxu0 0.0
        %666 = vmatprep.subr.mxu0 0.0
        %667 = vmatpush1.xpose.msra.mxu0 0.0
        %668 = vmatprep.subr.mxu0 0.0
        %669 = vmatpush1.xpose.msra.mxu0 0.0
        %670 = vmatprep.subr.mxu0 0.0
        %671 = vmatpush1.xpose.msra.mxu0 0.0
        %672 = vmatprep.subr.mxu0 0.0
        %673 = vmatpush1.xpose.msra.mxu0 0.0
        %674 = vmatprep.subr.mxu0 0.0
        %675 = vmatpush1.xpose.msra.mxu0 0.0
        %676 = vmatprep.subr.mxu0 0.0
        %677 = vmatpush1.xpose.msra.mxu0 0.0
        %678 = vmatprep.subr.mxu0 0.0
        %679 = vmatpush1.xpose.msra.mxu0 0.0
        %680 = vmatprep.subr.mxu0 0.0
        %681 = vmatpush1.xpose.msra.mxu0 0.0
        %682 = vmatprep.subr.mxu0 0.0
        %683 = vmatpush1.xpose.msra.mxu0 0.0
        %684 = vmatprep.subr.mxu0 0.0
        %685 = vmatpush1.xpose.msra.mxu0 0.0
        %686 = vmatprep.subr.mxu0 0.0
        %687 = vmatpush1.xpose.msra.mxu0 0.0
        %688 = vmatprep.subr.mxu0 0.0
        %689 = vmatpush1.xpose.msra.mxu0 0.0
        %690 = vmatprep.subr.mxu0 0.0
        %691 = vmatpush1.xpose.msra.mxu0 0.0
        %692 = vmatprep.subr.mxu0 0.0
        %693 = vmatpush1.xpose.msra.mxu0 0.0
        %694 = vmatprep.subr.mxu0 0.0
        %695 = vmatpush1.xpose.msra.mxu0 0.0
        %696 = vmatprep.mubr.f32.mxu0 0.0
        %697 = vmatmul.mubr.f32.gmra.mrb[0].mxu0 %v627
        %v698 = vpop.f32.mrb[0].mxu0
        %v699 = vadd.f32 %v448, %v698
        %v700 = vpop.f32.mrb[0].mxu0
        %701 = vdwg.mxu0
        %v702 = vsel %vm625, %v699, -inf
        %703 = vmax.xlane.f32.xlu0 %v702
        %v704 = vpop.xlane.xlu0 %703
        %v705 = vsub.f32 %v699, %v704
        %v706 = vmul.f32 %v705, 1.442695
        %v707 = vpow.pop %v706
        %v708 = vsel %vm625, %v707, 0.0
        %709 = vadd.xlane.f32.xlu0 %v708
        %v710 = vpop.xlane.xlu0 %709
        %v711 = vrcp.pop %v710
        %v712 = vmul.f32 %v707, %v711
        %713 = vrot.lane.b32.xlu0 %v622, 96
        %v714 = vpop.permute.xlu0 %713
        %v717 = vsel %vm625, %v712, 0
        %719 = vmatprep.subr.mxu0 0.0
        %720 = vmatpush1.msra.mxu0 %v714
        %721 = vmatprep.subr.mxu0 0.0
        %722 = vmatpush1.msra.mxu0 0.0
        %723 = vmatprep.subr.mxu0 0.0
        %724 = vmatpush1.msra.mxu0 0.0
        %725 = vmatprep.subr.mxu0 0.0
        %726 = vmatpush1.msra.mxu0 0.0
        %727 = vmatprep.subr.mxu0 0.0
        %728 = vmatpush1.msra.mxu0 0.0
        %729 = vmatprep.subr.mxu0 0.0
        %730 = vmatpush1.msra.mxu0 0.0
        %731 = vmatprep.subr.mxu0 0.0
        %732 = vmatpush1.msra.mxu0 0.0
        %733 = vmatprep.subr.mxu0 0.0
        %734 = vmatpush1.msra.mxu0 0.0
        %735 = vmatprep.subr.mxu0 0.0
        %736 = vmatpush1.msra.mxu0 0.0
        %737 = vmatprep.subr.mxu0 0.0
        %738 = vmatpush1.msra.mxu0 0.0
        %739 = vmatprep.subr.mxu0 0.0
        %740 = vmatpush1.msra.mxu0 0.0
        %741 = vmatprep.subr.mxu0 0.0
        %742 = vmatpush1.msra.mxu0 0.0
        %743 = vmatprep.subr.mxu0 0.0
        %744 = vmatpush1.msra.mxu0 0.0
        %745 = vmatprep.subr.mxu0 0.0
        %746 = vmatpush1.msra.mxu0 0.0
        %747 = vmatprep.subr.mxu0 0.0
        %748 = vmatpush1.msra.mxu0 0.0
        %749 = vmatprep.subr.mxu0 0.0
        %750 = vmatpush1.msra.mxu0 0.0
        %751 = vmatprep.subr.mxu0 0.0
        %752 = vmatpush1.msra.mxu0 0.0
        %753 = vmatprep.subr.mxu0 0.0
        %754 = vmatpush1.msra.mxu0 0.0
        %755 = vmatprep.subr.mxu0 0.0
        %756 = vmatpush1.msra.mxu0 0.0
        %757 = vmatprep.subr.mxu0 0.0
        %758 = vmatpush1.msra.mxu0 0.0
        %759 = vmatprep.subr.mxu0 0.0
        %760 = vmatpush1.msra.mxu0 0.0
        %761 = vmatprep.subr.mxu0 0.0
        %762 = vmatpush1.msra.mxu0 0.0
        %763 = vmatprep.subr.mxu0 0.0
        %764 = vmatpush1.msra.mxu0 0.0
        %765 = vmatprep.subr.mxu0 0.0
        %766 = vmatpush1.msra.mxu0 0.0
        %767 = vmatprep.subr.mxu0 0.0
        %768 = vmatpush1.msra.mxu0 0.0
        %769 = vmatprep.subr.mxu0 0.0
        %770 = vmatpush1.msra.mxu0 0.0
        %771 = vmatprep.subr.mxu0 0.0
        %772 = vmatpush1.msra.mxu0 0.0
        %773 = vmatprep.subr.mxu0 0.0
        %774 = vmatpush1.msra.mxu0 0.0
        %775 = vmatprep.subr.mxu0 0.0
        %776 = vmatpush1.msra.mxu0 0.0
        %777 = vmatprep.subr.mxu0 0.0
        %778 = vmatpush1.msra.mxu0 0.0
        %779 = vmatprep.subr.mxu0 0.0
        %780 = vmatpush1.msra.mxu0 0.0
        %781 = vmatprep.subr.mxu0 0.0
        %782 = vmatpush1.msra.mxu0 0.0
        %783 = vmatprep.mubr.f32.mxu0 0.0
        %784 = vmatmul.mubr.f32.gmra.mrb[0].mxu0 %v717
        %v785 = vpop.f32.mrb[0].mxu0
        %v786 = vadd.f32 0.0, %v785
        %v787 = vpop.f32.mrb[0].mxu0
        %788 = vdwg.mxu0
        %789 = vrot.lane.b32.xlu0 %v532, 120
        %v790 = vpop.permute.xlu0 %789
        %791 = vrot.lane.b32.xlu0 %v622, 120
        %v792 = vpop.permute.xlu0 %791
        %v793 = vsel %vm625, %v790, 0
        %v795 = vsel %vm625, %v792, 0
        %797 = vmatprep.subr.mxu0 0.0
        %798 = vmatpush1.xpose.msra.mxu0 %v795
        %799 = vmatprep.subr.mxu0 0.0
        %800 = vmatpush1.xpose.msra.mxu0 0.0
        %801 = vmatprep.subr.mxu0 0.0
        %802 = vmatpush1.xpose.msra.mxu0 0.0
        %803 = vmatprep.subr.mxu0 0.0
        %804 = vmatpush1.xpose.msra.mxu0 0.0
        %805 = vmatprep.subr.mxu0 0.0
        %806 = vmatpush1.xpose.msra.mxu0 0.0
        %807 = vmatprep.subr.mxu0 0.0
        %808 = vmatpush1.xpose.msra.mxu0 0.0
        %809 = vmatprep.subr.mxu0 0.0
        %810 = vmatpush1.xpose.msra.mxu0 0.0
        %811 = vmatprep.subr.mxu0 0.0
        %812 = vmatpush1.xpose.msra.mxu0 0.0
        %813 = vmatprep.subr.mxu0 0.0
        %814 = vmatpush1.xpose.msra.mxu0 0.0
        %815 = vmatprep.subr.mxu0 0.0
        %816 = vmatpush1.xpose.msra.mxu0 0.0
        %817 = vmatprep.subr.mxu0 0.0
        %818 = vmatpush1.xpose.msra.mxu0 0.0
        %819 = vmatprep.subr.mxu0 0.0
        %820 = vmatpush1.xpose.msra.mxu0 0.0
        %821 = vmatprep.subr.mxu0 0.0
        %822 = vmatpush1.xpose.msra.mxu0 0.0
        %823 = vmatprep.subr.mxu0 0.0
        %824 = vmatpush1.xpose.msra.mxu0 0.0
        %825 = vmatprep.subr.mxu0 0.0
        %826 = vmatpush1.xpose.msra.mxu0 0.0
        %827 = vmatprep.subr.mxu0 0.0
        %828 = vmatpush1.xpose.msra.mxu0 0.0
        %829 = vmatprep.subr.mxu0 0.0
        %830 = vmatpush1.xpose.msra.mxu0 0.0
        %831 = vmatprep.subr.mxu0 0.0
        %832 = vmatpush1.xpose.msra.mxu0 0.0
        %833 = vmatprep.subr.mxu0 0.0
        %834 = vmatpush1.xpose.msra.mxu0 0.0
        %835 = vmatprep.subr.mxu0 0.0
        %836 = vmatpush1.xpose.msra.mxu0 0.0
        %837 = vmatprep.subr.mxu0 0.0
        %838 = vmatpush1.xpose.msra.mxu0 0.0
        %839 = vmatprep.subr.mxu0 0.0
        %840 = vmatpush1.xpose.msra.mxu0 0.0
        %841 = vmatprep.subr.mxu0 0.0
        %842 = vmatpush1.xpose.msra.mxu0 0.0
        %843 = vmatprep.subr.mxu0 0.0
        %844 = vmatpush1.xpose.msra.mxu0 0.0
        %845 = vmatprep.subr.mxu0 0.0
        %846 = vmatpush1.xpose.msra.mxu0 0.0
        %847 = vmatprep.subr.mxu0 0.0
        %848 = vmatpush1.xpose.msra.mxu0 0.0
        %849 = vmatprep.subr.mxu0 0.0
        %850 = vmatpush1.xpose.msra.mxu0 0.0
        %851 = vmatprep.subr.mxu0 0.0
        %852 = vmatpush1.xpose.msra.mxu0 0.0
        %853 = vmatprep.subr.mxu0 0.0
        %854 = vmatpush1.xpose.msra.mxu0 0.0
        %855 = vmatprep.subr.mxu0 0.0
        %856 = vmatpush1.xpose.msra.mxu0 0.0
        %857 = vmatprep.subr.mxu0 0.0
        %858 = vmatpush1.xpose.msra.mxu0 0.0
        %859 = vmatprep.subr.mxu0 0.0
        %860 = vmatpush1.xpose.msra.mxu0 0.0
        %861 = vmatprep.mubr.f32.mxu0 0.0
        %862 = vmatmul.mubr.f32.gmra.mrb[0].mxu0 %v793
        %v863 = vpop.f32.mrb[0].mxu0
        %v864 = vadd.f32 %v448, %v863
        %v865 = vpop.f32.mrb[0].mxu0
        %866 = vdwg.mxu0
        %v867 = vsel %vm625, %v864, -inf
        %868 = vmax.xlane.f32.xlu0 %v867
        %v869 = vpop.xlane.xlu0 %868
        %v870 = vsub.f32 %v864, %v869
        %v871 = vmul.f32 %v870, 1.442695
        %v872 = vpow.pop %v871
        %v873 = vsel %vm625, %v872, 0.0
        %874 = vadd.xlane.f32.xlu0 %v873
        %v875 = vpop.xlane.xlu0 %874
        %v876 = vrcp.pop %v875
        %v877 = vmul.f32 %v872, %v876
        %878 = vrot.lane.b32.xlu0 %v622, 88
        %v879 = vpop.permute.xlu0 %878
        %v882 = vsel %vm625, %v877, 0
        %884 = vmatprep.subr.mxu0 0.0
        %885 = vmatpush1.msra.mxu0 %v879
        %886 = vmatprep.subr.mxu0 0.0
        %887 = vmatpush1.msra.mxu0 0.0
        %888 = vmatprep.subr.mxu0 0.0
        %889 = vmatpush1.msra.mxu0 0.0
        %890 = vmatprep.subr.mxu0 0.0
        %891 = vmatpush1.msra.mxu0 0.0
        %892 = vmatprep.subr.mxu0 0.0
        %893 = vmatpush1.msra.mxu0 0.0
        %894 = vmatprep.subr.mxu0 0.0
        %895 = vmatpush1.msra.mxu0 0.0
        %896 = vmatprep.subr.mxu0 0.0
        %897 = vmatpush1.msra.mxu0 0.0
        %898 = vmatprep.subr.mxu0 0.0
        %899 = vmatpush1.msra.mxu0 0.0
        %900 = vmatprep.subr.mxu0 0.0
        %901 = vmatpush1.msra.mxu0 0.0
        %902 = vmatprep.subr.mxu0 0.0
        %903 = vmatpush1.msra.mxu0 0.0
        %904 = vmatprep.subr.mxu0 0.0
        %905 = vmatpush1.msra.mxu0 0.0
        %906 = vmatprep.subr.mxu0 0.0
        %907 = vmatpush1.msra.mxu0 0.0
        %908 = vmatprep.subr.mxu0 0.0
        %909 = vmatpush1.msra.mxu0 0.0
        %910 = vmatprep.subr.mxu0 0.0
        %911 = vmatpush1.msra.mxu0 0.0
        %912 = vmatprep.subr.mxu0 0.0
        %913 = vmatpush1.msra.mxu0 0.0
        %914 = vmatprep.subr.mxu0 0.0
        %915 = vmatpush1.msra.mxu0 0.0
        %916 = vmatprep.subr.mxu0 0.0
        %917 = vmatpush1.msra.mxu0 0.0
        %918 = vmatprep.subr.mxu0 0.0
        %919 = vmatpush1.msra.mxu0 0.0
        %920 = vmatprep.subr.mxu0 0.0
        %921 = vmatpush1.msra.mxu0 0.0
        %922 = vmatprep.subr.mxu0 0.0
        %923 = vmatpush1.msra.mxu0 0.0
        %924 = vmatprep.subr.mxu0 0.0
        %925 = vmatpush1.msra.mxu0 0.0
        %926 = vmatprep.subr.mxu0 0.0
        %927 = vmatpush1.msra.mxu0 0.0
        %928 = vmatprep.subr.mxu0 0.0
        %929 = vmatpush1.msra.mxu0 0.0
        %930 = vmatprep.subr.mxu0 0.0
        %931 = vmatpush1.msra.mxu0 0.0
        %932 = vmatprep.subr.mxu0 0.0
        %933 = vmatpush1.msra.mxu0 0.0
        %934 = vmatprep.subr.mxu0 0.0
        %935 = vmatpush1.msra.mxu0 0.0
        %936 = vmatprep.subr.mxu0 0.0
        %937 = vmatpush1.msra.mxu0 0.0
        %938 = vmatprep.subr.mxu0 0.0
        %939 = vmatpush1.msra.mxu0 0.0
        %940 = vmatprep.subr.mxu0 0.0
        %941 = vmatpush1.msra.mxu0 0.0
        %942 = vmatprep.subr.mxu0 0.0
        %943 = vmatpush1.msra.mxu0 0.0
        %944 = vmatprep.subr.mxu0 0.0
        %945 = vmatpush1.msra.mxu0 0.0
        %946 = vmatprep.subr.mxu0 0.0
        %947 = vmatpush1.msra.mxu0 0.0
        %948 = vmatprep.mubr.f32.mxu0 0.0
        %949 = vmatmul.mubr.f32.gmra.mrb[0].mxu0 %v882
        %v950 = vpop.f32.mrb[0].mxu0
        %v951 = vadd.f32 0.0, %v950
        %v952 = vpop.f32.mrb[0].mxu0
        %953 = vdwg.mxu0
        %954 = vrot.lane.b32.xlu0 %v532, 112
        %v955 = vpop.permute.xlu0 %954
        %956 = vrot.lane.b32.xlu0 %v622, 112
        %v957 = vpop.permute.xlu0 %956
        %v958 = vsel %vm625, %v955, 0
        %v960 = vsel %vm625, %v957, 0
        %962 = vmatprep.subr.mxu0 0.0
        %963 = vmatpush1.xpose.msra.mxu0 %v960
        %964 = vmatprep.subr.mxu0 0.0
        %965 = vmatpush1.xpose.msra.mxu0 0.0
        %966 = vmatprep.subr.mxu0 0.0
        %967 = vmatpush1.xpose.msra.mxu0 0.0
        %968 = vmatprep.subr.mxu0 0.0
        %969 = vmatpush1.xpose.msra.mxu0 0.0
        %970 = vmatprep.subr.mxu0 0.0
        %971 = vmatpush1.xpose.msra.mxu0 0.0
        %972 = vmatprep.subr.mxu0 0.0
        %973 = vmatpush1.xpose.msra.mxu0 0.0
        %974 = vmatprep.subr.mxu0 0.0
        %975 = vmatpush1.xpose.msra.mxu0 0.0
        %976 = vmatprep.subr.mxu0 0.0
        %977 = vmatpush1.xpose.msra.mxu0 0.0
        %978 = vmatprep.subr.mxu0 0.0
        %979 = vmatpush1.xpose.msra.mxu0 0.0
        %980 = vmatprep.subr.mxu0 0.0
        %981 = vmatpush1.xpose.msra.mxu0 0.0
        %982 = vmatprep.subr.mxu0 0.0
        %983 = vmatpush1.xpose.msra.mxu0 0.0
        %984 = vmatprep.subr.mxu0 0.0
        %985 = vmatpush1.xpose.msra.mxu0 0.0
        %986 = vmatprep.subr.mxu0 0.0
        %987 = vmatpush1.xpose.msra.mxu0 0.0
        %988 = vmatprep.subr.mxu0 0.0
        %989 = vmatpush1.xpose.msra.mxu0 0.0
        %990 = vmatprep.subr.mxu0 0.0
        %991 = vmatpush1.xpose.msra.mxu0 0.0
        %992 = vmatprep.subr.mxu0 0.0
        %993 = vmatpush1.xpose.msra.mxu0 0.0
        %994 = vmatprep.subr.mxu0 0.0
        %995 = vmatpush1.xpose.msra.mxu0 0.0
        %996 = vmatprep.subr.mxu0 0.0
        %997 = vmatpush1.xpose.msra.mxu0 0.0
        %998 = vmatprep.subr.mxu0 0.0
        %999 = vmatpush1.xpose.msra.mxu0 0.0
        %1000 = vmatprep.subr.mxu0 0.0
        %1001 = vmatpush1.xpose.msra.mxu0 0.0
        %1002 = vmatprep.subr.mxu0 0.0
        %1003 = vmatpush1.xpose.msra.mxu0 0.0
        %1004 = vmatprep.subr.mxu0 0.0
        %1005 = vmatpush1.xpose.msra.mxu0 0.0
        %1006 = vmatprep.subr.mxu0 0.0
        %1007 = vmatpush1.xpose.msra.mxu0 0.0
        %1008 = vmatprep.subr.mxu0 0.0
        %1009 = vmatpush1.xpose.msra.mxu0 0.0
        %1010 = vmatprep.subr.mxu0 0.0
        %1011 = vmatpush1.xpose.msra.mxu0 0.0
        %1012 = vmatprep.subr.mxu0 0.0
        %1013 = vmatpush1.xpose.msra.mxu0 0.0
        %1014 = vmatprep.subr.mxu0 0.0
        %1015 = vmatpush1.xpose.msra.mxu0 0.0
        %1016 = vmatprep.subr.mxu0 0.0
        %1017 = vmatpush1.xpose.msra.mxu0 0.0
        %1018 = vmatprep.subr.mxu0 0.0
        %1019 = vmatpush1.xpose.msra.mxu0 0.0
        %1020 = vmatprep.subr.mxu0 0.0
        %1021 = vmatpush1.xpose.msra.mxu0 0.0
        %1022 = vmatprep.subr.mxu0 0.0
        %1023 = vmatpush1.xpose.msra.mxu0 0.0
        %1024 = vmatprep.subr.mxu0 0.0
        %1025 = vmatpush1.xpose.msra.mxu0 0.0
        %1026 = vmatprep.mubr.f32.mxu0 0.0
        %1027 = vmatmul.mubr.f32.gmra.mrb[0].mxu0 %v958
        %v1028 = vpop.f32.mrb[0].mxu0
        %v1029 = vadd.f32 %v448, %v1028
        %v1030 = vpop.f32.mrb[0].mxu0
        %1031 = vdwg.mxu0
        %v1032 = vsel %vm625, %v1029, -inf
        %1033 = vmax.xlane.f32.xlu0 %v1032
        %v1034 = vpop.xlane.xlu0 %1033
        %v1035 = vsub.f32 %v1029, %v1034
        %v1036 = vmul.f32 %v1035, 1.442695
        %v1037 = vpow.pop %v1036
        %v1038 = vsel %vm625, %v1037, 0.0
        %1039 = vadd.xlane.f32.xlu0 %v1038
        %v1040 = vpop.xlane.xlu0 %1039
        %v1041 = vrcp.pop %v1040
        %v1042 = vmul.f32 %v1037, %v1041
        %1043 = vrot.lane.b32.xlu0 %v622, 80
        %v1044 = vpop.permute.xlu0 %1043
        %v1047 = vsel %vm625, %v1042, 0
        %1049 = vmatprep.subr.mxu0 0.0
        %1050 = vmatpush1.msra.mxu0 %v1044
        %1051 = vmatprep.subr.mxu0 0.0
        %1052 = vmatpush1.msra.mxu0 0.0
        %1053 = vmatprep.subr.mxu0 0.0
        %1054 = vmatpush1.msra.mxu0 0.0
        %1055 = vmatprep.subr.mxu0 0.0
        %1056 = vmatpush1.msra.mxu0 0.0
        %1057 = vmatprep.subr.mxu0 0.0
        %1058 = vmatpush1.msra.mxu0 0.0
        %1059 = vmatprep.subr.mxu0 0.0
        %1060 = vmatpush1.msra.mxu0 0.0
        %1061 = vmatprep.subr.mxu0 0.0
        %1062 = vmatpush1.msra.mxu0 0.0
        %1063 = vmatprep.subr.mxu0 0.0
        %1064 = vmatpush1.msra.mxu0 0.0
        %1065 = vmatprep.subr.mxu0 0.0
        %1066 = vmatpush1.msra.mxu0 0.0
        %1067 = vmatprep.subr.mxu0 0.0
        %1068 = vmatpush1.msra.mxu0 0.0
        %1069 = vmatprep.subr.mxu0 0.0
        %1070 = vmatpush1.msra.mxu0 0.0
        %1071 = vmatprep.subr.mxu0 0.0
        %1072 = vmatpush1.msra.mxu0 0.0
        %1073 = vmatprep.subr.mxu0 0.0
        %1074 = vmatpush1.msra.mxu0 0.0
        %1075 = vmatprep.subr.mxu0 0.0
        %1076 = vmatpush1.msra.mxu0 0.0
        %1077 = vmatprep.subr.mxu0 0.0
        %1078 = vmatpush1.msra.mxu0 0.0
        %1079 = vmatprep.subr.mxu0 0.0
        %1080 = vmatpush1.msra.mxu0 0.0
        %1081 = vmatprep.subr.mxu0 0.0
        %1082 = vmatpush1.msra.mxu0 0.0
        %1083 = vmatprep.subr.mxu0 0.0
        %1084 = vmatpush1.msra.mxu0 0.0
        %1085 = vmatprep.subr.mxu0 0.0
        %1086 = vmatpush1.msra.mxu0 0.0
        %1087 = vmatprep.subr.mxu0 0.0
        %1088 = vmatpush1.msra.mxu0 0.0
        %1089 = vmatprep.subr.mxu0 0.0
        %1090 = vmatpush1.msra.mxu0 0.0
        %1091 = vmatprep.subr.mxu0 0.0
        %1092 = vmatpush1.msra.mxu0 0.0
        %1093 = vmatprep.subr.mxu0 0.0
        %1094 = vmatpush1.msra.mxu0 0.0
        %1095 = vmatprep.subr.mxu0 0.0
        %1096 = vmatpush1.msra.mxu0 0.0
        %1097 = vmatprep.subr.mxu0 0.0
        %1098 = vmatpush1.msra.mxu0 0.0
        %1099 = vmatprep.subr.mxu0 0.0
        %1100 = vmatpush1.msra.mxu0 0.0
        %1101 = vmatprep.subr.mxu0 0.0
        %1102 = vmatpush1.msra.mxu0 0.0
        %1103 = vmatprep.subr.mxu0 0.0
        %1104 = vmatpush1.msra.mxu0 0.0
        %1105 = vmatprep.subr.mxu0 0.0
        %1106 = vmatpush1.msra.mxu0 0.0
        %1107 = vmatprep.subr.mxu0 0.0
        %1108 = vmatpush1.msra.mxu0 0.0
        %1109 = vmatprep.subr.mxu0 0.0
        %1110 = vmatpush1.msra.mxu0 0.0
        %1111 = vmatprep.subr.mxu0 0.0
        %1112 = vmatpush1.msra.mxu0 0.0
        %1113 = vmatprep.mubr.f32.mxu0 0.0
        %1114 = vmatmul.mubr.f32.gmra.mrb[0].mxu0 %v1047
        %v1115 = vpop.f32.mrb[0].mxu0
        %v1116 = vadd.f32 0.0, %v1115
        %v1117 = vpop.f32.mrb[0].mxu0
        %1118 = vdwg.mxu0
        %1119 = vrot.lane.b32.xlu0 %v532, 104
        %v1120 = vpop.permute.xlu0 %1119
        %1121 = vrot.lane.b32.xlu0 %v622, 104
        %v1122 = vpop.permute.xlu0 %1121
        %v1123 = vsel %vm625, %v1120, 0
        %v1125 = vsel %vm625, %v1122, 0
        %1127 = vmatprep.subr.mxu0 0.0
        %1128 = vmatpush1.xpose.msra.mxu0 %v1125
        %1129 = vmatprep.subr.mxu0 0.0
        %1130 = vmatpush1.xpose.msra.mxu0 0.0
        %1131 = vmatprep.subr.mxu0 0.0
        %1132 = vmatpush1.xpose.msra.mxu0 0.0
        %1133 = vmatprep.subr.mxu0 0.0
        %1134 = vmatpush1.xpose.msra.mxu0 0.0
        %1135 = vmatprep.subr.mxu0 0.0
        %1136 = vmatpush1.xpose.msra.mxu0 0.0
        %1137 = vmatprep.subr.mxu0 0.0
        %1138 = vmatpush1.xpose.msra.mxu0 0.0
        %1139 = vmatprep.subr.mxu0 0.0
        %1140 = vmatpush1.xpose.msra.mxu0 0.0
        %1141 = vmatprep.subr.mxu0 0.0
        %1142 = vmatpush1.xpose.msra.mxu0 0.0
        %1143 = vmatprep.subr.mxu0 0.0
        %1144 = vmatpush1.xpose.msra.mxu0 0.0
        %1145 = vmatprep.subr.mxu0 0.0
        %1146 = vmatpush1.xpose.msra.mxu0 0.0
        %1147 = vmatprep.subr.mxu0 0.0
        %1148 = vmatpush1.xpose.msra.mxu0 0.0
        %1149 = vmatprep.subr.mxu0 0.0
        %1150 = vmatpush1.xpose.msra.mxu0 0.0
        %1151 = vmatprep.subr.mxu0 0.0
        %1152 = vmatpush1.xpose.msra.mxu0 0.0
        %1153 = vmatprep.subr.mxu0 0.0
        %1154 = vmatpush1.xpose.msra.mxu0 0.0
        %1155 = vmatprep.subr.mxu0 0.0
        %1156 = vmatpush1.xpose.msra.mxu0 0.0
        %1157 = vmatprep.subr.mxu0 0.0
        %1158 = vmatpush1.xpose.msra.mxu0 0.0
        %1159 = vmatprep.subr.mxu0 0.0
        %1160 = vmatpush1.xpose.msra.mxu0 0.0
        %1161 = vmatprep.subr.mxu0 0.0
        %1162 = vmatpush1.xpose.msra.mxu0 0.0
        %1163 = vmatprep.subr.mxu0 0.0
        %1164 = vmatpush1.xpose.msra.mxu0 0.0
        %1165 = vmatprep.subr.mxu0 0.0
        %1166 = vmatpush1.xpose.msra.mxu0 0.0
        %1167 = vmatprep.subr.mxu0 0.0
        %1168 = vmatpush1.xpose.msra.mxu0 0.0
        %1169 = vmatprep.subr.mxu0 0.0
        %1170 = vmatpush1.xpose.msra.mxu0 0.0
        %1171 = vmatprep.subr.mxu0 0.0
        %1172 = vmatpush1.xpose.msra.mxu0 0.0
        %1173 = vmatprep.subr.mxu0 0.0
        %1174 = vmatpush1.xpose.msra.mxu0 0.0
        %1175 = vmatprep.subr.mxu0 0.0
        %1176 = vmatpush1.xpose.msra.mxu0 0.0
        %1177 = vmatprep.subr.mxu0 0.0
        %1178 = vmatpush1.xpose.msra.mxu0 0.0
        %1179 = vmatprep.subr.mxu0 0.0
        %1180 = vmatpush1.xpose.msra.mxu0 0.0
        %1181 = vmatprep.subr.mxu0 0.0
        %1182 = vmatpush1.xpose.msra.mxu0 0.0
        %1183 = vmatprep.subr.mxu0 0.0
        %1184 = vmatpush1.xpose.msra.mxu0 0.0
        %1185 = vmatprep.subr.mxu0 0.0
        %1186 = vmatpush1.xpose.msra.mxu0 0.0
        %1187 = vmatprep.subr.mxu0 0.0
        %1188 = vmatpush1.xpose.msra.mxu0 0.0
        %1189 = vmatprep.subr.mxu0 0.0
        %1190 = vmatpush1.xpose.msra.mxu0 0.0
        %1191 = vmatprep.mubr.f32.mxu0 0.0
        %1192 = vmatmul.mubr.f32.gmra.mrb[0].mxu0 %v1123
        %v1193 = vpop.f32.mrb[0].mxu0
        %v1194 = vadd.f32 %v448, %v1193
        %v1195 = vpop.f32.mrb[0].mxu0
        %1196 = vdwg.mxu0
        %v1197 = vsel %vm625, %v1194, -inf
        %1198 = vmax.xlane.f32.xlu0 %v1197
        %v1199 = vpop.xlane.xlu0 %1198
        %v1200 = vsub.f32 %v1194, %v1199
        %v1201 = vmul.f32 %v1200, 1.442695
        %v1202 = vpow.pop %v1201
        %v1203 = vsel %vm625, %v1202, 0.0
        %1204 = vadd.xlane.f32.xlu0 %v1203
        %v1205 = vpop.xlane.xlu0 %1204
        %v1206 = vrcp.pop %v1205
        %v1207 = vmul.f32 %v1202, %v1206
        %1208 = vrot.lane.b32.xlu0 %v622, 72
        %v1209 = vpop.permute.xlu0 %1208
        %v1212 = vsel %vm625, %v1207, 0
        %1214 = vmatprep.subr.mxu0 0.0
        %1215 = vmatpush1.msra.mxu0 %v1209
        %1216 = vmatprep.subr.mxu0 0.0
        %1217 = vmatpush1.msra.mxu0 0.0
        %1218 = vmatprep.subr.mxu0 0.0
        %1219 = vmatpush1.msra.mxu0 0.0
        %1220 = vmatprep.subr.mxu0 0.0
        %1221 = vmatpush1.msra.mxu0 0.0
        %1222 = vmatprep.subr.mxu0 0.0
        %1223 = vmatpush1.msra.mxu0 0.0
        %1224 = vmatprep.subr.mxu0 0.0
        %1225 = vmatpush1.msra.mxu0 0.0
        %1226 = vmatprep.subr.mxu0 0.0
        %1227 = vmatpush1.msra.mxu0 0.0
        %1228 = vmatprep.subr.mxu0 0.0
        %1229 = vmatpush1.msra.mxu0 0.0
        %1230 = vmatprep.subr.mxu0 0.0
        %1231 = vmatpush1.msra.mxu0 0.0
        %1232 = vmatprep.subr.mxu0 0.0
        %1233 = vmatpush1.msra.mxu0 0.0
        %1234 = vmatprep.subr.mxu0 0.0
        %1235 = vmatpush1.msra.mxu0 0.0
        %1236 = vmatprep.subr.mxu0 0.0
        %1237 = vmatpush1.msra.mxu0 0.0
        %1238 = vmatprep.subr.mxu0 0.0
        %1239 = vmatpush1.msra.mxu0 0.0
        %1240 = vmatprep.subr.mxu0 0.0
        %1241 = vmatpush1.msra.mxu0 0.0
        %1242 = vmatprep.subr.mxu0 0.0
        %1243 = vmatpush1.msra.mxu0 0.0
        %1244 = vmatprep.subr.mxu0 0.0
        %1245 = vmatpush1.msra.mxu0 0.0
        %1246 = vmatprep.subr.mxu0 0.0
        %1247 = vmatpush1.msra.mxu0 0.0
        %1248 = vmatprep.subr.mxu0 0.0
        %1249 = vmatpush1.msra.mxu0 0.0
        %1250 = vmatprep.subr.mxu0 0.0
        %1251 = vmatpush1.msra.mxu0 0.0
        %1252 = vmatprep.subr.mxu0 0.0
        %1253 = vmatpush1.msra.mxu0 0.0
        %1254 = vmatprep.subr.mxu0 0.0
        %1255 = vmatpush1.msra.mxu0 0.0
        %1256 = vmatprep.subr.mxu0 0.0
        %1257 = vmatpush1.msra.mxu0 0.0
        %1258 = vmatprep.subr.mxu0 0.0
        %1259 = vmatpush1.msra.mxu0 0.0
        %1260 = vmatprep.subr.mxu0 0.0
        %1261 = vmatpush1.msra.mxu0 0.0
        %1262 = vmatprep.subr.mxu0 0.0
        %1263 = vmatpush1.msra.mxu0 0.0
        %1264 = vmatprep.subr.mxu0 0.0
        %1265 = vmatpush1.msra.mxu0 0.0
        %1266 = vmatprep.subr.mxu0 0.0
        %1267 = vmatpush1.msra.mxu0 0.0
        %1268 = vmatprep.subr.mxu0 0.0
        %1269 = vmatpush1.msra.mxu0 0.0
        %1270 = vmatprep.subr.mxu0 0.0
        %1271 = vmatpush1.msra.mxu0 0.0
        %1272 = vmatprep.subr.mxu0 0.0
        %1273 = vmatpush1.msra.mxu0 0.0
        %1274 = vmatprep.subr.mxu0 0.0
        %1275 = vmatpush1.msra.mxu0 0.0
        %1276 = vmatprep.subr.mxu0 0.0
        %1277 = vmatpush1.msra.mxu0 0.0
        %1278 = vmatprep.mubr.f32.mxu0 0.0
        %1279 = vmatmul.mubr.f32.gmra.mrb[0].mxu0 %v1212
        %v1280 = vpop.f32.mrb[0].mxu0
        %v1281 = vadd.f32 0.0, %v1280
        %v1282 = vpop.f32.mrb[0].mxu0
        %1283 = vdwg.mxu0
        %1285 = vrot.lane.b32.xlu0 %v951, 8
        %v1286 = vpop.permute.xlu0 %1285
        %1289 = vrot.lane.b32.xlu0 %v1116, 16
        %v1290 = vpop.permute.xlu0 %1289
        %1293 = vrot.lane.b32.xlu0 %v1281, 24
        %v1294 = vpop.permute.xlu0 %1293
        %v1296 = vsel %vm625, %v786, %v1286
        %vm1297 = vcmask 130048
        %v1298 = vsel %vm1297, %v1296, %v1290
        %vm1299 = vcmask 195584
        %v1300 = vsel %vm1299, %v1298, %v1294
        %1301 = vrot.lane.b32.xlu0 %v453, 32
        %v1302 = vpop.permute.xlu0 %1301
        %1303 = vrot.lane.b32.xlu0 %v454, 32
        %v1304 = vpop.permute.xlu0 %1303
        %1305 = vrot.lane.b32.xlu0 %v455, 32
        %v1306 = vpop.permute.xlu0 %1305
        %1307 = vrot.lane.b32.xlu0 %v456, 32
        %v1308 = vpop.permute.xlu0 %1307
        %1313 = vrot.lane.b32.xlu0 %v460, 32
        %v1314 = vpop.permute.xlu0 %1313
        %v1317 = vsel %vm461, %v1300, 0
        %1319 = vmatprep.subr.mxu0 0.0
        %1320 = vmatpush1.msra.mxu0 %v1302
        %1321 = vmatprep.subr.mxu0 0.0
        %1322 = vmatpush1.msra.mxu0 %v1304
        %1323 = vmatprep.subr.mxu0 0.0
        %1324 = vmatpush1.msra.mxu0 %v1306
        %1325 = vmatprep.subr.mxu0 0.0
        %1326 = vmatpush1.msra.mxu0 %v1308
        %1327 = vmatprep.subr.mxu0 0.0
        %1328 = vmatpush1.msra.mxu0 0.0
        %1329 = vmatprep.subr.mxu0 0.0
        %1330 = vmatpush1.msra.mxu0 0.0
        %1331 = vmatprep.subr.mxu0 0.0
        %1332 = vmatpush1.msra.mxu0 0.0
        %1333 = vmatprep.subr.mxu0 0.0
        %1334 = vmatpush1.msra.mxu0 0.0
        %1335 = vmatprep.subr.mxu0 0.0
        %1336 = vmatpush1.msra.mxu0 0.0
        %1337 = vmatprep.subr.mxu0 0.0
        %1338 = vmatpush1.msra.mxu0 0.0
        %1339 = vmatprep.subr.mxu0 0.0
        %1340 = vmatpush1.msra.mxu0 0.0
        %1341 = vmatprep.subr.mxu0 0.0
        %1342 = vmatpush1.msra.mxu0 0.0
        %1343 = vmatprep.subr.mxu0 0.0
        %1344 = vmatpush1.msra.mxu0 0.0
        %1345 = vmatprep.subr.mxu0 0.0
        %1346 = vmatpush1.msra.mxu0 0.0
        %1347 = vmatprep.subr.mxu0 0.0
        %1348 = vmatpush1.msra.mxu0 0.0
        %1349 = vmatprep.subr.mxu0 0.0
        %1350 = vmatpush1.msra.mxu0 0.0
        %1351 = vmatprep.subr.mxu0 0.0
        %1352 = vmatpush1.msra.mxu0 0.0
        %1353 = vmatprep.subr.mxu0 0.0
        %1354 = vmatpush1.msra.mxu0 0.0
        %1355 = vmatprep.subr.mxu0 0.0
        %1356 = vmatpush1.msra.mxu0 0.0
        %1357 = vmatprep.subr.mxu0 0.0
        %1358 = vmatpush1.msra.mxu0 0.0
        %1359 = vmatprep.subr.mxu0 0.0
        %1360 = vmatpush1.msra.mxu0 0.0
        %1361 = vmatprep.subr.mxu0 0.0
        %1362 = vmatpush1.msra.mxu0 0.0
        %1363 = vmatprep.subr.mxu0 0.0
        %1364 = vmatpush1.msra.mxu0 0.0
        %1365 = vmatprep.subr.mxu0 0.0
        %1366 = vmatpush1.msra.mxu0 0.0
        %1367 = vmatprep.subr.mxu0 0.0
        %1368 = vmatpush1.msra.mxu0 0.0
        %1369 = vmatprep.subr.mxu0 0.0
        %1370 = vmatpush1.msra.mxu0 0.0
        %1371 = vmatprep.subr.mxu0 0.0
        %1372 = vmatpush1.msra.mxu0 0.0
        %1373 = vmatprep.subr.mxu0 0.0
        %1374 = vmatpush1.msra.mxu0 0.0
        %1375 = vmatprep.subr.mxu0 0.0
        %1376 = vmatpush1.msra.mxu0 0.0
        %1377 = vmatprep.subr.mxu0 0.0
        %1378 = vmatpush1.msra.mxu0 0.0
        %1379 = vmatprep.subr.mxu0 0.0
        %1380 = vmatpush1.msra.mxu0 0.0
        %1381 = vmatprep.subr.mxu0 0.0
        %1382 = vmatpush1.msra.mxu0 0.0
        %1383 = vmatprep.mubr.f32.mxu0 0.0
        %1384 = vmatmul.mubr.f32.gmra.mrb[0].mxu0 %v1317
        %v1385 = vpop.f32.mrb[0].mxu0
        %v1386 = vadd.f32 %v1314, %v1385
        %v1387 = vpop.f32.mrb[0].mxu0
        %1388 = vdwg.mxu0
        %v1389 = vadd.f32 %v444, %v1386
        %v1390 = vsel %vm461, %v1389, 0.0
        %1391 = vadd.xlane.f32.xlu0 %v1390
        %v1392 = vpop.xlane.xlu0 %1391
        %v1393 = vrcp.pop 32.0
        %v1394 = vmul.f32 %v1392, %v1393
        %v1395 = vsub.f32 %v1389, %v1394
        %v1396 = vmul.f32 %v1395, %v1395
        %v1397 = vsel %vm461, %v1396, 0.0
        %1398 = vadd.xlane.f32.xlu0 %v1397
        %v1399 = vpop.xlane.xlu0 %1398
        %v1400 = vmul.f32 %v1399, %v1393
        %v1401 = vadd.f32 %v1400, 1e-05
        %v1402 = vrsqrt.pop %v1401
        %v1403 = vmul.f32 %v1395, %v1402
        %v1404 = vlaneseq
        %v1405 = vshrl.u32 %v1404, 7
        %v1406 = vsub.s32 2, %v1405
        %v1407 = vrot.slane %v452, %v1406
        %v1408 = vmul.f32 %v1403, %v1407
        %1410 = vrot.lane.b32.xlu0 %v1407, 96
        %v1411 = vpop.permute.xlu0 %1410
        %v1413 = vadd.f32 %v1408, %v1411
        %s1414 = scalar_lea.vmem %s4, 32
        %v1415 = vld [vmem:[%s1414] sm:$0xff]
        %v1416 = vld [vmem:[%s1414 + $0x8] sm:$0xff]
        %v1417 = vld [vmem:[%s1414 + $0x10] sm:$0xff]
        %v1418 = vld [vmem:[%s1414 + $0x18] sm:$0xff]
        %v1419 = vlaneseq
        %v1420 = vshrl.u32 %v1419, 7
        %v1421 = vsub.s32 1, %v1420
        %v1422 = vrot.slane %v452, %v1421
        %v1424 = vsel %vm461, %v1413, 0
        %1426 = vmatprep.subr.mxu0 0.0
        %1427 = vmatpush1.msra.mxu0 %v1415
        %1428 = vmatprep.subr.mxu0 0.0
        %1429 = vmatpush1.msra.mxu0 %v1416
        %1430 = vmatprep.subr.mxu0 0.0
        %1431 = vmatpush1.msra.mxu0 %v1417
        %1432 = vmatprep.subr.mxu0 0.0
        %1433 = vmatpush1.msra.mxu0 %v1418
        %1434 = vmatprep.subr.mxu0 0.0
        %1435 = vmatpush1.msra.mxu0 0.0
        %1436 = vmatprep.subr.mxu0 0.0
        %1437 = vmatpush1.msra.mxu0 0.0
        %1438 = vmatprep.subr.mxu0 0.0
        %1439 = vmatpush1.msra.mxu0 0.0
        %1440 = vmatprep.subr.mxu0 0.0
        %1441 = vmatpush1.msra.mxu0 0.0
        %1442 = vmatprep.subr.mxu0 0.0
        %1443 = vmatpush1.msra.mxu0 0.0
        %1444 = vmatprep.subr.mxu0 0.0
        %1445 = vmatpush1.msra.mxu0 0.0
        %1446 = vmatprep.subr.mxu0 0.0
        %1447 = vmatpush1.msra.mxu0 0.0
        %1448 = vmatprep.subr.mxu0 0.0
        %1449 = vmatpush1.msra.mxu0 0.0
        %1450 = vmatprep.subr.mxu0 0.0
        %1451 = vmatpush1.msra.mxu0 0.0
        %1452 = vmatprep.subr.mxu0 0.0
        %1453 = vmatpush1.msra.mxu0 0.0
        %1454 = vmatprep.subr.mxu0 0.0
        %1455 = vmatpush1.msra.mxu0 0.0
        %1456 = vmatprep.subr.mxu0 0.0
        %1457 = vmatpush1.msra.mxu0 0.0
        %1458 = vmatprep.subr.mxu0 0.0
        %1459 = vmatpush1.msra.mxu0 0.0
        %1460 = vmatprep.subr.mxu0 0.0
        %1461 = vmatpush1.msra.mxu0 0.0
        %1462 = vmatprep.subr.mxu0 0.0
        %1463 = vmatpush1.msra.mxu0 0.0
        %1464 = vmatprep.subr.mxu0 0.0
        %1465 = vmatpush1.msra.mxu0 0.0
        %1466 = vmatprep.subr.mxu0 0.0
        %1467 = vmatpush1.msra.mxu0 0.0
        %1468 = vmatprep.subr.mxu0 0.0
        %1469 = vmatpush1.msra.mxu0 0.0
        %1470 = vmatprep.subr.mxu0 0.0
        %1471 = vmatpush1.msra.mxu0 0.0
        %1472 = vmatprep.subr.mxu0 0.0
        %1473 = vmatpush1.msra.mxu0 0.0
        %1474 = vmatprep.subr.mxu0 0.0
        %1475 = vmatpush1.msra.mxu0 0.0
        %1476 = vmatprep.subr.mxu0 0.0
        %1477 = vmatpush1.msra.mxu0 0.0
        %1478 = vmatprep.subr.mxu0 0.0
        %1479 = vmatpush1.msra.mxu0 0.0
        %1480 = vmatprep.subr.mxu0 0.0
        %1481 = vmatpush1.msra.mxu0 0.0
        %1482 = vmatprep.subr.mxu0 0.0
        %1483 = vmatpush1.msra.mxu0 0.0
        %1484 = vmatprep.subr.mxu0 0.0
        %1485 = vmatpush1.msra.mxu0 0.0
        %1486 = vmatprep.subr.mxu0 0.0
        %1487 = vmatpush1.msra.mxu0 0.0
        %1488 = vmatprep.subr.mxu0 0.0
        %1489 = vmatpush1.msra.mxu0 0.0
        %1490 = vmatprep.mubr.f32.mxu0 0.0
        %1491 = vmatmul.mubr.f32.gmra.mrb[0].mxu0 %v1424
        %v1492 = vpop.f32.mrb[0].mxu0
        %v1493 = vadd.f32 %v1422, %v1492
        %v1494 = vpop.f32.mrb[0].mxu0
        %1495 = vdwg.mxu0
        %1500 = vrot.lane.b32.xlu0 %v1415, 96
        %v1501 = vpop.permute.xlu0 %1500
        %1502 = vrot.lane.b32.xlu0 %v1416, 96
        %v1503 = vpop.permute.xlu0 %1502
        %1504 = vrot.lane.b32.xlu0 %v1417, 96
        %v1505 = vpop.permute.xlu0 %1504
        %1506 = vrot.lane.b32.xlu0 %v1418, 96
        %v1507 = vpop.permute.xlu0 %1506
        %1513 = vrot.lane.b32.xlu0 %v1422, 96
        %v1514 = vpop.permute.xlu0 %1513
        %v1517 = vsel %vm461, %v445, 0
        %1519 = vmatprep.subr.mxu0 0.0
        %1520 = vmatpush1.msra.mxu0 %v1501
        %1521 = vmatprep.subr.mxu0 0.0
        %1522 = vmatpush1.msra.mxu0 %v1503
        %1523 = vmatprep.subr.mxu0 0.0
        %1524 = vmatpush1.msra.mxu0 %v1505
        %1525 = vmatprep.subr.mxu0 0.0
        %1526 = vmatpush1.msra.mxu0 %v1507
        %1527 = vmatprep.subr.mxu0 0.0
        %1528 = vmatpush1.msra.mxu0 0.0
        %1529 = vmatprep.subr.mxu0 0.0
        %1530 = vmatpush1.msra.mxu0 0.0
        %1531 = vmatprep.subr.mxu0 0.0
        %1532 = vmatpush1.msra.mxu0 0.0
        %1533 = vmatprep.subr.mxu0 0.0
        %1534 = vmatpush1.msra.mxu0 0.0
        %1535 = vmatprep.subr.mxu0 0.0
        %1536 = vmatpush1.msra.mxu0 0.0
        %1537 = vmatprep.subr.mxu0 0.0
        %1538 = vmatpush1.msra.mxu0 0.0
        %1539 = vmatprep.subr.mxu0 0.0
        %1540 = vmatpush1.msra.mxu0 0.0
        %1541 = vmatprep.subr.mxu0 0.0
        %1542 = vmatpush1.msra.mxu0 0.0
        %1543 = vmatprep.subr.mxu0 0.0
        %1544 = vmatpush1.msra.mxu0 0.0
        %1545 = vmatprep.subr.mxu0 0.0
        %1546 = vmatpush1.msra.mxu0 0.0
        %1547 = vmatprep.subr.mxu0 0.0
        %1548 = vmatpush1.msra.mxu0 0.0
        %1549 = vmatprep.subr.mxu0 0.0
        %1550 = vmatpush1.msra.mxu0 0.0
        %1551 = vmatprep.subr.mxu0 0.0
        %1552 = vmatpush1.msra.mxu0 0.0
        %1553 = vmatprep.subr.mxu0 0.0
        %1554 = vmatpush1.msra.mxu0 0.0
        %1555 = vmatprep.subr.mxu0 0.0
        %1556 = vmatpush1.msra.mxu0 0.0
        %1557 = vmatprep.subr.mxu0 0.0
        %1558 = vmatpush1.msra.mxu0 0.0
        %1559 = vmatprep.subr.mxu0 0.0
        %1560 = vmatpush1.msra.mxu0 0.0
        %1561 = vmatprep.subr.mxu0 0.0
        %1562 = vmatpush1.msra.mxu0 0.0
        %1563 = vmatprep.subr.mxu0 0.0
        %1564 = vmatpush1.msra.mxu0 0.0
        %1565 = vmatprep.subr.mxu0 0.0
        %1566 = vmatpush1.msra.mxu0 0.0
        %1567 = vmatprep.subr.mxu0 0.0
        %1568 = vmatpush1.msra.mxu0 0.0
        %1569 = vmatprep.subr.mxu0 0.0
        %1570 = vmatpush1.msra.mxu0 0.0
        %1571 = vmatprep.subr.mxu0 0.0
        %1572 = vmatpush1.msra.mxu0 0.0
        %1573 = vmatprep.subr.mxu0 0.0
        %1574 = vmatpush1.msra.mxu0 0.0
        %1575 = vmatprep.subr.mxu0 0.0
        %1576 = vmatpush1.msra.mxu0 0.0
        %1577 = vmatprep.subr.mxu0 0.0
        %1578 = vmatpush1.msra.mxu0 0.0
        %1579 = vmatprep.subr.mxu0 0.0
        %1580 = vmatpush1.msra.mxu0 0.0
        %1581 = vmatprep.subr.mxu0 0.0
        %1582 = vmatpush1.msra.mxu0 0.0
        %1583 = vmatprep.mubr.f32.mxu0 0.0
        %1584 = vmatmul.mubr.f32.gmra.mrb[0].mxu0 %v1517
        %v1585 = vpop.f32.mrb[0].mxu0
        %v1586 = vadd.f32 %v1514, %v1585
        %v1587 = vpop.f32.mrb[0].mxu0
        %1588 = vdwg.mxu0
        %v1590 = vlaneseq
        %v1591 = vshrl.u32 %v1590, 7
        %v1592 = vsub.s32 0, %v1591
        %v1593 = vrot.slane %v451, %v1592
        %v1596 = vsel %vm625, %v1493, 0
        %v1599 = vsel %vm625, %v1586, 0
        %1601 = vmatprep.subr.mxu0 0.0
        %1602 = vmatpush1.xpose.msra.mxu0 %v1599
        %1603 = vmatprep.subr.mxu0 0.0
        %1604 = vmatpush1.xpose.msra.mxu0 0.0
        %1605 = vmatprep.subr.mxu0 0.0
        %1606 = vmatpush1.xpose.msra.mxu0 0.0
        %1607 = vmatprep.subr.mxu0 0.0
        %1608 = vmatpush1.xpose.msra.mxu0 0.0
        %1609 = vmatprep.subr.mxu0 0.0
        %1610 = vmatpush1.xpose.msra.mxu0 0.0
        %1611 = vmatprep.subr.mxu0 0.0
        %1612 = vmatpush1.xpose.msra.mxu0 0.0
        %1613 = vmatprep.subr.mxu0 0.0
        %1614 = vmatpush1.xpose.msra.mxu0 0.0
        %1615 = vmatprep.subr.mxu0 0.0
        %1616 = vmatpush1.xpose.msra.mxu0 0.0
        %1617 = vmatprep.subr.mxu0 0.0
        %1618 = vmatpush1.xpose.msra.mxu0 0.0
        %1619 = vmatprep.subr.mxu0 0.0
        %1620 = vmatpush1.xpose.msra.mxu0 0.0
        %1621 = vmatprep.subr.mxu0 0.0
        %1622 = vmatpush1.xpose.msra.mxu0 0.0
        %1623 = vmatprep.subr.mxu0 0.0
        %1624 = vmatpush1.xpose.msra.mxu0 0.0
        %1625 = vmatprep.subr.mxu0 0.0
        %1626 = vmatpush1.xpose.msra.mxu0 0.0
        %1627 = vmatprep.subr.mxu0 0.0
        %1628 = vmatpush1.xpose.msra.mxu0 0.0
        %1629 = vmatprep.subr.mxu0 0.0
        %1630 = vmatpush1.xpose.msra.mxu0 0.0
        %1631 = vmatprep.subr.mxu0 0.0
        %1632 = vmatpush1.xpose.msra.mxu0 0.0
        %1633 = vmatprep.subr.mxu0 0.0
        %1634 = vmatpush1.xpose.msra.mxu0 0.0
        %1635 = vmatprep.subr.mxu0 0.0
        %1636 = vmatpush1.xpose.msra.mxu0 0.0
        %1637 = vmatprep.subr.mxu0 0.0
        %1638 = vmatpush1.xpose.msra.mxu0 0.0
        %1639 = vmatprep.subr.mxu0 0.0
        %1640 = vmatpush1.xpose.msra.mxu0 0.0
        %1641 = vmatprep.subr.mxu0 0.0
        %1642 = vmatpush1.xpose.msra.mxu0 0.0
        %1643 = vmatprep.subr.mxu0 0.0
        %1644 = vmatpush1.xpose.msra.mxu0 0.0
        %1645 = vmatprep.subr.mxu0 0.0
        %1646 = vmatpush1.xpose.msra.mxu0 0.0
        %1647 = vmatprep.subr.mxu0 0.0
        %1648 = vmatpush1.xpose.msra.mxu0 0.0
        %1649 = vmatprep.subr.mxu0 0.0
        %1650 = vmatpush1.xpose.msra.mxu0 0.0
        %1651 = vmatprep.subr.mxu0 0.0
        %1652 = vmatpush1.xpose.msra.mxu0 0.0
        %1653 = vmatprep.subr.mxu0 0.0
        %1654 = vmatpush1.xpose.msra.mxu0 0.0
        %1655 = vmatprep.subr.mxu0 0.0
        %1656 = vmatpush1.xpose.msra.mxu0 0.0
        %1657 = vmatprep.subr.mxu0 0.0
        %1658 = vmatpush1.xpose.msra.mxu0 0.0
        %1659 = vmatprep.subr.mxu0 0.0
        %1660 = vmatpush1.xpose.msra.mxu0 0.0
        %1661 = vmatprep.subr.mxu0 0.0
        %1662 = vmatpush1.xpose.msra.mxu0 0.0
        %1663 = vmatprep.subr.mxu0 0.0
        %1664 = vmatpush1.xpose.msra.mxu0 0.0
        %1665 = vmatprep.mubr.f32.mxu0 0.0
        %1666 = vmatmul.mubr.f32.gmra.mrb[0].mxu0 %v1596
        %v1667 = vpop.f32.mrb[0].mxu0
        %v1668 = vadd.f32 %v1593, %v1667
        %v1669 = vpop.f32.mrb[0].mxu0
        %1670 = vdwg.mxu0
        %v1671 = vsel %vm625, %v1668, -inf
        %1672 = vmax.xlane.f32.xlu0 %v1671
        %v1673 = vpop.xlane.xlu0 %1672
        %v1674 = vsub.f32 %v1668, %v1673
        %v1675 = vmul.f32 %v1674, 1.442695
        %v1676 = vpow.pop %v1675
        %v1677 = vsel %vm625, %v1676, 0.0
        %1678 = vadd.xlane.f32.xlu0 %v1677
        %v1679 = vpop.xlane.xlu0 %1678
        %v1680 = vrcp.pop %v1679
        %v1681 = vmul.f32 %v1676, %v1680
        %1682 = vrot.lane.b32.xlu0 %v1586, 96
        %v1683 = vpop.permute.xlu0 %1682
        %v1686 = vsel %vm625, %v1681, 0
        %1688 = vmatprep.subr.mxu0 0.0
        %1689 = vmatpush1.msra.mxu0 %v1683
        %1690 = vmatprep.subr.mxu0 0.0
        %1691 = vmatpush1.msra.mxu0 0.0
        %1692 = vmatprep.subr.mxu0 0.0
        %1693 = vmatpush1.msra.mxu0 0.0
        %1694 = vmatprep.subr.mxu0 0.0
        %1695 = vmatpush1.msra.mxu0 0.0
        %1696 = vmatprep.subr.mxu0 0.0
        %1697 = vmatpush1.msra.mxu0 0.0
        %1698 = vmatprep.subr.mxu0 0.0
        %1699 = vmatpush1.msra.mxu0 0.0
        %1700 = vmatprep.subr.mxu0 0.0
        %1701 = vmatpush1.msra.mxu0 0.0
        %1702 = vmatprep.subr.mxu0 0.0
        %1703 = vmatpush1.msra.mxu0 0.0
        %1704 = vmatprep.subr.mxu0 0.0
        %1705 = vmatpush1.msra.mxu0 0.0
        %1706 = vmatprep.subr.mxu0 0.0
        %1707 = vmatpush1.msra.mxu0 0.0
        %1708 = vmatprep.subr.mxu0 0.0
        %1709 = vmatpush1.msra.mxu0 0.0
        %1710 = vmatprep.subr.mxu0 0.0
        %1711 = vmatpush1.msra.mxu0 0.0
        %1712 = vmatprep.subr.mxu0 0.0
        %1713 = vmatpush1.msra.mxu0 0.0
        %1714 = vmatprep.subr.mxu0 0.0
        %1715 = vmatpush1.msra.mxu0 0.0
        %1716 = vmatprep.subr.mxu0 0.0
        %1717 = vmatpush1.msra.mxu0 0.0
        %1718 = vmatprep.subr.mxu0 0.0
        %1719 = vmatpush1.msra.mxu0 0.0
        %1720 = vmatprep.subr.mxu0 0.0
        %1721 = vmatpush1.msra.mxu0 0.0
        %1722 = vmatprep.subr.mxu0 0.0
        %1723 = vmatpush1.msra.mxu0 0.0
        %1724 = vmatprep.subr.mxu0 0.0
        %1725 = vmatpush1.msra.mxu0 0.0
        %1726 = vmatprep.subr.mxu0 0.0
        %1727 = vmatpush1.msra.mxu0 0.0
        %1728 = vmatprep.subr.mxu0 0.0
        %1729 = vmatpush1.msra.mxu0 0.0
        %1730 = vmatprep.subr.mxu0 0.0
        %1731 = vmatpush1.msra.mxu0 0.0
        %1732 = vmatprep.subr.mxu0 0.0
        %1733 = vmatpush1.msra.mxu0 0.0
        %1734 = vmatprep.subr.mxu0 0.0
        %1735 = vmatpush1.msra.mxu0 0.0
        %1736 = vmatprep.subr.mxu0 0.0
        %1737 = vmatpush1.msra.mxu0 0.0
        %1738 = vmatprep.subr.mxu0 0.0
        %1739 = vmatpush1.msra.mxu0 0.0
        %1740 = vmatprep.subr.mxu0 0.0
        %1741 = vmatpush1.msra.mxu0 0.0
        %1742 = vmatprep.subr.mxu0 0.0
        %1743 = vmatpush1.msra.mxu0 0.0
        %1744 = vmatprep.subr.mxu0 0.0
        %1745 = vmatpush1.msra.mxu0 0.0
        %1746 = vmatprep.subr.mxu0 0.0
        %1747 = vmatpush1.msra.mxu0 0.0
        %1748 = vmatprep.subr.mxu0 0.0
        %1749 = vmatpush1.msra.mxu0 0.0
        %1750 = vmatprep.subr.mxu0 0.0
        %1751 = vmatpush1.msra.mxu0 0.0
        %1752 = vmatprep.mubr.f32.mxu0 0.0
        %1753 = vmatmul.mubr.f32.gmra.mrb[0].mxu0 %v1686
        %v1754 = vpop.f32.mrb[0].mxu0
        %v1755 = vadd.f32 0.0, %v1754
        %v1756 = vpop.f32.mrb[0].mxu0
        %1757 = vdwg.mxu0
        %1758 = vrot.lane.b32.xlu0 %v1493, 120
        %v1759 = vpop.permute.xlu0 %1758
        %1760 = vrot.lane.b32.xlu0 %v1586, 120
        %v1761 = vpop.permute.xlu0 %1760
        %v1762 = vsel %vm625, %v1759, 0
        %v1764 = vsel %vm625, %v1761, 0
        %1766 = vmatprep.subr.mxu0 0.0
        %1767 = vmatpush1.xpose.msra.mxu0 %v1764
        %1768 = vmatprep.subr.mxu0 0.0
        %1769 = vmatpush1.xpose.msra.mxu0 0.0
        %1770 = vmatprep.subr.mxu0 0.0
        %1771 = vmatpush1.xpose.msra.mxu0 0.0
        %1772 = vmatprep.subr.mxu0 0.0
        %1773 = vmatpush1.xpose.msra.mxu0 0.0
        %1774 = vmatprep.subr.mxu0 0.0
        %1775 = vmatpush1.xpose.msra.mxu0 0.0
        %1776 = vmatprep.subr.mxu0 0.0
        %1777 = vmatpush1.xpose.msra.mxu0 0.0
        %1778 = vmatprep.subr.mxu0 0.0
        %1779 = vmatpush1.xpose.msra.mxu0 0.0
        %1780 = vmatprep.subr.mxu0 0.0
        %1781 = vmatpush1.xpose.msra.mxu0 0.0
        %1782 = vmatprep.subr.mxu0 0.0
        %1783 = vmatpush1.xpose.msra.mxu0 0.0
        %1784 = vmatprep.subr.mxu0 0.0
        %1785 = vmatpush1.xpose.msra.mxu0 0.0
        %1786 = vmatprep.subr.mxu0 0.0
        %1787 = vmatpush1.xpose.msra.mxu0 0.0
        %1788 = vmatprep.subr.mxu0 0.0
        %1789 = vmatpush1.xpose.msra.mxu0 0.0
        %1790 = vmatprep.subr.mxu0 0.0
        %1791 = vmatpush1.xpose.msra.mxu0 0.0
        %1792 = vmatprep.subr.mxu0 0.0
        %1793 = vmatpush1.xpose.msra.mxu0 0.0
        %1794 = vmatprep.subr.mxu0 0.0
        %1795 = vmatpush1.xpose.msra.mxu0 0.0
        %1796 = vmatprep.subr.mxu0 0.0
        %1797 = vmatpush1.xpose.msra.mxu0 0.0
        %1798 = vmatprep.subr.mxu0 0.0
        %1799 = vmatpush1.xpose.msra.mxu0 0.0
        %1800 = vmatprep.subr.mxu0 0.0
        %1801 = vmatpush1.xpose.msra.mxu0 0.0
        %1802 = vmatprep.subr.mxu0 0.0
        %1803 = vmatpush1.xpose.msra.mxu0 0.0
        %1804 = vmatprep.subr.mxu0 0.0
        %1805 = vmatpush1.xpose.msra.mxu0 0.0
        %1806 = vmatprep.subr.mxu0 0.0
        %1807 = vmatpush1.xpose.msra.mxu0 0.0
        %1808 = vmatprep.subr.mxu0 0.0
        %1809 = vmatpush1.xpose.msra.mxu0 0.0
        %1810 = vmatprep.subr.mxu0 0.0
        %1811 = vmatpush1.xpose.msra.mxu0 0.0
        %1812 = vmatprep.subr.mxu0 0.0
        %1813 = vmatpush1.xpose.msra.mxu0 0.0
        %1814 = vmatprep.subr.mxu0 0.0
        %1815 = vmatpush1.xpose.msra.mxu0 0.0
        %1816 = vmatprep.subr.mxu0 0.0
        %1817 = vmatpush1.xpose.msra.mxu0 0.0
        %1818 = vmatprep.subr.mxu0 0.0
        %1819 = vmatpush1.xpose.msra.mxu0 0.0
        %1820 = vmatprep.subr.mxu0 0.0
        %1821 = vmatpush1.xpose.msra.mxu0 0.0
        %1822 = vmatprep.subr.mxu0 0.0
        %1823 = vmatpush1.xpose.msra.mxu0 0.0
        %1824 = vmatprep.subr.mxu0 0.0
        %1825 = vmatpush1.xpose.msra.mxu0 0.0
        %1826 = vmatprep.subr.mxu0 0.0
        %1827 = vmatpush1.xpose.msra.mxu0 0.0
        %1828 = vmatprep.subr.mxu0 0.0
        %1829 = vmatpush1.xpose.msra.mxu0 0.0
        %1830 = vmatprep.mubr.f32.mxu0 0.0
        %1831 = vmatmul.mubr.f32.gmra.mrb[0].mxu0 %v1762
        %v1832 = vpop.f32.mrb[0].mxu0
        %v1833 = vadd.f32 %v1593, %v1832
        %v1834 = vpop.f32.mrb[0].mxu0
        %1835 = vdwg.mxu0
        %v1836 = vsel %vm625, %v1833, -inf
        %1837 = vmax.xlane.f32.xlu0 %v1836
        %v1838 = vpop.xlane.xlu0 %1837
        %v1839 = vsub.f32 %v1833, %v1838
        %v1840 = vmul.f32 %v1839, 1.442695
        %v1841 = vpow.pop %v1840
        %v1842 = vsel %vm625, %v1841, 0.0
        %1843 = vadd.xlane.f32.xlu0 %v1842
        %v1844 = vpop.xlane.xlu0 %1843
        %v1845 = vrcp.pop %v1844
        %v1846 = vmul.f32 %v1841, %v1845
        %1847 = vrot.lane.b32.xlu0 %v1586, 88
        %v1848 = vpop.permute.xlu0 %1847
        %v1851 = vsel %vm625, %v1846, 0
        %1853 = vmatprep.subr.mxu0 0.0
        %1854 = vmatpush1.msra.mxu0 %v1848
        %1855 = vmatprep.subr.mxu0 0.0
        %1856 = vmatpush1.msra.mxu0 0.0
        %1857 = vmatprep.subr.mxu0 0.0
        %1858 = vmatpush1.msra.mxu0 0.0
        %1859 = vmatprep.subr.mxu0 0.0
        %1860 = vmatpush1.msra.mxu0 0.0
        %1861 = vmatprep.subr.mxu0 0.0
        %1862 = vmatpush1.msra.mxu0 0.0
        %1863 = vmatprep.subr.mxu0 0.0
        %1864 = vmatpush1.msra.mxu0 0.0
        %1865 = vmatprep.subr.mxu0 0.0
        %1866 = vmatpush1.msra.mxu0 0.0
        %1867 = vmatprep.subr.mxu0 0.0
        %1868 = vmatpush1.msra.mxu0 0.0
        %1869 = vmatprep.subr.mxu0 0.0
        %1870 = vmatpush1.msra.mxu0 0.0
        %1871 = vmatprep.subr.mxu0 0.0
        %1872 = vmatpush1.msra.mxu0 0.0
        %1873 = vmatprep.subr.mxu0 0.0
        %1874 = vmatpush1.msra.mxu0 0.0
        %1875 = vmatprep.subr.mxu0 0.0
        %1876 = vmatpush1.msra.mxu0 0.0
        %1877 = vmatprep.subr.mxu0 0.0
        %1878 = vmatpush1.msra.mxu0 0.0
        %1879 = vmatprep.subr.mxu0 0.0
        %1880 = vmatpush1.msra.mxu0 0.0
        %1881 = vmatprep.subr.mxu0 0.0
        %1882 = vmatpush1.msra.mxu0 0.0
        %1883 = vmatprep.subr.mxu0 0.0
        %1884 = vmatpush1.msra.mxu0 0.0
        %1885 = vmatprep.subr.mxu0 0.0
        %1886 = vmatpush1.msra.mxu0 0.0
        %1887 = vmatprep.subr.mxu0 0.0
        %1888 = vmatpush1.msra.mxu0 0.0
        %1889 = vmatprep.subr.mxu0 0.0
        %1890 = vmatpush1.msra.mxu0 0.0
        %1891 = vmatprep.subr.mxu0 0.0
        %1892 = vmatpush1.msra.mxu0 0.0
        %1893 = vmatprep.subr.mxu0 0.0
        %1894 = vmatpush1.msra.mxu0 0.0
        %1895 = vmatprep.subr.mxu0 0.0
        %1896 = vmatpush1.msra.mxu0 0.0
        %1897 = vmatprep.subr.mxu0 0.0
        %1898 = vmatpush1.msra.mxu0 0.0
        %1899 = vmatprep.subr.mxu0 0.0
        %1900 = vmatpush1.msra.mxu0 0.0
        %1901 = vmatprep.subr.mxu0 0.0
        %1902 = vmatpush1.msra.mxu0 0.0
        %1903 = vmatprep.subr.mxu0 0.0
        %1904 = vmatpush1.msra.mxu0 0.0
        %1905 = vmatprep.subr.mxu0 0.0
        %1906 = vmatpush1.msra.mxu0 0.0
        %1907 = vmatprep.subr.mxu0 0.0
        %1908 = vmatpush1.msra.mxu0 0.0
        %1909 = vmatprep.subr.mxu0 0.0
        %1910 = vmatpush1.msra.mxu0 0.0
        %1911 = vmatprep.subr.mxu0 0.0
        %1912 = vmatpush1.msra.mxu0 0.0
        %1913 = vmatprep.subr.mxu0 0.0
        %1914 = vmatpush1.msra.mxu0 0.0
        %1915 = vmatprep.subr.mxu0 0.0
        %1916 = vmatpush1.msra.mxu0 0.0
        %1917 = vmatprep.mubr.f32.mxu0 0.0
        %1918 = vmatmul.mubr.f32.gmra.mrb[0].mxu0 %v1851
        %v1919 = vpop.f32.mrb[0].mxu0
        %v1920 = vadd.f32 0.0, %v1919
        %v1921 = vpop.f32.mrb[0].mxu0
        %1922 = vdwg.mxu0
        %1923 = vrot.lane.b32.xlu0 %v1493, 112
        %v1924 = vpop.permute.xlu0 %1923
        %1925 = vrot.lane.b32.xlu0 %v1586, 112
        %v1926 = vpop.permute.xlu0 %1925
        %v1927 = vsel %vm625, %v1924, 0
        %v1929 = vsel %vm625, %v1926, 0
        %1931 = vmatprep.subr.mxu0 0.0
        %1932 = vmatpush1.xpose.msra.mxu0 %v1929
        %1933 = vmatprep.subr.mxu0 0.0
        %1934 = vmatpush1.xpose.msra.mxu0 0.0
        %1935 = vmatprep.subr.mxu0 0.0
        %1936 = vmatpush1.xpose.msra.mxu0 0.0
        %1937 = vmatprep.subr.mxu0 0.0
        %1938 = vmatpush1.xpose.msra.mxu0 0.0
        %1939 = vmatprep.subr.mxu0 0.0
        %1940 = vmatpush1.xpose.msra.mxu0 0.0
        %1941 = vmatprep.subr.mxu0 0.0
        %1942 = vmatpush1.xpose.msra.mxu0 0.0
        %1943 = vmatprep.subr.mxu0 0.0
        %1944 = vmatpush1.xpose.msra.mxu0 0.0
        %1945 = vmatprep.subr.mxu0 0.0
        %1946 = vmatpush1.xpose.msra.mxu0 0.0
        %1947 = vmatprep.subr.mxu0 0.0
        %1948 = vmatpush1.xpose.msra.mxu0 0.0
        %1949 = vmatprep.subr.mxu0 0.0
        %1950 = vmatpush1.xpose.msra.mxu0 0.0
        %1951 = vmatprep.subr.mxu0 0.0
        %1952 = vmatpush1.xpose.msra.mxu0 0.0
        %1953 = vmatprep.subr.mxu0 0.0
        %1954 = vmatpush1.xpose.msra.mxu0 0.0
        %1955 = vmatprep.subr.mxu0 0.0
        %1956 = vmatpush1.xpose.msra.mxu0 0.0
        %1957 = vmatprep.subr.mxu0 0.0
        %1958 = vmatpush1.xpose.msra.mxu0 0.0
        %1959 = vmatprep.subr.mxu0 0.0
        %1960 = vmatpush1.xpose.msra.mxu0 0.0
        %1961 = vmatprep.subr.mxu0 0.0
        %1962 = vmatpush1.xpose.msra.mxu0 0.0
        %1963 = vmatprep.subr.mxu0 0.0
        %1964 = vmatpush1.xpose.msra.mxu0 0.0
        %1965 = vmatprep.subr.mxu0 0.0
        %1966 = vmatpush1.xpose.msra.mxu0 0.0
        %1967 = vmatprep.subr.mxu0 0.0
        %1968 = vmatpush1.xpose.msra.mxu0 0.0
        %1969 = vmatprep.subr.mxu0 0.0
        %1970 = vmatpush1.xpose.msra.mxu0 0.0
        %1971 = vmatprep.subr.mxu0 0.0
        %1972 = vmatpush1.xpose.msra.mxu0 0.0
        %1973 = vmatprep.subr.mxu0 0.0
        %1974 = vmatpush1.xpose.msra.mxu0 0.0
        %1975 = vmatprep.subr.mxu0 0.0
        %1976 = vmatpush1.xpose.msra.mxu0 0.0
        %1977 = vmatprep.subr.mxu0 0.0
        %1978 = vmatpush1.xpose.msra.mxu0 0.0
        %1979 = vmatprep.subr.mxu0 0.0
        %1980 = vmatpush1.xpose.msra.mxu0 0.0
        %1981 = vmatprep.subr.mxu0 0.0
        %1982 = vmatpush1.xpose.msra.mxu0 0.0
        %1983 = vmatprep.subr.mxu0 0.0
        %1984 = vmatpush1.xpose.msra.mxu0 0.0
        %1985 = vmatprep.subr.mxu0 0.0
        %1986 = vmatpush1.xpose.msra.mxu0 0.0
        %1987 = vmatprep.subr.mxu0 0.0
        %1988 = vmatpush1.xpose.msra.mxu0 0.0
        %1989 = vmatprep.subr.mxu0 0.0
        %1990 = vmatpush1.xpose.msra.mxu0 0.0
        %1991 = vmatprep.subr.mxu0 0.0
        %1992 = vmatpush1.xpose.msra.mxu0 0.0
        %1993 = vmatprep.subr.mxu0 0.0
        %1994 = vmatpush1.xpose.msra.mxu0 0.0
        %1995 = vmatprep.mubr.f32.mxu0 0.0
        %1996 = vmatmul.mubr.f32.gmra.mrb[0].mxu0 %v1927
        %v1997 = vpop.f32.mrb[0].mxu0
        %v1998 = vadd.f32 %v1593, %v1997
        %v1999 = vpop.f32.mrb[0].mxu0
        %2000 = vdwg.mxu0
        %v2001 = vsel %vm625, %v1998, -inf
        %2002 = vmax.xlane.f32.xlu0 %v2001
        %v2003 = vpop.xlane.xlu0 %2002
        %v2004 = vsub.f32 %v1998, %v2003
        %v2005 = vmul.f32 %v2004, 1.442695
        %v2006 = vpow.pop %v2005
        %v2007 = vsel %vm625, %v2006, 0.0
        %2008 = vadd.xlane.f32.xlu0 %v2007
        %v2009 = vpop.xlane.xlu0 %2008
        %v2010 = vrcp.pop %v2009
        %v2011 = vmul.f32 %v2006, %v2010
        %2012 = vrot.lane.b32.xlu0 %v1586, 80
        %v2013 = vpop.permute.xlu0 %2012
        %v2016 = vsel %vm625, %v2011, 0
        %2018 = vmatprep.subr.mxu0 0.0
        %2019 = vmatpush1.msra.mxu0 %v2013
        %2020 = vmatprep.subr.mxu0 0.0
        %2021 = vmatpush1.msra.mxu0 0.0
        %2022 = vmatprep.subr.mxu0 0.0
        %2023 = vmatpush1.msra.mxu0 0.0
        %2024 = vmatprep.subr.mxu0 0.0
        %2025 = vmatpush1.msra.mxu0 0.0
        %2026 = vmatprep.subr.mxu0 0.0
        %2027 = vmatpush1.msra.mxu0 0.0
        %2028 = vmatprep.subr.mxu0 0.0
        %2029 = vmatpush1.msra.mxu0 0.0
        %2030 = vmatprep.subr.mxu0 0.0
        %2031 = vmatpush1.msra.mxu0 0.0
        %2032 = vmatprep.subr.mxu0 0.0
        %2033 = vmatpush1.msra.mxu0 0.0
        %2034 = vmatprep.subr.mxu0 0.0
        %2035 = vmatpush1.msra.mxu0 0.0
        %2036 = vmatprep.subr.mxu0 0.0
        %2037 = vmatpush1.msra.mxu0 0.0
        %2038 = vmatprep.subr.mxu0 0.0
        %2039 = vmatpush1.msra.mxu0 0.0
        %2040 = vmatprep.subr.mxu0 0.0
        %2041 = vmatpush1.msra.mxu0 0.0
        %2042 = vmatprep.subr.mxu0 0.0
        %2043 = vmatpush1.msra.mxu0 0.0
        %2044 = vmatprep.subr.mxu0 0.0
        %2045 = vmatpush1.msra.mxu0 0.0
        %2046 = vmatprep.subr.mxu0 0.0
        %2047 = vmatpush1.msra.mxu0 0.0
        %2048 = vmatprep.subr.mxu0 0.0
        %2049 = vmatpush1.msra.mxu0 0.0
        %2050 = vmatprep.subr.mxu0 0.0
        %2051 = vmatpush1.msra.mxu0 0.0
        %2052 = vmatprep.subr.mxu0 0.0
        %2053 = vmatpush1.msra.mxu0 0.0
        %2054 = vmatprep.subr.mxu0 0.0
        %2055 = vmatpush1.msra.mxu0 0.0
        %2056 = vmatprep.subr.mxu0 0.0
        %2057 = vmatpush1.msra.mxu0 0.0
        %2058 = vmatprep.subr.mxu0 0.0
        %2059 = vmatpush1.msra.mxu0 0.0
        %2060 = vmatprep.subr.mxu0 0.0
        %2061 = vmatpush1.msra.mxu0 0.0
        %2062 = vmatprep.subr.mxu0 0.0
        %2063 = vmatpush1.msra.mxu0 0.0
        %2064 = vmatprep.subr.mxu0 0.0
        %2065 = vmatpush1.msra.mxu0 0.0
        %2066 = vmatprep.subr.mxu0 0.0
        %2067 = vmatpush1.msra.mxu0 0.0
        %2068 = vmatprep.subr.mxu0 0.0
        %2069 = vmatpush1.msra.mxu0 0.0
        %2070 = vmatprep.subr.mxu0 0.0
        %2071 = vmatpush1.msra.mxu0 0.0
        %2072 = vmatprep.subr.mxu0 0.0
        %2073 = vmatpush1.msra.mxu0 0.0
        %2074 = vmatprep.subr.mxu0 0.0
        %2075 = vmatpush1.msra.mxu0 0.0
        %2076 = vmatprep.subr.mxu0 0.0
        %2077 = vmatpush1.msra.mxu0 0.0
        %2078 = vmatprep.subr.mxu0 0.0
        %2079 = vmatpush1.msra.mxu0 0.0
        %2080 = vmatprep.subr.mxu0 0.0
        %2081 = vmatpush1.msra.mxu0 0.0
        %2082 = vmatprep.mubr.f32.mxu0 0.0
        %2083 = vmatmul.mubr.f32.gmra.mrb[0].mxu0 %v2016
        %v2084 = vpop.f32.mrb[0].mxu0
        %v2085 = vadd.f32 0.0, %v2084
        %v2086 = vpop.f32.mrb[0].mxu0
        %2087 = vdwg.mxu0
        %2088 = vrot.lane.b32.xlu0 %v1493, 104
        %v2089 = vpop.permute.xlu0 %2088
        %2090 = vrot.lane.b32.xlu0 %v1586, 104
        %v2091 = vpop.permute.xlu0 %2090
        %v2092 = vsel %vm625, %v2089, 0
        %v2094 = vsel %vm625, %v2091, 0
        %2096 = vmatprep.subr.mxu0 0.0
        %2097 = vmatpush1.xpose.msra.mxu0 %v2094
        %2098 = vmatprep.subr.mxu0 0.0
        %2099 = vmatpush1.xpose.msra.mxu0 0.0
        %2100 = vmatprep.subr.mxu0 0.0
        %2101 = vmatpush1.xpose.msra.mxu0 0.0
        %2102 = vmatprep.subr.mxu0 0.0
        %2103 = vmatpush1.xpose.msra.mxu0 0.0
        %2104 = vmatprep.subr.mxu0 0.0
        %2105 = vmatpush1.xpose.msra.mxu0 0.0
        %2106 = vmatprep.subr.mxu0 0.0
        %2107 = vmatpush1.xpose.msra.mxu0 0.0
        %2108 = vmatprep.subr.mxu0 0.0
        %2109 = vmatpush1.xpose.msra.mxu0 0.0
        %2110 = vmatprep.subr.mxu0 0.0
        %2111 = vmatpush1.xpose.msra.mxu0 0.0
        %2112 = vmatprep.subr.mxu0 0.0
        %2113 = vmatpush1.xpose.msra.mxu0 0.0
        %2114 = vmatprep.subr.mxu0 0.0
        %2115 = vmatpush1.xpose.msra.mxu0 0.0
        %2116 = vmatprep.subr.mxu0 0.0
        %2117 = vmatpush1.xpose.msra.mxu0 0.0
        %2118 = vmatprep.subr.mxu0 0.0
        %2119 = vmatpush1.xpose.msra.mxu0 0.0
        %2120 = vmatprep.subr.mxu0 0.0
        %2121 = vmatpush1.xpose.msra.mxu0 0.0
        %2122 = vmatprep.subr.mxu0 0.0
        %2123 = vmatpush1.xpose.msra.mxu0 0.0
        %2124 = vmatprep.subr.mxu0 0.0
        %2125 = vmatpush1.xpose.msra.mxu0 0.0
        %2126 = vmatprep.subr.mxu0 0.0
        %2127 = vmatpush1.xpose.msra.mxu0 0.0
        %2128 = vmatprep.subr.mxu0 0.0
        %2129 = vmatpush1.xpose.msra.mxu0 0.0
        %2130 = vmatprep.subr.mxu0 0.0
        %2131 = vmatpush1.xpose.msra.mxu0 0.0
        %2132 = vmatprep.subr.mxu0 0.0
        %2133 = vmatpush1.xpose.msra.mxu0 0.0
        %2134 = vmatprep.subr.mxu0 0.0
        %2135 = vmatpush1.xpose.msra.mxu0 0.0
        %2136 = vmatprep.subr.mxu0 0.0
        %2137 = vmatpush1.xpose.msra.mxu0 0.0
        %2138 = vmatprep.subr.mxu0 0.0
        %2139 = vmatpush1.xpose.msra.mxu0 0.0
        %2140 = vmatprep.subr.mxu0 0.0
        %2141 = vmatpush1.xpose.msra.mxu0 0.0
        %2142 = vmatprep.subr.mxu0 0.0
        %2143 = vmatpush1.xpose.msra.mxu0 0.0
        %2144 = vmatprep.subr.mxu0 0.0
        %2145 = vmatpush1.xpose.msra.mxu0 0.0
        %2146 = vmatprep.subr.mxu0 0.0
        %2147 = vmatpush1.xpose.msra.mxu0 0.0
        %2148 = vmatprep.subr.mxu0 0.0
        %2149 = vmatpush1.xpose.msra.mxu0 0.0
        %2150 = vmatprep.subr.mxu0 0.0
        %2151 = vmatpush1.xpose.msra.mxu0 0.0
        %2152 = vmatprep.subr.mxu0 0.0
        %2153 = vmatpush1.xpose.msra.mxu0 0.0
        %2154 = vmatprep.subr.mxu0 0.0
        %2155 = vmatpush1.xpose.msra.mxu0 0.0
        %2156 = vmatprep.subr.mxu0 0.0
        %2157 = vmatpush1.xpose.msra.mxu0 0.0
        %2158 = vmatprep.subr.mxu0 0.0
        %2159 = vmatpush1.xpose.msra.mxu0 0.0
        %2160 = vmatprep.mubr.f32.mxu0 0.0
        %2161 = vmatmul.mubr.f32.gmra.mrb[0].mxu0 %v2092
        %v2162 = vpop.f32.mrb[0].mxu0
        %v2163 = vadd.f32 %v1593, %v2162
        %v2164 = vpop.f32.mrb[0].mxu0
        %2165 = vdwg.mxu0
        %v2166 = vsel %vm625, %v2163, -inf
        %2167 = vmax.xlane.f32.xlu0 %v2166
        %v2168 = vpop.xlane.xlu0 %2167
        %v2169 = vsub.f32 %v2163, %v2168
        %v2170 = vmul.f32 %v2169, 1.442695
        %v2171 = vpow.pop %v2170
        %v2172 = vsel %vm625, %v2171, 0.0
        %2173 = vadd.xlane.f32.xlu0 %v2172
        %v2174 = vpop.xlane.xlu0 %2173
        %v2175 = vrcp.pop %v2174
        %v2176 = vmul.f32 %v2171, %v2175
        %2177 = vrot.lane.b32.xlu0 %v1586, 72
        %v2178 = vpop.permute.xlu0 %2177
        %v2181 = vsel %vm625, %v2176, 0
        %2183 = vmatprep.subr.mxu0 0.0
        %2184 = vmatpush1.msra.mxu0 %v2178
        %2185 = vmatprep.subr.mxu0 0.0
        %2186 = vmatpush1.msra.mxu0 0.0
        %2187 = vmatprep.subr.mxu0 0.0
        %2188 = vmatpush1.msra.mxu0 0.0
        %2189 = vmatprep.subr.mxu0 0.0
        %2190 = vmatpush1.msra.mxu0 0.0
        %2191 = vmatprep.subr.mxu0 0.0
        %2192 = vmatpush1.msra.mxu0 0.0
        %2193 = vmatprep.subr.mxu0 0.0
        %2194 = vmatpush1.msra.mxu0 0.0
        %2195 = vmatprep.subr.mxu0 0.0
        %2196 = vmatpush1.msra.mxu0 0.0
        %2197 = vmatprep.subr.mxu0 0.0
        %2198 = vmatpush1.msra.mxu0 0.0
        %2199 = vmatprep.subr.mxu0 0.0
        %2200 = vmatpush1.msra.mxu0 0.0
        %2201 = vmatprep.subr.mxu0 0.0
        %2202 = vmatpush1.msra.mxu0 0.0
        %2203 = vmatprep.subr.mxu0 0.0
        %2204 = vmatpush1.msra.mxu0 0.0
        %2205 = vmatprep.subr.mxu0 0.0
        %2206 = vmatpush1.msra.mxu0 0.0
        %2207 = vmatprep.subr.mxu0 0.0
        %2208 = vmatpush1.msra.mxu0 0.0
        %2209 = vmatprep.subr.mxu0 0.0
        %2210 = vmatpush1.msra.mxu0 0.0
        %2211 = vmatprep.subr.mxu0 0.0
        %2212 = vmatpush1.msra.mxu0 0.0
        %2213 = vmatprep.subr.mxu0 0.0
        %2214 = vmatpush1.msra.mxu0 0.0
        %2215 = vmatprep.subr.mxu0 0.0
        %2216 = vmatpush1.msra.mxu0 0.0
        %2217 = vmatprep.subr.mxu0 0.0
        %2218 = vmatpush1.msra.mxu0 0.0
        %2219 = vmatprep.subr.mxu0 0.0
        %2220 = vmatpush1.msra.mxu0 0.0
        %2221 = vmatprep.subr.mxu0 0.0
        %2222 = vmatpush1.msra.mxu0 0.0
        %2223 = vmatprep.subr.mxu0 0.0
        %2224 = vmatpush1.msra.mxu0 0.0
        %2225 = vmatprep.subr.mxu0 0.0
        %2226 = vmatpush1.msra.mxu0 0.0
        %2227 = vmatprep.subr.mxu0 0.0
        %2228 = vmatpush1.msra.mxu0 0.0
        %2229 = vmatprep.subr.mxu0 0.0
        %2230 = vmatpush1.msra.mxu0 0.0
        %2231 = vmatprep.subr.mxu0 0.0
        %2232 = vmatpush1.msra.mxu0 0.0
        %2233 = vmatprep.subr.mxu0 0.0
        %2234 = vmatpush1.msra.mxu0 0.0
        %2235 = vmatprep.subr.mxu0 0.0
        %2236 = vmatpush1.msra.mxu0 0.0
        %2237 = vmatprep.subr.mxu0 0.0
        %2238 = vmatpush1.msra.mxu0 0.0
        %2239 = vmatprep.subr.mxu0 0.0
        %2240 = vmatpush1.msra.mxu0 0.0
        %2241 = vmatprep.subr.mxu0 0.0
        %2242 = vmatpush1.msra.mxu0 0.0
        %2243 = vmatprep.subr.mxu0 0.0
        %2244 = vmatpush1.msra.mxu0 0.0
        %2245 = vmatprep.subr.mxu0 0.0
        %2246 = vmatpush1.msra.mxu0 0.0
        %2247 = vmatprep.mubr.f32.mxu0 0.0
        %2248 = vmatmul.mubr.f32.gmra.mrb[0].mxu0 %v2181
        %v2249 = vpop.f32.mrb[0].mxu0
        %v2250 = vadd.f32 0.0, %v2249
        %v2251 = vpop.f32.mrb[0].mxu0
        %2252 = vdwg.mxu0
        %2254 = vrot.lane.b32.xlu0 %v1920, 8
        %v2255 = vpop.permute.xlu0 %2254
        %2258 = vrot.lane.b32.xlu0 %v2085, 16
        %v2259 = vpop.permute.xlu0 %2258
        %2262 = vrot.lane.b32.xlu0 %v2250, 24
        %v2263 = vpop.permute.xlu0 %2262
        %v2265 = vsel %vm625, %v1755, %v2255
        %v2266 = vsel %vm1297, %v2265, %v2259
        %v2267 = vsel %vm1299, %v2266, %v2263
        %2268 = vrot.lane.b32.xlu0 %v1415, 32
        %v2269 = vpop.permute.xlu0 %2268
        %2270 = vrot.lane.b32.xlu0 %v1416, 32
        %v2271 = vpop.permute.xlu0 %2270
        %2272 = vrot.lane.b32.xlu0 %v1417, 32
        %v2273 = vpop.permute.xlu0 %2272
        %2274 = vrot.lane.b32.xlu0 %v1418, 32
        %v2275 = vpop.permute.xlu0 %2274
        %2280 = vrot.lane.b32.xlu0 %v1422, 32
        %v2281 = vpop.permute.xlu0 %2280
        %v2284 = vsel %vm461, %v2267, 0
        %2286 = vmatprep.subr.mxu0 0.0
        %2287 = vmatpush1.msra.mxu0 %v2269
        %2288 = vmatprep.subr.mxu0 0.0
        %2289 = vmatpush1.msra.mxu0 %v2271
        %2290 = vmatprep.subr.mxu0 0.0
        %2291 = vmatpush1.msra.mxu0 %v2273
        %2292 = vmatprep.subr.mxu0 0.0
        %2293 = vmatpush1.msra.mxu0 %v2275
        %2294 = vmatprep.subr.mxu0 0.0
        %2295 = vmatpush1.msra.mxu0 0.0
        %2296 = vmatprep.subr.mxu0 0.0
        %2297 = vmatpush1.msra.mxu0 0.0
        %2298 = vmatprep.subr.mxu0 0.0
        %2299 = vmatpush1.msra.mxu0 0.0
        %2300 = vmatprep.subr.mxu0 0.0
        %2301 = vmatpush1.msra.mxu0 0.0
        %2302 = vmatprep.subr.mxu0 0.0
        %2303 = vmatpush1.msra.mxu0 0.0
        %2304 = vmatprep.subr.mxu0 0.0
        %2305 = vmatpush1.msra.mxu0 0.0
        %2306 = vmatprep.subr.mxu0 0.0
        %2307 = vmatpush1.msra.mxu0 0.0
        %2308 = vmatprep.subr.mxu0 0.0
        %2309 = vmatpush1.msra.mxu0 0.0
        %2310 = vmatprep.subr.mxu0 0.0
        %2311 = vmatpush1.msra.mxu0 0.0
        %2312 = vmatprep.subr.mxu0 0.0
        %2313 = vmatpush1.msra.mxu0 0.0
        %2314 = vmatprep.subr.mxu0 0.0
        %2315 = vmatpush1.msra.mxu0 0.0
        %2316 = vmatprep.subr.mxu0 0.0
        %2317 = vmatpush1.msra.mxu0 0.0
        %2318 = vmatprep.subr.mxu0 0.0
        %2319 = vmatpush1.msra.mxu0 0.0
        %2320 = vmatprep.subr.mxu0 0.0
        %2321 = vmatpush1.msra.mxu0 0.0
        %2322 = vmatprep.subr.mxu0 0.0
        %2323 = vmatpush1.msra.mxu0 0.0
        %2324 = vmatprep.subr.mxu0 0.0
        %2325 = vmatpush1.msra.mxu0 0.0
        %2326 = vmatprep.subr.mxu0 0.0
        %2327 = vmatpush1.msra.mxu0 0.0
        %2328 = vmatprep.subr.mxu0 0.0
        %2329 = vmatpush1.msra.mxu0 0.0
        %2330 = vmatprep.subr.mxu0 0.0
        %2331 = vmatpush1.msra.mxu0 0.0
        %2332 = vmatprep.subr.mxu0 0.0
        %2333 = vmatpush1.msra.mxu0 0.0
        %2334 = vmatprep.subr.mxu0 0.0
        %2335 = vmatpush1.msra.mxu0 0.0
        %2336 = vmatprep.subr.mxu0 0.0
        %2337 = vmatpush1.msra.mxu0 0.0
        %2338 = vmatprep.subr.mxu0 0.0
        %2339 = vmatpush1.msra.mxu0 0.0
        %2340 = vmatprep.subr.mxu0 0.0
        %2341 = vmatpush1.msra.mxu0 0.0
        %2342 = vmatprep.subr.mxu0 0.0
        %2343 = vmatpush1.msra.mxu0 0.0
        %2344 = vmatprep.subr.mxu0 0.0
        %2345 = vmatpush1.msra.mxu0 0.0
        %2346 = vmatprep.subr.mxu0 0.0
        %2347 = vmatpush1.msra.mxu0 0.0
        %2348 = vmatprep.subr.mxu0 0.0
        %2349 = vmatpush1.msra.mxu0 0.0
        %2350 = vmatprep.mubr.f32.mxu0 0.0
        %2351 = vmatmul.mubr.f32.gmra.mrb[0].mxu0 %v2284
        %v2352 = vpop.f32.mrb[0].mxu0
        %v2353 = vadd.f32 %v2281, %v2352
        %v2354 = vpop.f32.mrb[0].mxu0
        %2355 = vdwg.mxu0
        %v2356 = vadd.f32 %v1413, %v2353
        %v2357 = vsel %vm461, %v2356, 0.0
        %2358 = vadd.xlane.f32.xlu0 %v2357
        %v2359 = vpop.xlane.xlu0 %2358
        %v2360 = vmul.f32 %v2359, %v1393
        %v2361 = vsub.f32 %v2356, %v2360
        %v2362 = vmul.f32 %v2361, %v2361
        %v2363 = vsel %vm461, %v2362, 0.0
        %2364 = vadd.xlane.f32.xlu0 %v2363
        %v2365 = vpop.xlane.xlu0 %2364
        %v2366 = vmul.f32 %v2365, %v1393
        %v2367 = vadd.f32 %v2366, 1e-05
        %v2368 = vrsqrt.pop %v2367
        %v2369 = vmul.f32 %v2361, %v2368
        %2370 = vrot.lane.b32.xlu0 %v1407, 64
        %v2371 = vpop.permute.xlu0 %2370
        %v2373 = vmul.f32 %v2369, %v2371
        %2374 = vrot.lane.b32.xlu0 %v1407, 32
        %v2375 = vpop.permute.xlu0 %2374
        %v2377 = vadd.f32 %v2373, %v2375
        %v2378 = vld [vmem:[%s5] sm:$0xff]
        %v2379 = vld [vmem:[%s5 + $0x8] sm:$0xff]
        %v2380 = vld [vmem:[%s5 + $0x10] sm:$0xff]
        %v2381 = vld [vmem:[%s5 + $0x18] sm:$0xff]
        %v2382 = vlaneseq
        %v2383 = vshrl.u32 %v2382, 7
        %v2384 = vsub.s32 4, %v2383
        %v2385 = vrot.slane %v452, %v2384
        %v2387 = vsel %vm461, %v2377, 0
        %2389 = vmatprep.subr.mxu0 0.0
        %2390 = vmatpush1.msra.mxu0 %v2378
        %2391 = vmatprep.subr.mxu0 0.0
        %2392 = vmatpush1.msra.mxu0 %v2379
        %2393 = vmatprep.subr.mxu0 0.0
        %2394 = vmatpush1.msra.mxu0 %v2380
        %2395 = vmatprep.subr.mxu0 0.0
        %2396 = vmatpush1.msra.mxu0 %v2381
        %2397 = vmatprep.subr.mxu0 0.0
        %2398 = vmatpush1.msra.mxu0 0.0
        %2399 = vmatprep.subr.mxu0 0.0
        %2400 = vmatpush1.msra.mxu0 0.0
        %2401 = vmatprep.subr.mxu0 0.0
        %2402 = vmatpush1.msra.mxu0 0.0
        %2403 = vmatprep.subr.mxu0 0.0
        %2404 = vmatpush1.msra.mxu0 0.0
        %2405 = vmatprep.subr.mxu0 0.0
        %2406 = vmatpush1.msra.mxu0 0.0
        %2407 = vmatprep.subr.mxu0 0.0
        %2408 = vmatpush1.msra.mxu0 0.0
        %2409 = vmatprep.subr.mxu0 0.0
        %2410 = vmatpush1.msra.mxu0 0.0
        %2411 = vmatprep.subr.mxu0 0.0
        %2412 = vmatpush1.msra.mxu0 0.0
        %2413 = vmatprep.subr.mxu0 0.0
        %2414 = vmatpush1.msra.mxu0 0.0
        %2415 = vmatprep.subr.mxu0 0.0
        %2416 = vmatpush1.msra.mxu0 0.0
        %2417 = vmatprep.subr.mxu0 0.0
        %2418 = vmatpush1.msra.mxu0 0.0
        %2419 = vmatprep.subr.mxu0 0.0
        %2420 = vmatpush1.msra.mxu0 0.0
        %2421 = vmatprep.subr.mxu0 0.0
        %2422 = vmatpush1.msra.mxu0 0.0
        %2423 = vmatprep.subr.mxu0 0.0
        %2424 = vmatpush1.msra.mxu0 0.0
        %2425 = vmatprep.subr.mxu0 0.0
        %2426 = vmatpush1.msra.mxu0 0.0
        %2427 = vmatprep.subr.mxu0 0.0
        %2428 = vmatpush1.msra.mxu0 0.0
        %2429 = vmatprep.subr.mxu0 0.0
        %2430 = vmatpush1.msra.mxu0 0.0
        %2431 = vmatprep.subr.mxu0 0.0
        %2432 = vmatpush1.msra.mxu0 0.0
        %2433 = vmatprep.subr.mxu0 0.0
        %2434 = vmatpush1.msra.mxu0 0.0
        %2435 = vmatprep.subr.mxu0 0.0
        %2436 = vmatpush1.msra.mxu0 0.0
        %2437 = vmatprep.subr.mxu0 0.0
        %2438 = vmatpush1.msra.mxu0 0.0
        %2439 = vmatprep.subr.mxu0 0.0
        %2440 = vmatpush1.msra.mxu0 0.0
        %2441 = vmatprep.subr.mxu0 0.0
        %2442 = vmatpush1.msra.mxu0 0.0
        %2443 = vmatprep.subr.mxu0 0.0
        %2444 = vmatpush1.msra.mxu0 0.0
        %2445 = vmatprep.subr.mxu0 0.0
        %2446 = vmatpush1.msra.mxu0 0.0
        %2447 = vmatprep.subr.mxu0 0.0
        %2448 = vmatpush1.msra.mxu0 0.0
        %2449 = vmatprep.subr.mxu0 0.0
        %2450 = vmatpush1.msra.mxu0 0.0
        %2451 = vmatprep.subr.mxu0 0.0
        %2452 = vmatpush1.msra.mxu0 0.0
        %2453 = vmatprep.mubr.f32.mxu0 0.0
        %2454 = vmatmul.mubr.f32.gmra.mrb[0].mxu0 %v2387
        %v2455 = vpop.f32.mrb[0].mxu0
        %v2456 = vadd.f32 %v2385, %v2455
        %v2457 = vpop.f32.mrb[0].mxu0
        %2458 = vdwg.mxu0
        %v2459 = vmax.f32 %v2456, 0.0
        %v2460 = vld [vmem:[%s6] sm:$0xff]
        %v2461 = vld [vmem:[%s6 + $0x8] sm:$0xff]
        %v2462 = vld [vmem:[%s6 + $0x10] sm:$0xff]
        %v2463 = vld [vmem:[%s6 + $0x18] sm:$0xff]
        %v2464 = vld [vmem:[%s6 + $0x20] sm:$0xff]
        %v2465 = vld [vmem:[%s6 + $0x28] sm:$0xff]
        %v2466 = vld [vmem:[%s6 + $0x30] sm:$0xff]
        %v2467 = vld [vmem:[%s6 + $0x38] sm:$0xff]
        %v2468 = vlaneseq
        %v2469 = vshrl.u32 %v2468, 7
        %v2470 = vsub.s32 3, %v2469
        %v2471 = vrot.slane %v452, %v2470
        %2473 = vrot.lane.b32.xlu0 %v2471, 64
        %v2474 = vpop.permute.xlu0 %2473
        %vm2476 = vcmask 523264
        %v2478 = vsel %vm2476, %v2459, 0
        %2480 = vmatprep.subr.mxu0 0.0
        %2481 = vmatpush1.msra.mxu0 %v2460
        %2482 = vmatprep.subr.mxu0 0.0
        %2483 = vmatpush1.msra.mxu0 %v2461
        %2484 = vmatprep.subr.mxu0 0.0
        %2485 = vmatpush1.msra.mxu0 %v2462
        %2486 = vmatprep.subr.mxu0 0.0
        %2487 = vmatpush1.msra.mxu0 %v2463
        %2488 = vmatprep.subr.mxu0 0.0
        %2489 = vmatpush1.msra.mxu0 %v2464
        %2490 = vmatprep.subr.mxu0 0.0
        %2491 = vmatpush1.msra.mxu0 %v2465
        %2492 = vmatprep.subr.mxu0 0.0
        %2493 = vmatpush1.msra.mxu0 %v2466
        %2494 = vmatprep.subr.mxu0 0.0
        %2495 = vmatpush1.msra.mxu0 %v2467
        %2496 = vmatprep.subr.mxu0 0.0
        %2497 = vmatpush1.msra.mxu0 0.0
        %2498 = vmatprep.subr.mxu0 0.0
        %2499 = vmatpush1.msra.mxu0 0.0
        %2500 = vmatprep.subr.mxu0 0.0
        %2501 = vmatpush1.msra.mxu0 0.0
        %2502 = vmatprep.subr.mxu0 0.0
        %2503 = vmatpush1.msra.mxu0 0.0
        %2504 = vmatprep.subr.mxu0 0.0
        %2505 = vmatpush1.msra.mxu0 0.0
        %2506 = vmatprep.subr.mxu0 0.0
        %2507 = vmatpush1.msra.mxu0 0.0
        %2508 = vmatprep.subr.mxu0 0.0
        %2509 = vmatpush1.msra.mxu0 0.0
        %2510 = vmatprep.subr.mxu0 0.0
        %2511 = vmatpush1.msra.mxu0 0.0
        %2512 = vmatprep.subr.mxu0 0.0
        %2513 = vmatpush1.msra.mxu0 0.0
        %2514 = vmatprep.subr.mxu0 0.0
        %2515 = vmatpush1.msra.mxu0 0.0
        %2516 = vmatprep.subr.mxu0 0.0
        %2517 = vmatpush1.msra.mxu0 0.0
        %2518 = vmatprep.subr.mxu0 0.0
        %2519 = vmatpush1.msra.mxu0 0.0
        %2520 = vmatprep.subr.mxu0 0.0
        %2521 = vmatpush1.msra.mxu0 0.0
        %2522 = vmatprep.subr.mxu0 0.0
        %2523 = vmatpush1.msra.mxu0 0.0
        %2524 = vmatprep.subr.mxu0 0.0
        %2525 = vmatpush1.msra.mxu0 0.0
        %2526 = vmatprep.subr.mxu0 0.0
        %2527 = vmatpush1.msra.mxu0 0.0
        %2528 = vmatprep.subr.mxu0 0.0
        %2529 = vmatpush1.msra.mxu0 0.0
        %2530 = vmatprep.subr.mxu0 0.0
        %2531 = vmatpush1.msra.mxu0 0.0
        %2532 = vmatprep.subr.mxu0 0.0
        %2533 = vmatpush1.msra.mxu0 0.0
        %2534 = vmatprep.subr.mxu0 0.0
        %2535 = vmatpush1.msra.mxu0 0.0
        %2536 = vmatprep.subr.mxu0 0.0
        %2537 = vmatpush1.msra.mxu0 0.0
        %2538 = vmatprep.subr.mxu0 0.0
        %2539 = vmatpush1.msra.mxu0 0.0
        %2540 = vmatprep.subr.mxu0 0.0
        %2541 = vmatpush1.msra.mxu0 0.0
        %2542 = vmatprep.subr.mxu0 0.0
        %2543 = vmatpush1.msra.mxu0 0.0
        %2544 = vmatprep.mubr.f32.mxu0 0.0
        %2545 = vmatmul.mubr.f32.gmra.mrb[0].mxu0 %v2478
        %v2546 = vpop.f32.mrb[0].mxu0
        %v2547 = vadd.f32 %v2474, %v2546
        %v2548 = vpop.f32.mrb[0].mxu0
        %2549 = vdwg.mxu0
        %v2550 = vadd.f32 %v2377, %v2547
        %v2551 = vsel %vm461, %v2550, 0.0
        %2552 = vadd.xlane.f32.xlu0 %v2551
        %v2553 = vpop.xlane.xlu0 %2552
        %v2554 = vmul.f32 %v2553, %v1393
        %v2555 = vsub.f32 %v2550, %v2554
        %v2556 = vmul.f32 %v2555, %v2555
        %v2557 = vsel %vm461, %v2556, 0.0
        %2558 = vadd.xlane.f32.xlu0 %v2557
        %v2559 = vpop.xlane.xlu0 %2558
        %v2560 = vmul.f32 %v2559, %v1393
        %v2561 = vadd.f32 %v2560, 1e-05
        %v2562 = vrsqrt.pop %v2561
        %v2563 = vmul.f32 %v2555, %v2562
        %v2564 = vmul.f32 %v2563, %v2471
        %2565 = vrot.lane.b32.xlu0 %v2471, 96
        %v2566 = vpop.permute.xlu0 %2565
        %v2568 = vadd.f32 %v2564, %v2566
        %s2569 = scalar_lea.vmem %s7, 8
        %v2570 = vld [vmem:[%s2569] sm:$0xff]
        %s2571 = scalar_lea.vmem %s4, 64
        %v2572 = vld [vmem:[%s2571] sm:$0xff]
        %v2573 = vld [vmem:[%s2571 + $0x8] sm:$0xff]
        %v2574 = vld [vmem:[%s2571 + $0x10] sm:$0xff]
        %v2575 = vld [vmem:[%s2571 + $0x18] sm:$0xff]
        %v2576 = vlaneseq
        %v2577 = vshrl.u32 %v2576, 7
        %v2578 = vsub.s32 0, %v2577
        %v2579 = vrot.slane %v2570, %v2578
        %v2581 = vsel %vm461, %v2568, 0
        %2583 = vmatprep.subr.mxu0 0.0
        %2584 = vmatpush1.msra.mxu0 %v2572
        %2585 = vmatprep.subr.mxu0 0.0
        %2586 = vmatpush1.msra.mxu0 %v2573
        %2587 = vmatprep.subr.mxu0 0.0
        %2588 = vmatpush1.msra.mxu0 %v2574
        %2589 = vmatprep.subr.mxu0 0.0
        %2590 = vmatpush1.msra.mxu0 %v2575
        %2591 = vmatprep.subr.mxu0 0.0
        %2592 = vmatpush1.msra.mxu0 0.0
        %2593 = vmatprep.subr.mxu0 0.0
        %2594 = vmatpush1.msra.mxu0 0.0
        %2595 = vmatprep.subr.mxu0 0.0
        %2596 = vmatpush1.msra.mxu0 0.0
        %2597 = vmatprep.subr.mxu0 0.0
        %2598 = vmatpush1.msra.mxu0 0.0
        %2599 = vmatprep.subr.mxu0 0.0
        %2600 = vmatpush1.msra.mxu0 0.0
        %2601 = vmatprep.subr.mxu0 0.0
        %2602 = vmatpush1.msra.mxu0 0.0
        %2603 = vmatprep.subr.mxu0 0.0
        %2604 = vmatpush1.msra.mxu0 0.0
        %2605 = vmatprep.subr.mxu0 0.0
        %2606 = vmatpush1.msra.mxu0 0.0
        %2607 = vmatprep.subr.mxu0 0.0
        %2608 = vmatpush1.msra.mxu0 0.0
        %2609 = vmatprep.subr.mxu0 0.0
        %2610 = vmatpush1.msra.mxu0 0.0
        %2611 = vmatprep.subr.mxu0 0.0
        %2612 = vmatpush1.msra.mxu0 0.0
        %2613 = vmatprep.subr.mxu0 0.0
        %2614 = vmatpush1.msra.mxu0 0.0
        %2615 = vmatprep.subr.mxu0 0.0
        %2616 = vmatpush1.msra.mxu0 0.0
        %2617 = vmatprep.subr.mxu0 0.0
        %2618 = vmatpush1.msra.mxu0 0.0
        %2619 = vmatprep.subr.mxu0 0.0
        %2620 = vmatpush1.msra.mxu0 0.0
        %2621 = vmatprep.subr.mxu0 0.0
        %2622 = vmatpush1.msra.mxu0 0.0
        %2623 = vmatprep.subr.mxu0 0.0
        %2624 = vmatpush1.msra.mxu0 0.0
        %2625 = vmatprep.subr.mxu0 0.0
        %2626 = vmatpush1.msra.mxu0 0.0
        %2627 = vmatprep.subr.mxu0 0.0
        %2628 = vmatpush1.msra.mxu0 0.0
        %2629 = vmatprep.subr.mxu0 0.0
        %2630 = vmatpush1.msra.mxu0 0.0
        %2631 = vmatprep.subr.mxu0 0.0
        %2632 = vmatpush1.msra.mxu0 0.0
        %2633 = vmatprep.subr.mxu0 0.0
        %2634 = vmatpush1.msra.mxu0 0.0
        %2635 = vmatprep.subr.mxu0 0.0
        %2636 = vmatpush1.msra.mxu0 0.0
        %2637 = vmatprep.subr.mxu0 0.0
        %2638 = vmatpush1.msra.mxu0 0.0
        %2639 = vmatprep.subr.mxu0 0.0
        %2640 = vmatpush1.msra.mxu0 0.0
        %2641 = vmatprep.subr.mxu0 0.0
        %2642 = vmatpush1.msra.mxu0 0.0
        %2643 = vmatprep.subr.mxu0 0.0
        %2644 = vmatpush1.msra.mxu0 0.0
        %2645 = vmatprep.subr.mxu0 0.0
        %2646 = vmatpush1.msra.mxu0 0.0
        %2647 = vmatprep.mubr.f32.mxu0 0.0
        %2648 = vmatmul.mubr.f32.gmra.mrb[0].mxu0 %v2581
        %v2649 = vpop.f32.mrb[0].mxu0
        %v2650 = vadd.f32 %v2579, %v2649
        %v2651 = vpop.f32.mrb[0].mxu0
        %2652 = vdwg.mxu0
        %2657 = vrot.lane.b32.xlu0 %v2572, 96
        %v2658 = vpop.permute.xlu0 %2657
        %2659 = vrot.lane.b32.xlu0 %v2573, 96
        %v2660 = vpop.permute.xlu0 %2659
        %2661 = vrot.lane.b32.xlu0 %v2574, 96
        %v2662 = vpop.permute.xlu0 %2661
        %2663 = vrot.lane.b32.xlu0 %v2575, 96
        %v2664 = vpop.permute.xlu0 %2663
        %2670 = vrot.lane.b32.xlu0 %v2579, 96
        %v2671 = vpop.permute.xlu0 %2670
        %2673 = vmatprep.subr.mxu0 0.0
        %2674 = vmatpush1.msra.mxu0 %v2658
        %2675 = vmatprep.subr.mxu0 0.0
        %2676 = vmatpush1.msra.mxu0 %v2660
        %2677 = vmatprep.subr.mxu0 0.0
        %2678 = vmatpush1.msra.mxu0 %v2662
        %2679 = vmatprep.subr.mxu0 0.0
        %2680 = vmatpush1.msra.mxu0 %v2664
        %2681 = vmatprep.subr.mxu0 0.0
        %2682 = vmatpush1.msra.mxu0 0.0
        %2683 = vmatprep.subr.mxu0 0.0
        %2684 = vmatpush1.msra.mxu0 0.0
        %2685 = vmatprep.subr.mxu0 0.0
        %2686 = vmatpush1.msra.mxu0 0.0
        %2687 = vmatprep.subr.mxu0 0.0
        %2688 = vmatpush1.msra.mxu0 0.0
        %2689 = vmatprep.subr.mxu0 0.0
        %2690 = vmatpush1.msra.mxu0 0.0
        %2691 = vmatprep.subr.mxu0 0.0
        %2692 = vmatpush1.msra.mxu0 0.0
        %2693 = vmatprep.subr.mxu0 0.0
        %2694 = vmatpush1.msra.mxu0 0.0
        %2695 = vmatprep.subr.mxu0 0.0
        %2696 = vmatpush1.msra.mxu0 0.0
        %2697 = vmatprep.subr.mxu0 0.0
        %2698 = vmatpush1.msra.mxu0 0.0
        %2699 = vmatprep.subr.mxu0 0.0
        %2700 = vmatpush1.msra.mxu0 0.0
        %2701 = vmatprep.subr.mxu0 0.0
        %2702 = vmatpush1.msra.mxu0 0.0
        %2703 = vmatprep.subr.mxu0 0.0
        %2704 = vmatpush1.msra.mxu0 0.0
        %2705 = vmatprep.subr.mxu0 0.0
        %2706 = vmatpush1.msra.mxu0 0.0
        %2707 = vmatprep.subr.mxu0 0.0
        %2708 = vmatpush1.msra.mxu0 0.0
        %2709 = vmatprep.subr.mxu0 0.0
        %2710 = vmatpush1.msra.mxu0 0.0
        %2711 = vmatprep.subr.mxu0 0.0
        %2712 = vmatpush1.msra.mxu0 0.0
        %2713 = vmatprep.subr.mxu0 0.0
        %2714 = vmatpush1.msra.mxu0 0.0
        %2715 = vmatprep.subr.mxu0 0.0
        %2716 = vmatpush1.msra.mxu0 0.0
        %2717 = vmatprep.subr.mxu0 0.0
        %2718 = vmatpush1.msra.mxu0 0.0
        %2719 = vmatprep.subr.mxu0 0.0
        %2720 = vmatpush1.msra.mxu0 0.0
        %2721 = vmatprep.subr.mxu0 0.0
        %2722 = vmatpush1.msra.mxu0 0.0
        %2723 = vmatprep.subr.mxu0 0.0
        %2724 = vmatpush1.msra.mxu0 0.0
        %2725 = vmatprep.subr.mxu0 0.0
        %2726 = vmatpush1.msra.mxu0 0.0
        %2727 = vmatprep.subr.mxu0 0.0
        %2728 = vmatpush1.msra.mxu0 0.0
        %2729 = vmatprep.subr.mxu0 0.0
        %2730 = vmatpush1.msra.mxu0 0.0
        %2731 = vmatprep.subr.mxu0 0.0
        %2732 = vmatpush1.msra.mxu0 0.0
        %2733 = vmatprep.subr.mxu0 0.0
        %2734 = vmatpush1.msra.mxu0 0.0
        %2735 = vmatprep.subr.mxu0 0.0
        %2736 = vmatpush1.msra.mxu0 0.0
        %2737 = vmatprep.mubr.f32.mxu0 0.0
        %2738 = vmatmul.mubr.f32.gmra.mrb[0].mxu0 %v2581
        %v2739 = vpop.f32.mrb[0].mxu0
        %v2740 = vadd.f32 %v2671, %v2739
        %v2741 = vpop.f32.mrb[0].mxu0
        %2742 = vdwg.mxu0
        %v2744 = vsel %vm625, %v2650, 0
        %v2747 = vsel %vm625, %v2740, 0
        %2749 = vmatprep.subr.mxu0 0.0
        %2750 = vmatpush1.xpose.msra.mxu0 %v2747
        %2751 = vmatprep.subr.mxu0 0.0
        %2752 = vmatpush1.xpose.msra.mxu0 0.0
        %2753 = vmatprep.subr.mxu0 0.0
        %2754 = vmatpush1.xpose.msra.mxu0 0.0
        %2755 = vmatprep.subr.mxu0 0.0
        %2756 = vmatpush1.xpose.msra.mxu0 0.0
        %2757 = vmatprep.subr.mxu0 0.0
        %2758 = vmatpush1.xpose.msra.mxu0 0.0
        %2759 = vmatprep.subr.mxu0 0.0
        %2760 = vmatpush1.xpose.msra.mxu0 0.0
        %2761 = vmatprep.subr.mxu0 0.0
        %2762 = vmatpush1.xpose.msra.mxu0 0.0
        %2763 = vmatprep.subr.mxu0 0.0
        %2764 = vmatpush1.xpose.msra.mxu0 0.0
        %2765 = vmatprep.subr.mxu0 0.0
        %2766 = vmatpush1.xpose.msra.mxu0 0.0
        %2767 = vmatprep.subr.mxu0 0.0
        %2768 = vmatpush1.xpose.msra.mxu0 0.0
        %2769 = vmatprep.subr.mxu0 0.0
        %2770 = vmatpush1.xpose.msra.mxu0 0.0
        %2771 = vmatprep.subr.mxu0 0.0
        %2772 = vmatpush1.xpose.msra.mxu0 0.0
        %2773 = vmatprep.subr.mxu0 0.0
        %2774 = vmatpush1.xpose.msra.mxu0 0.0
        %2775 = vmatprep.subr.mxu0 0.0
        %2776 = vmatpush1.xpose.msra.mxu0 0.0
        %2777 = vmatprep.subr.mxu0 0.0
        %2778 = vmatpush1.xpose.msra.mxu0 0.0
        %2779 = vmatprep.subr.mxu0 0.0
        %2780 = vmatpush1.xpose.msra.mxu0 0.0
        %2781 = vmatprep.subr.mxu0 0.0
        %2782 = vmatpush1.xpose.msra.mxu0 0.0
        %2783 = vmatprep.subr.mxu0 0.0
        %2784 = vmatpush1.xpose.msra.mxu0 0.0
        %2785 = vmatprep.subr.mxu0 0.0
        %2786 = vmatpush1.xpose.msra.mxu0 0.0
        %2787 = vmatprep.subr.mxu0 0.0
        %2788 = vmatpush1.xpose.msra.mxu0 0.0
        %2789 = vmatprep.subr.mxu0 0.0
        %2790 = vmatpush1.xpose.msra.mxu0 0.0
        %2791 = vmatprep.subr.mxu0 0.0
        %2792 = vmatpush1.xpose.msra.mxu0 0.0
        %2793 = vmatprep.subr.mxu0 0.0
        %2794 = vmatpush1.xpose.msra.mxu0 0.0
        %2795 = vmatprep.subr.mxu0 0.0
        %2796 = vmatpush1.xpose.msra.mxu0 0.0
        %2797 = vmatprep.subr.mxu0 0.0
        %2798 = vmatpush1.xpose.msra.mxu0 0.0
        %2799 = vmatprep.subr.mxu0 0.0
        %2800 = vmatpush1.xpose.msra.mxu0 0.0
        %2801 = vmatprep.subr.mxu0 0.0
        %2802 = vmatpush1.xpose.msra.mxu0 0.0
        %2803 = vmatprep.subr.mxu0 0.0
        %2804 = vmatpush1.xpose.msra.mxu0 0.0
        %2805 = vmatprep.subr.mxu0 0.0
        %2806 = vmatpush1.xpose.msra.mxu0 0.0
        %2807 = vmatprep.subr.mxu0 0.0
        %2808 = vmatpush1.xpose.msra.mxu0 0.0
        %2809 = vmatprep.subr.mxu0 0.0
        %2810 = vmatpush1.xpose.msra.mxu0 0.0
        %2811 = vmatprep.subr.mxu0 0.0
        %2812 = vmatpush1.xpose.msra.mxu0 0.0
        %2813 = vmatprep.mubr.f32.mxu0 0.0
        %2814 = vmatmul.mubr.f32.gmra.mrb[0].mxu0 %v2744
        %v2815 = vpop.f32.mrb[0].mxu0
        %v2816 = vadd.f32 %v448, %v2815
        %v2817 = vpop.f32.mrb[0].mxu0
        %2818 = vdwg.mxu0
        %v2819 = vsel %vm625, %v2816, -inf
        %2820 = vmax.xlane.f32.xlu0 %v2819
        %v2821 = vpop.xlane.xlu0 %2820
        %v2822 = vsub.f32 %v2816, %v2821
        %v2823 = vmul.f32 %v2822, 1.442695
        %v2824 = vpow.pop %v2823
        %v2825 = vsel %vm625, %v2824, 0.0
        %2826 = vadd.xlane.f32.xlu0 %v2825
        %v2827 = vpop.xlane.xlu0 %2826
        %v2828 = vrcp.pop %v2827
        %v2829 = vmul.f32 %v2824, %v2828
        %2830 = vrot.lane.b32.xlu0 %v2740, 96
        %v2831 = vpop.permute.xlu0 %2830
        %v2834 = vsel %vm625, %v2829, 0
        %2836 = vmatprep.subr.mxu0 0.0
        %2837 = vmatpush1.msra.mxu0 %v2831
        %2838 = vmatprep.subr.mxu0 0.0
        %2839 = vmatpush1.msra.mxu0 0.0
        %2840 = vmatprep.subr.mxu0 0.0
        %2841 = vmatpush1.msra.mxu0 0.0
        %2842 = vmatprep.subr.mxu0 0.0
        %2843 = vmatpush1.msra.mxu0 0.0
        %2844 = vmatprep.subr.mxu0 0.0
        %2845 = vmatpush1.msra.mxu0 0.0
        %2846 = vmatprep.subr.mxu0 0.0
        %2847 = vmatpush1.msra.mxu0 0.0
        %2848 = vmatprep.subr.mxu0 0.0
        %2849 = vmatpush1.msra.mxu0 0.0
        %2850 = vmatprep.subr.mxu0 0.0
        %2851 = vmatpush1.msra.mxu0 0.0
        %2852 = vmatprep.subr.mxu0 0.0
        %2853 = vmatpush1.msra.mxu0 0.0
        %2854 = vmatprep.subr.mxu0 0.0
        %2855 = vmatpush1.msra.mxu0 0.0
        %2856 = vmatprep.subr.mxu0 0.0
        %2857 = vmatpush1.msra.mxu0 0.0
        %2858 = vmatprep.subr.mxu0 0.0
        %2859 = vmatpush1.msra.mxu0 0.0
        %2860 = vmatprep.subr.mxu0 0.0
        %2861 = vmatpush1.msra.mxu0 0.0
        %2862 = vmatprep.subr.mxu0 0.0
        %2863 = vmatpush1.msra.mxu0 0.0
        %2864 = vmatprep.subr.mxu0 0.0
        %2865 = vmatpush1.msra.mxu0 0.0
        %2866 = vmatprep.subr.mxu0 0.0
        %2867 = vmatpush1.msra.mxu0 0.0
        %2868 = vmatprep.subr.mxu0 0.0
        %2869 = vmatpush1.msra.mxu0 0.0
        %2870 = vmatprep.subr.mxu0 0.0
        %2871 = vmatpush1.msra.mxu0 0.0
        %2872 = vmatprep.subr.mxu0 0.0
        %2873 = vmatpush1.msra.mxu0 0.0
        %2874 = vmatprep.subr.mxu0 0.0
        %2875 = vmatpush1.msra.mxu0 0.0
        %2876 = vmatprep.subr.mxu0 0.0
        %2877 = vmatpush1.msra.mxu0 0.0
        %2878 = vmatprep.subr.mxu0 0.0
        %2879 = vmatpush1.msra.mxu0 0.0
        %2880 = vmatprep.subr.mxu0 0.0
        %2881 = vmatpush1.msra.mxu0 0.0
        %2882 = vmatprep.subr.mxu0 0.0
        %2883 = vmatpush1.msra.mxu0 0.0
        %2884 = vmatprep.subr.mxu0 0.0
        %2885 = vmatpush1.msra.mxu0 0.0
        %2886 = vmatprep.subr.mxu0 0.0
        %2887 = vmatpush1.msra.mxu0 0.0
        %2888 = vmatprep.subr.mxu0 0.0
        %2889 = vmatpush1.msra.mxu0 0.0
        %2890 = vmatprep.subr.mxu0 0.0
        %2891 = vmatpush1.msra.mxu0 0.0
        %2892 = vmatprep.subr.mxu0 0.0
        %2893 = vmatpush1.msra.mxu0 0.0
        %2894 = vmatprep.subr.mxu0 0.0
        %2895 = vmatpush1.msra.mxu0 0.0
        %2896 = vmatprep.subr.mxu0 0.0
        %2897 = vmatpush1.msra.mxu0 0.0
        %2898 = vmatprep.subr.mxu0 0.0
        %2899 = vmatpush1.msra.mxu0 0.0
        %2900 = vmatprep.mubr.f32.mxu0 0.0
        %2901 = vmatmul.mubr.f32.gmra.mrb[0].mxu0 %v2834
        %v2902 = vpop.f32.mrb[0].mxu0
        %v2903 = vadd.f32 0.0, %v2902
        %v2904 = vpop.f32.mrb[0].mxu0
        %2905 = vdwg.mxu0
        %2906 = vrot.lane.b32.xlu0 %v2650, 120
        %v2907 = vpop.permute.xlu0 %2906
        %2908 = vrot.lane.b32.xlu0 %v2740, 120
        %v2909 = vpop.permute.xlu0 %2908
        %v2910 = vsel %vm625, %v2907, 0
        %v2912 = vsel %vm625, %v2909, 0
        %2914 = vmatprep.subr.mxu0 0.0
        %2915 = vmatpush1.xpose.msra.mxu0 %v2912
        %2916 = vmatprep.subr.mxu0 0.0
        %2917 = vmatpush1.xpose.msra.mxu0 0.0
        %2918 = vmatprep.subr.mxu0 0.0
        %2919 = vmatpush1.xpose.msra.mxu0 0.0
        %2920 = vmatprep.subr.mxu0 0.0
        %2921 = vmatpush1.xpose.msra.mxu0 0.0
        %2922 = vmatprep.subr.mxu0 0.0
        %2923 = vmatpush1.xpose.msra.mxu0 0.0
        %2924 = vmatprep.subr.mxu0 0.0
        %2925 = vmatpush1.xpose.msra.mxu0 0.0
        %2926 = vmatprep.subr.mxu0 0.0
        %2927 = vmatpush1.xpose.msra.mxu0 0.0
        %2928 = vmatprep.subr.mxu0 0.0
        %2929 = vmatpush1.xpose.msra.mxu0 0.0
        %2930 = vmatprep.subr.mxu0 0.0
        %2931 = vmatpush1.xpose.msra.mxu0 0.0
        %2932 = vmatprep.subr.mxu0 0.0
        %2933 = vmatpush1.xpose.msra.mxu0 0.0
        %2934 = vmatprep.subr.mxu0 0.0
        %2935 = vmatpush1.xpose.msra.mxu0 0.0
        %2936 = vmatprep.subr.mxu0 0.0
        %2937 = vmatpush1.xpose.msra.mxu0 0.0
        %2938 = vmatprep.subr.mxu0 0.0
        %2939 = vmatpush1.xpose.msra.mxu0 0.0
        %2940 = vmatprep.subr.mxu0 0.0
        %2941 = vmatpush1.xpose.msra.mxu0 0.0
        %2942 = vmatprep.subr.mxu0 0.0
        %2943 = vmatpush1.xpose.msra.mxu0 0.0
        %2944 = vmatprep.subr.mxu0 0.0
        %2945 = vmatpush1.xpose.msra.mxu0 0.0
        %2946 = vmatprep.subr.mxu0 0.0
        %2947 = vmatpush1.xpose.msra.mxu0 0.0
        %2948 = vmatprep.subr.mxu0 0.0
        %2949 = vmatpush1.xpose.msra.mxu0 0.0
        %2950 = vmatprep.subr.mxu0 0.0
        %2951 = vmatpush1.xpose.msra.mxu0 0.0
        %2952 = vmatprep.subr.mxu0 0.0
        %2953 = vmatpush1.xpose.msra.mxu0 0.0
        %2954 = vmatprep.subr.mxu0 0.0
        %2955 = vmatpush1.xpose.msra.mxu0 0.0
        %2956 = vmatprep.subr.mxu0 0.0
        %2957 = vmatpush1.xpose.msra.mxu0 0.0
        %2958 = vmatprep.subr.mxu0 0.0
        %2959 = vmatpush1.xpose.msra.mxu0 0.0
        %2960 = vmatprep.subr.mxu0 0.0
        %2961 = vmatpush1.xpose.msra.mxu0 0.0
        %2962 = vmatprep.subr.mxu0 0.0
        %2963 = vmatpush1.xpose.msra.mxu0 0.0
        %2964 = vmatprep.subr.mxu0 0.0
        %2965 = vmatpush1.xpose.msra.mxu0 0.0
        %2966 = vmatprep.subr.mxu0 0.0
        %2967 = vmatpush1.xpose.msra.mxu0 0.0
        %2968 = vmatprep.subr.mxu0 0.0
        %2969 = vmatpush1.xpose.msra.mxu0 0.0
        %2970 = vmatprep.subr.mxu0 0.0
        %2971 = vmatpush1.xpose.msra.mxu0 0.0
        %2972 = vmatprep.subr.mxu0 0.0
        %2973 = vmatpush1.xpose.msra.mxu0 0.0
        %2974 = vmatprep.subr.mxu0 0.0
        %2975 = vmatpush1.xpose.msra.mxu0 0.0
        %2976 = vmatprep.subr.mxu0 0.0
        %2977 = vmatpush1.xpose.msra.mxu0 0.0
        %2978 = vmatprep.mubr.f32.mxu0 0.0
        %2979 = vmatmul.mubr.f32.gmra.mrb[0].mxu0 %v2910
        %v2980 = vpop.f32.mrb[0].mxu0
        %v2981 = vadd.f32 %v448, %v2980
        %v2982 = vpop.f32.mrb[0].mxu0
        %2983 = vdwg.mxu0
        %v2984 = vsel %vm625, %v2981, -inf
        %2985 = vmax.xlane.f32.xlu0 %v2984
        %v2986 = vpop.xlane.xlu0 %2985
        %v2987 = vsub.f32 %v2981, %v2986
        %v2988 = vmul.f32 %v2987, 1.442695
        %v2989 = vpow.pop %v2988
        %v2990 = vsel %vm625, %v2989, 0.0
        %2991 = vadd.xlane.f32.xlu0 %v2990
        %v2992 = vpop.xlane.xlu0 %2991
        %v2993 = vrcp.pop %v2992
        %v2994 = vmul.f32 %v2989, %v2993
        %2995 = vrot.lane.b32.xlu0 %v2740, 88
        %v2996 = vpop.permute.xlu0 %2995
        %v2999 = vsel %vm625, %v2994, 0
        %3001 = vmatprep.subr.mxu0 0.0
        %3002 = vmatpush1.msra.mxu0 %v2996
        %3003 = vmatprep.subr.mxu0 0.0
        %3004 = vmatpush1.msra.mxu0 0.0
        %3005 = vmatprep.subr.mxu0 0.0
        %3006 = vmatpush1.msra.mxu0 0.0
        %3007 = vmatprep.subr.mxu0 0.0
        %3008 = vmatpush1.msra.mxu0 0.0
        %3009 = vmatprep.subr.mxu0 0.0
        %3010 = vmatpush1.msra.mxu0 0.0
        %3011 = vmatprep.subr.mxu0 0.0
        %3012 = vmatpush1.msra.mxu0 0.0
        %3013 = vmatprep.subr.mxu0 0.0
        %3014 = vmatpush1.msra.mxu0 0.0
        %3015 = vmatprep.subr.mxu0 0.0
        %3016 = vmatpush1.msra.mxu0 0.0
        %3017 = vmatprep.subr.mxu0 0.0
        %3018 = vmatpush1.msra.mxu0 0.0
        %3019 = vmatprep.subr.mxu0 0.0
        %3020 = vmatpush1.msra.mxu0 0.0
        %3021 = vmatprep.subr.mxu0 0.0
        %3022 = vmatpush1.msra.mxu0 0.0
        %3023 = vmatprep.subr.mxu0 0.0
        %3024 = vmatpush1.msra.mxu0 0.0
        %3025 = vmatprep.subr.mxu0 0.0
        %3026 = vmatpush1.msra.mxu0 0.0
        %3027 = vmatprep.subr.mxu0 0.0
        %3028 = vmatpush1.msra.mxu0 0.0
        %3029 = vmatprep.subr.mxu0 0.0
        %3030 = vmatpush1.msra.mxu0 0.0
        %3031 = vmatprep.subr.mxu0 0.0
        %3032 = vmatpush1.msra.mxu0 0.0
        %3033 = vmatprep.subr.mxu0 0.0
        %3034 = vmatpush1.msra.mxu0 0.0
        %3035 = vmatprep.subr.mxu0 0.0
        %3036 = vmatpush1.msra.mxu0 0.0
        %3037 = vmatprep.subr.mxu0 0.0
        %3038 = vmatpush1.msra.mxu0 0.0
        %3039 = vmatprep.subr.mxu0 0.0
        %3040 = vmatpush1.msra.mxu0 0.0
        %3041 = vmatprep.subr.mxu0 0.0
        %3042 = vmatpush1.msra.mxu0 0.0
        %3043 = vmatprep.subr.mxu0 0.0
        %3044 = vmatpush1.msra.mxu0 0.0
        %3045 = vmatprep.subr.mxu0 0.0
        %3046 = vmatpush1.msra.mxu0 0.0
        %3047 = vmatprep.subr.mxu0 0.0
        %3048 = vmatpush1.msra.mxu0 0.0
        %3049 = vmatprep.subr.mxu0 0.0
        %3050 = vmatpush1.msra.mxu0 0.0
        %3051 = vmatprep.subr.mxu0 0.0
        %3052 = vmatpush1.msra.mxu0 0.0
        %3053 = vmatprep.subr.mxu0 0.0
        %3054 = vmatpush1.msra.mxu0 0.0
        %3055 = vmatprep.subr.mxu0 0.0
        %3056 = vmatpush1.msra.mxu0 0.0
        %3057 = vmatprep.subr.mxu0 0.0
        %3058 = vmatpush1.msra.mxu0 0.0
        %3059 = vmatprep.subr.mxu0 0.0
        %3060 = vmatpush1.msra.mxu0 0.0
        %3061 = vmatprep.subr.mxu0 0.0
        %3062 = vmatpush1.msra.mxu0 0.0
        %3063 = vmatprep.subr.mxu0 0.0
        %3064 = vmatpush1.msra.mxu0 0.0
        %3065 = vmatprep.mubr.f32.mxu0 0.0
        %3066 = vmatmul.mubr.f32.gmra.mrb[0].mxu0 %v2999
        %v3067 = vpop.f32.mrb[0].mxu0
        %v3068 = vadd.f32 0.0, %v3067
        %v3069 = vpop.f32.mrb[0].mxu0
        %3070 = vdwg.mxu0
        %3071 = vrot.lane.b32.xlu0 %v2650, 112
        %v3072 = vpop.permute.xlu0 %3071
        %3073 = vrot.lane.b32.xlu0 %v2740, 112
        %v3074 = vpop.permute.xlu0 %3073
        %v3075 = vsel %vm625, %v3072, 0
        %v3077 = vsel %vm625, %v3074, 0
        %3079 = vmatprep.subr.mxu0 0.0
        %3080 = vmatpush1.xpose.msra.mxu0 %v3077
        %3081 = vmatprep.subr.mxu0 0.0
        %3082 = vmatpush1.xpose.msra.mxu0 0.0
        %3083 = vmatprep.subr.mxu0 0.0
        %3084 = vmatpush1.xpose.msra.mxu0 0.0
        %3085 = vmatprep.subr.mxu0 0.0
        %3086 = vmatpush1.xpose.msra.mxu0 0.0
        %3087 = vmatprep.subr.mxu0 0.0
        %3088 = vmatpush1.xpose.msra.mxu0 0.0
        %3089 = vmatprep.subr.mxu0 0.0
        %3090 = vmatpush1.xpose.msra.mxu0 0.0
        %3091 = vmatprep.subr.mxu0 0.0
        %3092 = vmatpush1.xpose.msra.mxu0 0.0
        %3093 = vmatprep.subr.mxu0 0.0
        %3094 = vmatpush1.xpose.msra.mxu0 0.0
        %3095 = vmatprep.subr.mxu0 0.0
        %3096 = vmatpush1.xpose.msra.mxu0 0.0
        %3097 = vmatprep.subr.mxu0 0.0
        %3098 = vmatpush1.xpose.msra.mxu0 0.0
        %3099 = vmatprep.subr.mxu0 0.0
        %3100 = vmatpush1.xpose.msra.mxu0 0.0
        %3101 = vmatprep.subr.mxu0 0.0
        %3102 = vmatpush1.xpose.msra.mxu0 0.0
        %3103 = vmatprep.subr.mxu0 0.0
        %3104 = vmatpush1.xpose.msra.mxu0 0.0
        %3105 = vmatprep.subr.mxu0 0.0
        %3106 = vmatpush1.xpose.msra.mxu0 0.0
        %3107 = vmatprep.subr.mxu0 0.0
        %3108 = vmatpush1.xpose.msra.mxu0 0.0
        %3109 = vmatprep.subr.mxu0 0.0
        %3110 = vmatpush1.xpose.msra.mxu0 0.0
        %3111 = vmatprep.subr.mxu0 0.0
        %3112 = vmatpush1.xpose.msra.mxu0 0.0
        %3113 = vmatprep.subr.mxu0 0.0
        %3114 = vmatpush1.xpose.msra.mxu0 0.0
        %3115 = vmatprep.subr.mxu0 0.0
        %3116 = vmatpush1.xpose.msra.mxu0 0.0
        %3117 = vmatprep.subr.mxu0 0.0
        %3118 = vmatpush1.xpose.msra.mxu0 0.0
        %3119 = vmatprep.subr.mxu0 0.0
        %3120 = vmatpush1.xpose.msra.mxu0 0.0
        %3121 = vmatprep.subr.mxu0 0.0
        %3122 = vmatpush1.xpose.msra.mxu0 0.0
        %3123 = vmatprep.subr.mxu0 0.0
        %3124 = vmatpush1.xpose.msra.mxu0 0.0
        %3125 = vmatprep.subr.mxu0 0.0
        %3126 = vmatpush1.xpose.msra.mxu0 0.0
        %3127 = vmatprep.subr.mxu0 0.0
        %3128 = vmatpush1.xpose.msra.mxu0 0.0
        %3129 = vmatprep.subr.mxu0 0.0
        %3130 = vmatpush1.xpose.msra.mxu0 0.0
        %3131 = vmatprep.subr.mxu0 0.0
        %3132 = vmatpush1.xpose.msra.mxu0 0.0
        %3133 = vmatprep.subr.mxu0 0.0
        %3134 = vmatpush1.xpose.msra.mxu0 0.0
        %3135 = vmatprep.subr.mxu0 0.0
        %3136 = vmatpush1.xpose.msra.mxu0 0.0
        %3137 = vmatprep.subr.mxu0 0.0
        %3138 = vmatpush1.xpose.msra.mxu0 0.0
        %3139 = vmatprep.subr.mxu0 0.0
        %3140 = vmatpush1.xpose.msra.mxu0 0.0
        %3141 = vmatprep.subr.mxu0 0.0
        %3142 = vmatpush1.xpose.msra.mxu0 0.0
        %3143 = vmatprep.mubr.f32.mxu0 0.0
        %3144 = vmatmul.mubr.f32.gmra.mrb[0].mxu0 %v3075
        %v3145 = vpop.f32.mrb[0].mxu0
        %v3146 = vadd.f32 %v448, %v3145
        %v3147 = vpop.f32.mrb[0].mxu0
        %3148 = vdwg.mxu0
        %v3149 = vsel %vm625, %v3146, -inf
        %3150 = vmax.xlane.f32.xlu0 %v3149
        %v3151 = vpop.xlane.xlu0 %3150
        %v3152 = vsub.f32 %v3146, %v3151
        %v3153 = vmul.f32 %v3152, 1.442695
        %v3154 = vpow.pop %v3153
        %v3155 = vsel %vm625, %v3154, 0.0
        %3156 = vadd.xlane.f32.xlu0 %v3155
        %v3157 = vpop.xlane.xlu0 %3156
        %v3158 = vrcp.pop %v3157
        %v3159 = vmul.f32 %v3154, %v3158
        %3160 = vrot.lane.b32.xlu0 %v2740, 80
        %v3161 = vpop.permute.xlu0 %3160
        %v3164 = vsel %vm625, %v3159, 0
        %3166 = vmatprep.subr.mxu0 0.0
        %3167 = vmatpush1.msra.mxu0 %v3161
        %3168 = vmatprep.subr.mxu0 0.0
        %3169 = vmatpush1.msra.mxu0 0.0
        %3170 = vmatprep.subr.mxu0 0.0
        %3171 = vmatpush1.msra.mxu0 0.0
        %3172 = vmatprep.subr.mxu0 0.0
        %3173 = vmatpush1.msra.mxu0 0.0
        %3174 = vmatprep.subr.mxu0 0.0
        %3175 = vmatpush1.msra.mxu0 0.0
        %3176 = vmatprep.subr.mxu0 0.0
        %3177 = vmatpush1.msra.mxu0 0.0
        %3178 = vmatprep.subr.mxu0 0.0
        %3179 = vmatpush1.msra.mxu0 0.0
        %3180 = vmatprep.subr.mxu0 0.0
        %3181 = vmatpush1.msra.mxu0 0.0
        %3182 = vmatprep.subr.mxu0 0.0
        %3183 = vmatpush1.msra.mxu0 0.0
        %3184 = vmatprep.subr.mxu0 0.0
        %3185 = vmatpush1.msra.mxu0 0.0
        %3186 = vmatprep.subr.mxu0 0.0
        %3187 = vmatpush1.msra.mxu0 0.0
        %3188 = vmatprep.subr.mxu0 0.0
        %3189 = vmatpush1.msra.mxu0 0.0
        %3190 = vmatprep.subr.mxu0 0.0
        %3191 = vmatpush1.msra.mxu0 0.0
        %3192 = vmatprep.subr.mxu0 0.0
        %3193 = vmatpush1.msra.mxu0 0.0
        %3194 = vmatprep.subr.mxu0 0.0
        %3195 = vmatpush1.msra.mxu0 0.0
        %3196 = vmatprep.subr.mxu0 0.0
        %3197 = vmatpush1.msra.mxu0 0.0
        %3198 = vmatprep.subr.mxu0 0.0
        %3199 = vmatpush1.msra.mxu0 0.0
        %3200 = vmatprep.subr.mxu0 0.0
        %3201 = vmatpush1.msra.mxu0 0.0
        %3202 = vmatprep.subr.mxu0 0.0
        %3203 = vmatpush1.msra.mxu0 0.0
        %3204 = vmatprep.subr.mxu0 0.0
        %3205 = vmatpush1.msra.mxu0 0.0
        %3206 = vmatprep.subr.mxu0 0.0
        %3207 = vmatpush1.msra.mxu0 0.0
        %3208 = vmatprep.subr.mxu0 0.0
        %3209 = vmatpush1.msra.mxu0 0.0
        %3210 = vmatprep.subr.mxu0 0.0
        %3211 = vmatpush1.msra.mxu0 0.0
        %3212 = vmatprep.subr.mxu0 0.0
        %3213 = vmatpush1.msra.mxu0 0.0
        %3214 = vmatprep.subr.mxu0 0.0
        %3215 = vmatpush1.msra.mxu0 0.0
        %3216 = vmatprep.subr.mxu0 0.0
        %3217 = vmatpush1.msra.mxu0 0.0
        %3218 = vmatprep.subr.mxu0 0.0
        %3219 = vmatpush1.msra.mxu0 0.0
        %3220 = vmatprep.subr.mxu0 0.0
        %3221 = vmatpush1.msra.mxu0 0.0
        %3222 = vmatprep.subr.mxu0 0.0
        %3223 = vmatpush1.msra.mxu0 0.0
        %3224 = vmatprep.subr.mxu0 0.0
        %3225 = vmatpush1.msra.mxu0 0.0
        %3226 = vmatprep.subr.mxu0 0.0
        %3227 = vmatpush1.msra.mxu0 0.0
        %3228 = vmatprep.subr.mxu0 0.0
        %3229 = vmatpush1.msra.mxu0 0.0
        %3230 = vmatprep.mubr.f32.mxu0 0.0
        %3231 = vmatmul.mubr.f32.gmra.mrb[0].mxu0 %v3164
        %v3232 = vpop.f32.mrb[0].mxu0
        %v3233 = vadd.f32 0.0, %v3232
        %v3234 = vpop.f32.mrb[0].mxu0
        %3235 = vdwg.mxu0
        %3236 = vrot.lane.b32.xlu0 %v2650, 104
        %v3237 = vpop.permute.xlu0 %3236
        %3238 = vrot.lane.b32.xlu0 %v2740, 104
        %v3239 = vpop.permute.xlu0 %3238
        %v3240 = vsel %vm625, %v3237, 0
        %v3242 = vsel %vm625, %v3239, 0
        %3244 = vmatprep.subr.mxu0 0.0
        %3245 = vmatpush1.xpose.msra.mxu0 %v3242
        %3246 = vmatprep.subr.mxu0 0.0
        %3247 = vmatpush1.xpose.msra.mxu0 0.0
        %3248 = vmatprep.subr.mxu0 0.0
        %3249 = vmatpush1.xpose.msra.mxu0 0.0
        %3250 = vmatprep.subr.mxu0 0.0
        %3251 = vmatpush1.xpose.msra.mxu0 0.0
        %3252 = vmatprep.subr.mxu0 0.0
        %3253 = vmatpush1.xpose.msra.mxu0 0.0
        %3254 = vmatprep.subr.mxu0 0.0
        %3255 = vmatpush1.xpose.msra.mxu0 0.0
        %3256 = vmatprep.subr.mxu0 0.0
        %3257 = vmatpush1.xpose.msra.mxu0 0.0
        %3258 = vmatprep.subr.mxu0 0.0
        %3259 = vmatpush1.xpose.msra.mxu0 0.0
        %3260 = vmatprep.subr.mxu0 0.0
        %3261 = vmatpush1.xpose.msra.mxu0 0.0
        %3262 = vmatprep.subr.mxu0 0.0
        %3263 = vmatpush1.xpose.msra.mxu0 0.0
        %3264 = vmatprep.subr.mxu0 0.0
        %3265 = vmatpush1.xpose.msra.mxu0 0.0
        %3266 = vmatprep.subr.mxu0 0.0
        %3267 = vmatpush1.xpose.msra.mxu0 0.0
        %3268 = vmatprep.subr.mxu0 0.0
        %3269 = vmatpush1.xpose.msra.mxu0 0.0
        %3270 = vmatprep.subr.mxu0 0.0
        %3271 = vmatpush1.xpose.msra.mxu0 0.0
        %3272 = vmatprep.subr.mxu0 0.0
        %3273 = vmatpush1.xpose.msra.mxu0 0.0
        %3274 = vmatprep.subr.mxu0 0.0
        %3275 = vmatpush1.xpose.msra.mxu0 0.0
        %3276 = vmatprep.subr.mxu0 0.0
        %3277 = vmatpush1.xpose.msra.mxu0 0.0
        %3278 = vmatprep.subr.mxu0 0.0
        %3279 = vmatpush1.xpose.msra.mxu0 0.0
        %3280 = vmatprep.subr.mxu0 0.0
        %3281 = vmatpush1.xpose.msra.mxu0 0.0
        %3282 = vmatprep.subr.mxu0 0.0
        %3283 = vmatpush1.xpose.msra.mxu0 0.0
        %3284 = vmatprep.subr.mxu0 0.0
        %3285 = vmatpush1.xpose.msra.mxu0 0.0
        %3286 = vmatprep.subr.mxu0 0.0
        %3287 = vmatpush1.xpose.msra.mxu0 0.0
        %3288 = vmatprep.subr.mxu0 0.0
        %3289 = vmatpush1.xpose.msra.mxu0 0.0
        %3290 = vmatprep.subr.mxu0 0.0
        %3291 = vmatpush1.xpose.msra.mxu0 0.0
        %3292 = vmatprep.subr.mxu0 0.0
        %3293 = vmatpush1.xpose.msra.mxu0 0.0
        %3294 = vmatprep.subr.mxu0 0.0
        %3295 = vmatpush1.xpose.msra.mxu0 0.0
        %3296 = vmatprep.subr.mxu0 0.0
        %3297 = vmatpush1.xpose.msra.mxu0 0.0
        %3298 = vmatprep.subr.mxu0 0.0
        %3299 = vmatpush1.xpose.msra.mxu0 0.0
        %3300 = vmatprep.subr.mxu0 0.0
        %3301 = vmatpush1.xpose.msra.mxu0 0.0
        %3302 = vmatprep.subr.mxu0 0.0
        %3303 = vmatpush1.xpose.msra.mxu0 0.0
        %3304 = vmatprep.subr.mxu0 0.0
        %3305 = vmatpush1.xpose.msra.mxu0 0.0
        %3306 = vmatprep.subr.mxu0 0.0
        %3307 = vmatpush1.xpose.msra.mxu0 0.0
        %3308 = vmatprep.mubr.f32.mxu0 0.0
        %3309 = vmatmul.mubr.f32.gmra.mrb[0].mxu0 %v3240
        %v3310 = vpop.f32.mrb[0].mxu0
        %v3311 = vadd.f32 %v448, %v3310
        %v3312 = vpop.f32.mrb[0].mxu0
        %3313 = vdwg.mxu0
        %v3314 = vsel %vm625, %v3311, -inf
        %3315 = vmax.xlane.f32.xlu0 %v3314
        %v3316 = vpop.xlane.xlu0 %3315
        %v3317 = vsub.f32 %v3311, %v3316
        %v3318 = vmul.f32 %v3317, 1.442695
        %v3319 = vpow.pop %v3318
        %v3320 = vsel %vm625, %v3319, 0.0
        %3321 = vadd.xlane.f32.xlu0 %v3320
        %v3322 = vpop.xlane.xlu0 %3321
        %v3323 = vrcp.pop %v3322
        %v3324 = vmul.f32 %v3319, %v3323
        %3325 = vrot.lane.b32.xlu0 %v2740, 72
        %v3326 = vpop.permute.xlu0 %3325
        %v3329 = vsel %vm625, %v3324, 0
        %3331 = vmatprep.subr.mxu0 0.0
        %3332 = vmatpush1.msra.mxu0 %v3326
        %3333 = vmatprep.subr.mxu0 0.0
        %3334 = vmatpush1.msra.mxu0 0.0
        %3335 = vmatprep.subr.mxu0 0.0
        %3336 = vmatpush1.msra.mxu0 0.0
        %3337 = vmatprep.subr.mxu0 0.0
        %3338 = vmatpush1.msra.mxu0 0.0
        %3339 = vmatprep.subr.mxu0 0.0
        %3340 = vmatpush1.msra.mxu0 0.0
        %3341 = vmatprep.subr.mxu0 0.0
        %3342 = vmatpush1.msra.mxu0 0.0
        %3343 = vmatprep.subr.mxu0 0.0
        %3344 = vmatpush1.msra.mxu0 0.0
        %3345 = vmatprep.subr.mxu0 0.0
        %3346 = vmatpush1.msra.mxu0 0.0
        %3347 = vmatprep.subr.mxu0 0.0
        %3348 = vmatpush1.msra.mxu0 0.0
        %3349 = vmatprep.subr.mxu0 0.0
        %3350 = vmatpush1.msra.mxu0 0.0
        %3351 = vmatprep.subr.mxu0 0.0
        %3352 = vmatpush1.msra.mxu0 0.0
        %3353 = vmatprep.subr.mxu0 0.0
        %3354 = vmatpush1.msra.mxu0 0.0
        %3355 = vmatprep.subr.mxu0 0.0
        %3356 = vmatpush1.msra.mxu0 0.0
        %3357 = vmatprep.subr.mxu0 0.0
        %3358 = vmatpush1.msra.mxu0 0.0
        %3359 = vmatprep.subr.mxu0 0.0
        %3360 = vmatpush1.msra.mxu0 0.0
        %3361 = vmatprep.subr.mxu0 0.0
        %3362 = vmatpush1.msra.mxu0 0.0
        %3363 = vmatprep.subr.mxu0 0.0
        %3364 = vmatpush1.msra.mxu0 0.0
        %3365 = vmatprep.subr.mxu0 0.0
        %3366 = vmatpush1.msra.mxu0 0.0
        %3367 = vmatprep.subr.mxu0 0.0
        %3368 = vmatpush1.msra.mxu0 0.0
        %3369 = vmatprep.subr.mxu0 0.0
        %3370 = vmatpush1.msra.mxu0 0.0
        %3371 = vmatprep.subr.mxu0 0.0
        %3372 = vmatpush1.msra.mxu0 0.0
        %3373 = vmatprep.subr.mxu0 0.0
        %3374 = vmatpush1.msra.mxu0 0.0
        %3375 = vmatprep.subr.mxu0 0.0
        %3376 = vmatpush1.msra.mxu0 0.0
        %3377 = vmatprep.subr.mxu0 0.0
        %3378 = vmatpush1.msra.mxu0 0.0
        %3379 = vmatprep.subr.mxu0 0.0
        %3380 = vmatpush1.msra.mxu0 0.0
        %3381 = vmatprep.subr.mxu0 0.0
        %3382 = vmatpush1.msra.mxu0 0.0
        %3383 = vmatprep.subr.mxu0 0.0
        %3384 = vmatpush1.msra.mxu0 0.0
        %3385 = vmatprep.subr.mxu0 0.0
        %3386 = vmatpush1.msra.mxu0 0.0
        %3387 = vmatprep.subr.mxu0 0.0
        %3388 = vmatpush1.msra.mxu0 0.0
        %3389 = vmatprep.subr.mxu0 0.0
        %3390 = vmatpush1.msra.mxu0 0.0
        %3391 = vmatprep.subr.mxu0 0.0
        %3392 = vmatpush1.msra.mxu0 0.0
        %3393 = vmatprep.subr.mxu0 0.0
        %3394 = vmatpush1.msra.mxu0 0.0
        %3395 = vmatprep.mubr.f32.mxu0 0.0
        %3396 = vmatmul.mubr.f32.gmra.mrb[0].mxu0 %v3329
        %v3397 = vpop.f32.mrb[0].mxu0
        %v3398 = vadd.f32 0.0, %v3397
        %v3399 = vpop.f32.mrb[0].mxu0
        %3400 = vdwg.mxu0
        %3402 = vrot.lane.b32.xlu0 %v3068, 8
        %v3403 = vpop.permute.xlu0 %3402
        %3406 = vrot.lane.b32.xlu0 %v3233, 16
        %v3407 = vpop.permute.xlu0 %3406
        %3410 = vrot.lane.b32.xlu0 %v3398, 24
        %v3411 = vpop.permute.xlu0 %3410
        %v3413 = vsel %vm625, %v2903, %v3403
        %v3414 = vsel %vm1297, %v3413, %v3407
        %v3415 = vsel %vm1299, %v3414, %v3411
        %3416 = vrot.lane.b32.xlu0 %v2572, 32
        %v3417 = vpop.permute.xlu0 %3416
        %3418 = vrot.lane.b32.xlu0 %v2573, 32
        %v3419 = vpop.permute.xlu0 %3418
        %3420 = vrot.lane.b32.xlu0 %v2574, 32
        %v3421 = vpop.permute.xlu0 %3420
        %3422 = vrot.lane.b32.xlu0 %v2575, 32
        %v3423 = vpop.permute.xlu0 %3422
        %3428 = vrot.lane.b32.xlu0 %v2579, 32
        %v3429 = vpop.permute.xlu0 %3428
        %v3432 = vsel %vm461, %v3415, 0
        %3434 = vmatprep.subr.mxu0 0.0
        %3435 = vmatpush1.msra.mxu0 %v3417
        %3436 = vmatprep.subr.mxu0 0.0
        %3437 = vmatpush1.msra.mxu0 %v3419
        %3438 = vmatprep.subr.mxu0 0.0
        %3439 = vmatpush1.msra.mxu0 %v3421
        %3440 = vmatprep.subr.mxu0 0.0
        %3441 = vmatpush1.msra.mxu0 %v3423
        %3442 = vmatprep.subr.mxu0 0.0
        %3443 = vmatpush1.msra.mxu0 0.0
        %3444 = vmatprep.subr.mxu0 0.0
        %3445 = vmatpush1.msra.mxu0 0.0
        %3446 = vmatprep.subr.mxu0 0.0
        %3447 = vmatpush1.msra.mxu0 0.0
        %3448 = vmatprep.subr.mxu0 0.0
        %3449 = vmatpush1.msra.mxu0 0.0
        %3450 = vmatprep.subr.mxu0 0.0
        %3451 = vmatpush1.msra.mxu0 0.0
        %3452 = vmatprep.subr.mxu0 0.0
        %3453 = vmatpush1.msra.mxu0 0.0
        %3454 = vmatprep.subr.mxu0 0.0
        %3455 = vmatpush1.msra.mxu0 0.0
        %3456 = vmatprep.subr.mxu0 0.0
        %3457 = vmatpush1.msra.mxu0 0.0
        %3458 = vmatprep.subr.mxu0 0.0
        %3459 = vmatpush1.msra.mxu0 0.0
        %3460 = vmatprep.subr.mxu0 0.0
        %3461 = vmatpush1.msra.mxu0 0.0
        %3462 = vmatprep.subr.mxu0 0.0
        %3463 = vmatpush1.msra.mxu0 0.0
        %3464 = vmatprep.subr.mxu0 0.0
        %3465 = vmatpush1.msra.mxu0 0.0
        %3466 = vmatprep.subr.mxu0 0.0
        %3467 = vmatpush1.msra.mxu0 0.0
        %3468 = vmatprep.subr.mxu0 0.0
        %3469 = vmatpush1.msra.mxu0 0.0
        %3470 = vmatprep.subr.mxu0 0.0
        %3471 = vmatpush1.msra.mxu0 0.0
        %3472 = vmatprep.subr.mxu0 0.0
        %3473 = vmatpush1.msra.mxu0 0.0
        %3474 = vmatprep.subr.mxu0 0.0
        %3475 = vmatpush1.msra.mxu0 0.0
        %3476 = vmatprep.subr.mxu0 0.0
        %3477 = vmatpush1.msra.mxu0 0.0
        %3478 = vmatprep.subr.mxu0 0.0
        %3479 = vmatpush1.msra.mxu0 0.0
        %3480 = vmatprep.subr.mxu0 0.0
        %3481 = vmatpush1.msra.mxu0 0.0
        %3482 = vmatprep.subr.mxu0 0.0
        %3483 = vmatpush1.msra.mxu0 0.0
        %3484 = vmatprep.subr.mxu0 0.0
        %3485 = vmatpush1.msra.mxu0 0.0
        %3486 = vmatprep.subr.mxu0 0.0
        %3487 = vmatpush1.msra.mxu0 0.0
        %3488 = vmatprep.subr.mxu0 0.0
        %3489 = vmatpush1.msra.mxu0 0.0
        %3490 = vmatprep.subr.mxu0 0.0
        %3491 = vmatpush1.msra.mxu0 0.0
        %3492 = vmatprep.subr.mxu0 0.0
        %3493 = vmatpush1.msra.mxu0 0.0
        %3494 = vmatprep.subr.mxu0 0.0
        %3495 = vmatpush1.msra.mxu0 0.0
        %3496 = vmatprep.subr.mxu0 0.0
        %3497 = vmatpush1.msra.mxu0 0.0
        %3498 = vmatprep.mubr.f32.mxu0 0.0
        %3499 = vmatmul.mubr.f32.gmra.mrb[0].mxu0 %v3432
        %v3500 = vpop.f32.mrb[0].mxu0
        %v3501 = vadd.f32 %v3429, %v3500
        %v3502 = vpop.f32.mrb[0].mxu0
        %3503 = vdwg.mxu0
        %v3504 = vadd.f32 %v2568, %v3501
        %v3505 = vsel %vm461, %v3504, 0.0
        %3506 = vadd.xlane.f32.xlu0 %v3505
        %v3507 = vpop.xlane.xlu0 %3506
        %v3508 = vmul.f32 %v3507, %v1393
        %v3509 = vsub.f32 %v3504, %v3508
        %v3510 = vmul.f32 %v3509, %v3509
        %v3511 = vsel %vm461, %v3510, 0.0
        %3512 = vadd.xlane.f32.xlu0 %v3511
        %v3513 = vpop.xlane.xlu0 %3512
        %v3514 = vmul.f32 %v3513, %v1393
        %v3515 = vadd.f32 %v3514, 1e-05
        %v3516 = vrsqrt.pop %v3515
        %v3517 = vmul.f32 %v3509, %v3516
        %v3518 = vlaneseq
        %v3519 = vshrl.u32 %v3518, 7
        %v3520 = vsub.s32 2, %v3519
        %v3521 = vrot.slane %v2570, %v3520
        %v3522 = vmul.f32 %v3517, %v3521
        %3524 = vrot.lane.b32.xlu0 %v3521, 96
        %v3525 = vpop.permute.xlu0 %3524
        %v3527 = vadd.f32 %v3522, %v3525
        %s3528 = scalar_lea.vmem %s4, 96
        %v3529 = vld [vmem:[%s3528] sm:$0xff]
        %v3530 = vld [vmem:[%s3528 + $0x8] sm:$0xff]
        %v3531 = vld [vmem:[%s3528 + $0x10] sm:$0xff]
        %v3532 = vld [vmem:[%s3528 + $0x18] sm:$0xff]
        %v3533 = vlaneseq
        %v3534 = vshrl.u32 %v3533, 7
        %v3535 = vsub.s32 1, %v3534
        %v3536 = vrot.slane %v2570, %v3535
        %v3538 = vsel %vm461, %v3527, 0
        %3540 = vmatprep.subr.mxu0 0.0
        %3541 = vmatpush1.msra.mxu0 %v3529
        %3542 = vmatprep.subr.mxu0 0.0
        %3543 = vmatpush1.msra.mxu0 %v3530
        %3544 = vmatprep.subr.mxu0 0.0
        %3545 = vmatpush1.msra.mxu0 %v3531
        %3546 = vmatprep.subr.mxu0 0.0
        %3547 = vmatpush1.msra.mxu0 %v3532
        %3548 = vmatprep.subr.mxu0 0.0
        %3549 = vmatpush1.msra.mxu0 0.0
        %3550 = vmatprep.subr.mxu0 0.0
        %3551 = vmatpush1.msra.mxu0 0.0
        %3552 = vmatprep.subr.mxu0 0.0
        %3553 = vmatpush1.msra.mxu0 0.0
        %3554 = vmatprep.subr.mxu0 0.0
        %3555 = vmatpush1.msra.mxu0 0.0
        %3556 = vmatprep.subr.mxu0 0.0
        %3557 = vmatpush1.msra.mxu0 0.0
        %3558 = vmatprep.subr.mxu0 0.0
        %3559 = vmatpush1.msra.mxu0 0.0
        %3560 = vmatprep.subr.mxu0 0.0
        %3561 = vmatpush1.msra.mxu0 0.0
        %3562 = vmatprep.subr.mxu0 0.0
        %3563 = vmatpush1.msra.mxu0 0.0
        %3564 = vmatprep.subr.mxu0 0.0
        %3565 = vmatpush1.msra.mxu0 0.0
        %3566 = vmatprep.subr.mxu0 0.0
        %3567 = vmatpush1.msra.mxu0 0.0
        %3568 = vmatprep.subr.mxu0 0.0
        %3569 = vmatpush1.msra.mxu0 0.0
        %3570 = vmatprep.subr.mxu0 0.0
        %3571 = vmatpush1.msra.mxu0 0.0
        %3572 = vmatprep.subr.mxu0 0.0
        %3573 = vmatpush1.msra.mxu0 0.0
        %3574 = vmatprep.subr.mxu0 0.0
        %3575 = vmatpush1.msra.mxu0 0.0
        %3576 = vmatprep.subr.mxu0 0.0
        %3577 = vmatpush1.msra.mxu0 0.0
        %3578 = vmatprep.subr.mxu0 0.0
        %3579 = vmatpush1.msra.mxu0 0.0
        %3580 = vmatprep.subr.mxu0 0.0
        %3581 = vmatpush1.msra.mxu0 0.0
        %3582 = vmatprep.subr.mxu0 0.0
        %3583 = vmatpush1.msra.mxu0 0.0
        %3584 = vmatprep.subr.mxu0 0.0
        %3585 = vmatpush1.msra.mxu0 0.0
        %3586 = vmatprep.subr.mxu0 0.0
        %3587 = vmatpush1.msra.mxu0 0.0
        %3588 = vmatprep.subr.mxu0 0.0
        %3589 = vmatpush1.msra.mxu0 0.0
        %3590 = vmatprep.subr.mxu0 0.0
        %3591 = vmatpush1.msra.mxu0 0.0
        %3592 = vmatprep.subr.mxu0 0.0
        %3593 = vmatpush1.msra.mxu0 0.0
        %3594 = vmatprep.subr.mxu0 0.0
        %3595 = vmatpush1.msra.mxu0 0.0
        %3596 = vmatprep.subr.mxu0 0.0
        %3597 = vmatpush1.msra.mxu0 0.0
        %3598 = vmatprep.subr.mxu0 0.0
        %3599 = vmatpush1.msra.mxu0 0.0
        %3600 = vmatprep.subr.mxu0 0.0
        %3601 = vmatpush1.msra.mxu0 0.0
        %3602 = vmatprep.subr.mxu0 0.0
        %3603 = vmatpush1.msra.mxu0 0.0
        %3604 = vmatprep.mubr.f32.mxu0 0.0
        %3605 = vmatmul.mubr.f32.gmra.mrb[0].mxu0 %v3538
        %v3606 = vpop.f32.mrb[0].mxu0
        %v3607 = vadd.f32 %v3536, %v3606
        %v3608 = vpop.f32.mrb[0].mxu0
        %3609 = vdwg.mxu0
        %3614 = vrot.lane.b32.xlu0 %v3529, 96
        %v3615 = vpop.permute.xlu0 %3614
        %3616 = vrot.lane.b32.xlu0 %v3530, 96
        %v3617 = vpop.permute.xlu0 %3616
        %3618 = vrot.lane.b32.xlu0 %v3531, 96
        %v3619 = vpop.permute.xlu0 %3618
        %3620 = vrot.lane.b32.xlu0 %v3532, 96
        %v3621 = vpop.permute.xlu0 %3620
        %3627 = vrot.lane.b32.xlu0 %v3536, 96
        %v3628 = vpop.permute.xlu0 %3627
        %3630 = vmatprep.subr.mxu0 0.0
        %3631 = vmatpush1.msra.mxu0 %v3615
        %3632 = vmatprep.subr.mxu0 0.0
        %3633 = vmatpush1.msra.mxu0 %v3617
        %3634 = vmatprep.subr.mxu0 0.0
        %3635 = vmatpush1.msra.mxu0 %v3619
        %3636 = vmatprep.subr.mxu0 0.0
        %3637 = vmatpush1.msra.mxu0 %v3621
        %3638 = vmatprep.subr.mxu0 0.0
        %3639 = vmatpush1.msra.mxu0 0.0
        %3640 = vmatprep.subr.mxu0 0.0
        %3641 = vmatpush1.msra.mxu0 0.0
        %3642 = vmatprep.subr.mxu0 0.0
        %3643 = vmatpush1.msra.mxu0 0.0
        %3644 = vmatprep.subr.mxu0 0.0
        %3645 = vmatpush1.msra.mxu0 0.0
        %3646 = vmatprep.subr.mxu0 0.0
        %3647 = vmatpush1.msra.mxu0 0.0
        %3648 = vmatprep.subr.mxu0 0.0
        %3649 = vmatpush1.msra.mxu0 0.0
        %3650 = vmatprep.subr.mxu0 0.0
        %3651 = vmatpush1.msra.mxu0 0.0
        %3652 = vmatprep.subr.mxu0 0.0
        %3653 = vmatpush1.msra.mxu0 0.0
        %3654 = vmatprep.subr.mxu0 0.0
        %3655 = vmatpush1.msra.mxu0 0.0
        %3656 = vmatprep.subr.mxu0 0.0
        %3657 = vmatpush1.msra.mxu0 0.0
        %3658 = vmatprep.subr.mxu0 0.0
        %3659 = vmatpush1.msra.mxu0 0.0
        %3660 = vmatprep.subr.mxu0 0.0
        %3661 = vmatpush1.msra.mxu0 0.0
        %3662 = vmatprep.subr.mxu0 0.0
        %3663 = vmatpush1.msra.mxu0 0.0
        %3664 = vmatprep.subr.mxu0 0.0
        %3665 = vmatpush1.msra.mxu0 0.0
        %3666 = vmatprep.subr.mxu0 0.0
        %3667 = vmatpush1.msra.mxu0 0.0
        %3668 = vmatprep.subr.mxu0 0.0
        %3669 = vmatpush1.msra.mxu0 0.0
        %3670 = vmatprep.subr.mxu0 0.0
        %3671 = vmatpush1.msra.mxu0 0.0
        %3672 = vmatprep.subr.mxu0 0.0
        %3673 = vmatpush1.msra.mxu0 0.0
        %3674 = vmatprep.subr.mxu0 0.0
        %3675 = vmatpush1.msra.mxu0 0.0
        %3676 = vmatprep.subr.mxu0 0.0
        %3677 = vmatpush1.msra.mxu0 0.0
        %3678 = vmatprep.subr.mxu0 0.0
        %3679 = vmatpush1.msra.mxu0 0.0
        %3680 = vmatprep.subr.mxu0 0.0
        %3681 = vmatpush1.msra.mxu0 0.0
        %3682 = vmatprep.subr.mxu0 0.0
        %3683 = vmatpush1.msra.mxu0 0.0
        %3684 = vmatprep.subr.mxu0 0.0
        %3685 = vmatpush1.msra.mxu0 0.0
        %3686 = vmatprep.subr.mxu0 0.0
        %3687 = vmatpush1.msra.mxu0 0.0
        %3688 = vmatprep.subr.mxu0 0.0
        %3689 = vmatpush1.msra.mxu0 0.0
        %3690 = vmatprep.subr.mxu0 0.0
        %3691 = vmatpush1.msra.mxu0 0.0
        %3692 = vmatprep.subr.mxu0 0.0
        %3693 = vmatpush1.msra.mxu0 0.0
        %3694 = vmatprep.mubr.f32.mxu0 0.0
        %3695 = vmatmul.mubr.f32.gmra.mrb[0].mxu0 %v1517
        %v3696 = vpop.f32.mrb[0].mxu0
        %v3697 = vadd.f32 %v3628, %v3696
        %v3698 = vpop.f32.mrb[0].mxu0
        %3699 = vdwg.mxu0
        %v3701 = vsel %vm625, %v3607, 0
        %v3704 = vsel %vm625, %v3697, 0
        %3706 = vmatprep.subr.mxu0 0.0
        %3707 = vmatpush1.xpose.msra.mxu0 %v3704
        %3708 = vmatprep.subr.mxu0 0.0
        %3709 = vmatpush1.xpose.msra.mxu0 0.0
        %3710 = vmatprep.subr.mxu0 0.0
        %3711 = vmatpush1.xpose.msra.mxu0 0.0
        %3712 = vmatprep.subr.mxu0 0.0
        %3713 = vmatpush1.xpose.msra.mxu0 0.0
        %3714 = vmatprep.subr.mxu0 0.0
        %3715 = vmatpush1.xpose.msra.mxu0 0.0
        %3716 = vmatprep.subr.mxu0 0.0
        %3717 = vmatpush1.xpose.msra.mxu0 0.0
        %3718 = vmatprep.subr.mxu0 0.0
        %3719 = vmatpush1.xpose.msra.mxu0 0.0
        %3720 = vmatprep.subr.mxu0 0.0
        %3721 = vmatpush1.xpose.msra.mxu0 0.0
        %3722 = vmatprep.subr.mxu0 0.0
        %3723 = vmatpush1.xpose.msra.mxu0 0.0
        %3724 = vmatprep.subr.mxu0 0.0
        %3725 = vmatpush1.xpose.msra.mxu0 0.0
        %3726 = vmatprep.subr.mxu0 0.0
        %3727 = vmatpush1.xpose.msra.mxu0 0.0
        %3728 = vmatprep.subr.mxu0 0.0
        %3729 = vmatpush1.xpose.msra.mxu0 0.0
        %3730 = vmatprep.subr.mxu0 0.0
        %3731 = vmatpush1.xpose.msra.mxu0 0.0
        %3732 = vmatprep.subr.mxu0 0.0
        %3733 = vmatpush1.xpose.msra.mxu0 0.0
        %3734 = vmatprep.subr.mxu0 0.0
        %3735 = vmatpush1.xpose.msra.mxu0 0.0
        %3736 = vmatprep.subr.mxu0 0.0
        %3737 = vmatpush1.xpose.msra.mxu0 0.0
        %3738 = vmatprep.subr.mxu0 0.0
        %3739 = vmatpush1.xpose.msra.mxu0 0.0
        %3740 = vmatprep.subr.mxu0 0.0
        %3741 = vmatpush1.xpose.msra.mxu0 0.0
        %3742 = vmatprep.subr.mxu0 0.0
        %3743 = vmatpush1.xpose.msra.mxu0 0.0
        %3744 = vmatprep.subr.mxu0 0.0
        %3745 = vmatpush1.xpose.msra.mxu0 0.0
        %3746 = vmatprep.subr.mxu0 0.0
        %3747 = vmatpush1.xpose.msra.mxu0 0.0
        %3748 = vmatprep.subr.mxu0 0.0
        %3749 = vmatpush1.xpose.msra.mxu0 0.0
        %3750 = vmatprep.subr.mxu0 0.0
        %3751 = vmatpush1.xpose.msra.mxu0 0.0
        %3752 = vmatprep.subr.mxu0 0.0
        %3753 = vmatpush1.xpose.msra.mxu0 0.0
        %3754 = vmatprep.subr.mxu0 0.0
        %3755 = vmatpush1.xpose.msra.mxu0 0.0
        %3756 = vmatprep.subr.mxu0 0.0
        %3757 = vmatpush1.xpose.msra.mxu0 0.0
        %3758 = vmatprep.subr.mxu0 0.0
        %3759 = vmatpush1.xpose.msra.mxu0 0.0
        %3760 = vmatprep.subr.mxu0 0.0
        %3761 = vmatpush1.xpose.msra.mxu0 0.0
        %3762 = vmatprep.subr.mxu0 0.0
        %3763 = vmatpush1.xpose.msra.mxu0 0.0
        %3764 = vmatprep.subr.mxu0 0.0
        %3765 = vmatpush1.xpose.msra.mxu0 0.0
        %3766 = vmatprep.subr.mxu0 0.0
        %3767 = vmatpush1.xpose.msra.mxu0 0.0
        %3768 = vmatprep.subr.mxu0 0.0
        %3769 = vmatpush1.xpose.msra.mxu0 0.0
        %3770 = vmatprep.mubr.f32.mxu0 0.0
        %3771 = vmatmul.mubr.f32.gmra.mrb[0].mxu0 %v3701
        %v3772 = vpop.f32.mrb[0].mxu0
        %v3773 = vadd.f32 %v1593, %v3772
        %v3774 = vpop.f32.mrb[0].mxu0
        %3775 = vdwg.mxu0
        %v3776 = vsel %vm625, %v3773, -inf
        %3777 = vmax.xlane.f32.xlu0 %v3776
        %v3778 = vpop.xlane.xlu0 %3777
        %v3779 = vsub.f32 %v3773, %v3778
        %v3780 = vmul.f32 %v3779, 1.442695
        %v3781 = vpow.pop %v3780
        %v3782 = vsel %vm625, %v3781, 0.0
        %3783 = vadd.xlane.f32.xlu0 %v3782
        %v3784 = vpop.xlane.xlu0 %3783
        %v3785 = vrcp.pop %v3784
        %v3786 = vmul.f32 %v3781, %v3785
        %3787 = vrot.lane.b32.xlu0 %v3697, 96
        %v3788 = vpop.permute.xlu0 %3787
        %v3791 = vsel %vm625, %v3786, 0
        %3793 = vmatprep.subr.mxu0 0.0
        %3794 = vmatpush1.msra.mxu0 %v3788
        %3795 = vmatprep.subr.mxu0 0.0
        %3796 = vmatpush1.msra.mxu0 0.0
        %3797 = vmatprep.subr.mxu0 0.0
        %3798 = vmatpush1.msra.mxu0 0.0
        %3799 = vmatprep.subr.mxu0 0.0
        %3800 = vmatpush1.msra.mxu0 0.0
        %3801 = vmatprep.subr.mxu0 0.0
        %3802 = vmatpush1.msra.mxu0 0.0
        %3803 = vmatprep.subr.mxu0 0.0
        %3804 = vmatpush1.msra.mxu0 0.0
        %3805 = vmatprep.subr.mxu0 0.0
        %3806 = vmatpush1.msra.mxu0 0.0
        %3807 = vmatprep.subr.mxu0 0.0
        %3808 = vmatpush1.msra.mxu0 0.0
        %3809 = vmatprep.subr.mxu0 0.0
        %3810 = vmatpush1.msra.mxu0 0.0
        %3811 = vmatprep.subr.mxu0 0.0
        %3812 = vmatpush1.msra.mxu0 0.0
        %3813 = vmatprep.subr.mxu0 0.0
        %3814 = vmatpush1.msra.mxu0 0.0
        %3815 = vmatprep.subr.mxu0 0.0
        %3816 = vmatpush1.msra.mxu0 0.0
        %3817 = vmatprep.subr.mxu0 0.0
        %3818 = vmatpush1.msra.mxu0 0.0
        %3819 = vmatprep.subr.mxu0 0.0
        %3820 = vmatpush1.msra.mxu0 0.0
        %3821 = vmatprep.subr.mxu0 0.0
        %3822 = vmatpush1.msra.mxu0 0.0
        %3823 = vmatprep.subr.mxu0 0.0
        %3824 = vmatpush1.msra.mxu0 0.0
        %3825 = vmatprep.subr.mxu0 0.0
        %3826 = vmatpush1.msra.mxu0 0.0
        %3827 = vmatprep.subr.mxu0 0.0
        %3828 = vmatpush1.msra.mxu0 0.0
        %3829 = vmatprep.subr.mxu0 0.0
        %3830 = vmatpush1.msra.mxu0 0.0
        %3831 = vmatprep.subr.mxu0 0.0
        %3832 = vmatpush1.msra.mxu0 0.0
        %3833 = vmatprep.subr.mxu0 0.0
        %3834 = vmatpush1.msra.mxu0 0.0
        %3835 = vmatprep.subr.mxu0 0.0
        %3836 = vmatpush1.msra.mxu0 0.0
        %3837 = vmatprep.subr.mxu0 0.0
        %3838 = vmatpush1.msra.mxu0 0.0
        %3839 = vmatprep.subr.mxu0 0.0
        %3840 = vmatpush1.msra.mxu0 0.0
        %3841 = vmatprep.subr.mxu0 0.0
        %3842 = vmatpush1.msra.mxu0 0.0
        %3843 = vmatprep.subr.mxu0 0.0
        %3844 = vmatpush1.msra.mxu0 0.0
        %3845 = vmatprep.subr.mxu0 0.0
        %3846 = vmatpush1.msra.mxu0 0.0
        %3847 = vmatprep.subr.mxu0 0.0
        %3848 = vmatpush1.msra.mxu0 0.0
        %3849 = vmatprep.subr.mxu0 0.0
        %3850 = vmatpush1.msra.mxu0 0.0
        %3851 = vmatprep.subr.mxu0 0.0
        %3852 = vmatpush1.msra.mxu0 0.0
        %3853 = vmatprep.subr.mxu0 0.0
        %3854 = vmatpush1.msra.mxu0 0.0
        %3855 = vmatprep.subr.mxu0 0.0
        %3856 = vmatpush1.msra.mxu0 0.0
        %3857 = vmatprep.mubr.f32.mxu0 0.0
        %3858 = vmatmul.mubr.f32.gmra.mrb[0].mxu0 %v3791
        %v3859 = vpop.f32.mrb[0].mxu0
        %v3860 = vadd.f32 0.0, %v3859
        %v3861 = vpop.f32.mrb[0].mxu0
        %3862 = vdwg.mxu0
        %3863 = vrot.lane.b32.xlu0 %v3607, 120
        %v3864 = vpop.permute.xlu0 %3863
        %3865 = vrot.lane.b32.xlu0 %v3697, 120
        %v3866 = vpop.permute.xlu0 %3865
        %v3867 = vsel %vm625, %v3864, 0
        %v3869 = vsel %vm625, %v3866, 0
        %3871 = vmatprep.subr.mxu0 0.0
        %3872 = vmatpush1.xpose.msra.mxu0 %v3869
        %3873 = vmatprep.subr.mxu0 0.0
        %3874 = vmatpush1.xpose.msra.mxu0 0.0
        %3875 = vmatprep.subr.mxu0 0.0
        %3876 = vmatpush1.xpose.msra.mxu0 0.0
        %3877 = vmatprep.subr.mxu0 0.0
        %3878 = vmatpush1.xpose.msra.mxu0 0.0
        %3879 = vmatprep.subr.mxu0 0.0
        %3880 = vmatpush1.xpose.msra.mxu0 0.0
        %3881 = vmatprep.subr.mxu0 0.0
        %3882 = vmatpush1.xpose.msra.mxu0 0.0
        %3883 = vmatprep.subr.mxu0 0.0
        %3884 = vmatpush1.xpose.msra.mxu0 0.0
        %3885 = vmatprep.subr.mxu0 0.0
        %3886 = vmatpush1.xpose.msra.mxu0 0.0
        %3887 = vmatprep.subr.mxu0 0.0
        %3888 = vmatpush1.xpose.msra.mxu0 0.0
        %3889 = vmatprep.subr.mxu0 0.0
        %3890 = vmatpush1.xpose.msra.mxu0 0.0
        %3891 = vmatprep.subr.mxu0 0.0
        %3892 = vmatpush1.xpose.msra.mxu0 0.0
        %3893 = vmatprep.subr.mxu0 0.0
        %3894 = vmatpush1.xpose.msra.mxu0 0.0
        %3895 = vmatprep.subr.mxu0 0.0
        %3896 = vmatpush1.xpose.msra.mxu0 0.0
        %3897 = vmatprep.subr.mxu0 0.0
        %3898 = vmatpush1.xpose.msra.mxu0 0.0
        %3899 = vmatprep.subr.mxu0 0.0
        %3900 = vmatpush1.xpose.msra.mxu0 0.0
        %3901 = vmatprep.subr.mxu0 0.0
        %3902 = vmatpush1.xpose.msra.mxu0 0.0
        %3903 = vmatprep.subr.mxu0 0.0
        %3904 = vmatpush1.xpose.msra.mxu0 0.0
        %3905 = vmatprep.subr.mxu0 0.0
        %3906 = vmatpush1.xpose.msra.mxu0 0.0
        %3907 = vmatprep.subr.mxu0 0.0
        %3908 = vmatpush1.xpose.msra.mxu0 0.0
        %3909 = vmatprep.subr.mxu0 0.0
        %3910 = vmatpush1.xpose.msra.mxu0 0.0
        %3911 = vmatprep.subr.mxu0 0.0
        %3912 = vmatpush1.xpose.msra.mxu0 0.0
        %3913 = vmatprep.subr.mxu0 0.0
        %3914 = vmatpush1.xpose.msra.mxu0 0.0
        %3915 = vmatprep.subr.mxu0 0.0
        %3916 = vmatpush1.xpose.msra.mxu0 0.0
        %3917 = vmatprep.subr.mxu0 0.0
        %3918 = vmatpush1.xpose.msra.mxu0 0.0
        %3919 = vmatprep.subr.mxu0 0.0
        %3920 = vmatpush1.xpose.msra.mxu0 0.0
        %3921 = vmatprep.subr.mxu0 0.0
        %3922 = vmatpush1.xpose.msra.mxu0 0.0
        %3923 = vmatprep.subr.mxu0 0.0
        %3924 = vmatpush1.xpose.msra.mxu0 0.0
        %3925 = vmatprep.subr.mxu0 0.0
        %3926 = vmatpush1.xpose.msra.mxu0 0.0
        %3927 = vmatprep.subr.mxu0 0.0
        %3928 = vmatpush1.xpose.msra.mxu0 0.0
        %3929 = vmatprep.subr.mxu0 0.0
        %3930 = vmatpush1.xpose.msra.mxu0 0.0
        %3931 = vmatprep.subr.mxu0 0.0
        %3932 = vmatpush1.xpose.msra.mxu0 0.0
        %3933 = vmatprep.subr.mxu0 0.0
        %3934 = vmatpush1.xpose.msra.mxu0 0.0
        %3935 = vmatprep.mubr.f32.mxu0 0.0
        %3936 = vmatmul.mubr.f32.gmra.mrb[0].mxu0 %v3867
        %v3937 = vpop.f32.mrb[0].mxu0
        %v3938 = vadd.f32 %v1593, %v3937
        %v3939 = vpop.f32.mrb[0].mxu0
        %3940 = vdwg.mxu0
        %v3941 = vsel %vm625, %v3938, -inf
        %3942 = vmax.xlane.f32.xlu0 %v3941
        %v3943 = vpop.xlane.xlu0 %3942
        %v3944 = vsub.f32 %v3938, %v3943
        %v3945 = vmul.f32 %v3944, 1.442695
        %v3946 = vpow.pop %v3945
        %v3947 = vsel %vm625, %v3946, 0.0
        %3948 = vadd.xlane.f32.xlu0 %v3947
        %v3949 = vpop.xlane.xlu0 %3948
        %v3950 = vrcp.pop %v3949
        %v3951 = vmul.f32 %v3946, %v3950
        %3952 = vrot.lane.b32.xlu0 %v3697, 88
        %v3953 = vpop.permute.xlu0 %3952
        %v3956 = vsel %vm625, %v3951, 0
        %3958 = vmatprep.subr.mxu0 0.0
        %3959 = vmatpush1.msra.mxu0 %v3953
        %3960 = vmatprep.subr.mxu0 0.0
        %3961 = vmatpush1.msra.mxu0 0.0
        %3962 = vmatprep.subr.mxu0 0.0
        %3963 = vmatpush1.msra.mxu0 0.0
        %3964 = vmatprep.subr.mxu0 0.0
        %3965 = vmatpush1.msra.mxu0 0.0
        %3966 = vmatprep.subr.mxu0 0.0
        %3967 = vmatpush1.msra.mxu0 0.0
        %3968 = vmatprep.subr.mxu0 0.0
        %3969 = vmatpush1.msra.mxu0 0.0
        %3970 = vmatprep.subr.mxu0 0.0
        %3971 = vmatpush1.msra.mxu0 0.0
        %3972 = vmatprep.subr.mxu0 0.0
        %3973 = vmatpush1.msra.mxu0 0.0
        %3974 = vmatprep.subr.mxu0 0.0
        %3975 = vmatpush1.msra.mxu0 0.0
        %3976 = vmatprep.subr.mxu0 0.0
        %3977 = vmatpush1.msra.mxu0 0.0
        %3978 = vmatprep.subr.mxu0 0.0
        %3979 = vmatpush1.msra.mxu0 0.0
        %3980 = vmatprep.subr.mxu0 0.0
        %3981 = vmatpush1.msra.mxu0 0.0
        %3982 = vmatprep.subr.mxu0 0.0
        %3983 = vmatpush1.msra.mxu0 0.0
        %3984 = vmatprep.subr.mxu0 0.0
        %3985 = vmatpush1.msra.mxu0 0.0
        %3986 = vmatprep.subr.mxu0 0.0
        %3987 = vmatpush1.msra.mxu0 0.0
        %3988 = vmatprep.subr.mxu0 0.0
        %3989 = vmatpush1.msra.mxu0 0.0
        %3990 = vmatprep.subr.mxu0 0.0
        %3991 = vmatpush1.msra.mxu0 0.0
        %3992 = vmatprep.subr.mxu0 0.0
        %3993 = vmatpush1.msra.mxu0 0.0
        %3994 = vmatprep.subr.mxu0 0.0
        %3995 = vmatpush1.msra.mxu0 0.0
        %3996 = vmatprep.subr.mxu0 0.0
        %3997 = vmatpush1.msra.mxu0 0.0
        %3998 = vmatprep.subr.mxu0 0.0
        %3999 = vmatpush1.msra.mxu0 0.0
        %4000 = vmatprep.subr.mxu0 0.0
        %4001 = vmatpush1.msra.mxu0 0.0
        %4002 = vmatprep.subr.mxu0 0.0
        %4003 = vmatpush1.msra.mxu0 0.0
        %4004 = vmatprep.subr.mxu0 0.0
        %4005 = vmatpush1.msra.mxu0 0.0
        %4006 = vmatprep.subr.mxu0 0.0
        %4007 = vmatpush1.msra.mxu0 0.0
        %4008 = vmatprep.subr.mxu0 0.0
        %4009 = vmatpush1.msra.mxu0 0.0
        %4010 = vmatprep.subr.mxu0 0.0
        %4011 = vmatpush1.msra.mxu0 0.0
        %4012 = vmatprep.subr.mxu0 0.0
        %4013 = vmatpush1.msra.mxu0 0.0
        %4014 = vmatprep.subr.mxu0 0.0
        %4015 = vmatpush1.msra.mxu0 0.0
        %4016 = vmatprep.subr.mxu0 0.0
        %4017 = vmatpush1.msra.mxu0 0.0
        %4018 = vmatprep.subr.mxu0 0.0
        %4019 = vmatpush1.msra.mxu0 0.0
        %4020 = vmatprep.subr.mxu0 0.0
        %4021 = vmatpush1.msra.mxu0 0.0
        %4022 = vmatprep.mubr.f32.mxu0 0.0
        %4023 = vmatmul.mubr.f32.gmra.mrb[0].mxu0 %v3956
        %v4024 = vpop.f32.mrb[0].mxu0
        %v4025 = vadd.f32 0.0, %v4024
        %v4026 = vpop.f32.mrb[0].mxu0
        %4027 = vdwg.mxu0
        %4028 = vrot.lane.b32.xlu0 %v3607, 112
        %v4029 = vpop.permute.xlu0 %4028
        %4030 = vrot.lane.b32.xlu0 %v3697, 112
        %v4031 = vpop.permute.xlu0 %4030
        %v4032 = vsel %vm625, %v4029, 0
        %v4034 = vsel %vm625, %v4031, 0
        %4036 = vmatprep.subr.mxu0 0.0
        %4037 = vmatpush1.xpose.msra.mxu0 %v4034
        %4038 = vmatprep.subr.mxu0 0.0
        %4039 = vmatpush1.xpose.msra.mxu0 0.0
        %4040 = vmatprep.subr.mxu0 0.0
        %4041 = vmatpush1.xpose.msra.mxu0 0.0
        %4042 = vmatprep.subr.mxu0 0.0
        %4043 = vmatpush1.xpose.msra.mxu0 0.0
        %4044 = vmatprep.subr.mxu0 0.0
        %4045 = vmatpush1.xpose.msra.mxu0 0.0
        %4046 = vmatprep.subr.mxu0 0.0
        %4047 = vmatpush1.xpose.msra.mxu0 0.0
        %4048 = vmatprep.subr.mxu0 0.0
        %4049 = vmatpush1.xpose.msra.mxu0 0.0
        %4050 = vmatprep.subr.mxu0 0.0
        %4051 = vmatpush1.xpose.msra.mxu0 0.0
        %4052 = vmatprep.subr.mxu0 0.0
        %4053 = vmatpush1.xpose.msra.mxu0 0.0
        %4054 = vmatprep.subr.mxu0 0.0
        %4055 = vmatpush1.xpose.msra.mxu0 0.0
        %4056 = vmatprep.subr.mxu0 0.0
        %4057 = vmatpush1.xpose.msra.mxu0 0.0
        %4058 = vmatprep.subr.mxu0 0.0
        %4059 = vmatpush1.xpose.msra.mxu0 0.0
        %4060 = vmatprep.subr.mxu0 0.0
        %4061 = vmatpush1.xpose.msra.mxu0 0.0
        %4062 = vmatprep.subr.mxu0 0.0
        %4063 = vmatpush1.xpose.msra.mxu0 0.0
        %4064 = vmatprep.subr.mxu0 0.0
        %4065 = vmatpush1.xpose.msra.mxu0 0.0
        %4066 = vmatprep.subr.mxu0 0.0
        %4067 = vmatpush1.xpose.msra.mxu0 0.0
        %4068 = vmatprep.subr.mxu0 0.0
        %4069 = vmatpush1.xpose.msra.mxu0 0.0
        %4070 = vmatprep.subr.mxu0 0.0
        %4071 = vmatpush1.xpose.msra.mxu0 0.0
        %4072 = vmatprep.subr.mxu0 0.0
        %4073 = vmatpush1.xpose.msra.mxu0 0.0
        %4074 = vmatprep.subr.mxu0 0.0
        %4075 = vmatpush1.xpose.msra.mxu0 0.0
        %4076 = vmatprep.subr.mxu0 0.0
        %4077 = vmatpush1.xpose.msra.mxu0 0.0
        %4078 = vmatprep.subr.mxu0 0.0
        %4079 = vmatpush1.xpose.msra.mxu0 0.0
        %4080 = vmatprep.subr.mxu0 0.0
        %4081 = vmatpush1.xpose.msra.mxu0 0.0
        %4082 = vmatprep.subr.mxu0 0.0
        %4083 = vmatpush1.xpose.msra.mxu0 0.0
        %4084 = vmatprep.subr.mxu0 0.0
        %4085 = vmatpush1.xpose.msra.mxu0 0.0
        %4086 = vmatprep.subr.mxu0 0.0
        %4087 = vmatpush1.xpose.msra.mxu0 0.0
        %4088 = vmatprep.subr.mxu0 0.0
        %4089 = vmatpush1.xpose.msra.mxu0 0.0
        %4090 = vmatprep.subr.mxu0 0.0
        %4091 = vmatpush1.xpose.msra.mxu0 0.0
        %4092 = vmatprep.subr.mxu0 0.0
        %4093 = vmatpush1.xpose.msra.mxu0 0.0
        %4094 = vmatprep.subr.mxu0 0.0
        %4095 = vmatpush1.xpose.msra.mxu0 0.0
        %4096 = vmatprep.subr.mxu0 0.0
        %4097 = vmatpush1.xpose.msra.mxu0 0.0
        %4098 = vmatprep.subr.mxu0 0.0
        %4099 = vmatpush1.xpose.msra.mxu0 0.0
        %4100 = vmatprep.mubr.f32.mxu0 0.0
        %4101 = vmatmul.mubr.f32.gmra.mrb[0].mxu0 %v4032
        %v4102 = vpop.f32.mrb[0].mxu0
        %v4103 = vadd.f32 %v1593, %v4102
        %v4104 = vpop.f32.mrb[0].mxu0
        %4105 = vdwg.mxu0
        %v4106 = vsel %vm625, %v4103, -inf
        %4107 = vmax.xlane.f32.xlu0 %v4106
        %v4108 = vpop.xlane.xlu0 %4107
        %v4109 = vsub.f32 %v4103, %v4108
        %v4110 = vmul.f32 %v4109, 1.442695
        %v4111 = vpow.pop %v4110
        %v4112 = vsel %vm625, %v4111, 0.0
        %4113 = vadd.xlane.f32.xlu0 %v4112
        %v4114 = vpop.xlane.xlu0 %4113
        %v4115 = vrcp.pop %v4114
        %v4116 = vmul.f32 %v4111, %v4115
        %4117 = vrot.lane.b32.xlu0 %v3697, 80
        %v4118 = vpop.permute.xlu0 %4117
        %v4121 = vsel %vm625, %v4116, 0
        %4123 = vmatprep.subr.mxu0 0.0
        %4124 = vmatpush1.msra.mxu0 %v4118
        %4125 = vmatprep.subr.mxu0 0.0
        %4126 = vmatpush1.msra.mxu0 0.0
        %4127 = vmatprep.subr.mxu0 0.0
        %4128 = vmatpush1.msra.mxu0 0.0
        %4129 = vmatprep.subr.mxu0 0.0
        %4130 = vmatpush1.msra.mxu0 0.0
        %4131 = vmatprep.subr.mxu0 0.0
        %4132 = vmatpush1.msra.mxu0 0.0
        %4133 = vmatprep.subr.mxu0 0.0
        %4134 = vmatpush1.msra.mxu0 0.0
        %4135 = vmatprep.subr.mxu0 0.0
        %4136 = vmatpush1.msra.mxu0 0.0
        %4137 = vmatprep.subr.mxu0 0.0
        %4138 = vmatpush1.msra.mxu0 0.0
        %4139 = vmatprep.subr.mxu0 0.0
        %4140 = vmatpush1.msra.mxu0 0.0
        %4141 = vmatprep.subr.mxu0 0.0
        %4142 = vmatpush1.msra.mxu0 0.0
        %4143 = vmatprep.subr.mxu0 0.0
        %4144 = vmatpush1.msra.mxu0 0.0
        %4145 = vmatprep.subr.mxu0 0.0
        %4146 = vmatpush1.msra.mxu0 0.0
        %4147 = vmatprep.subr.mxu0 0.0
        %4148 = vmatpush1.msra.mxu0 0.0
        %4149 = vmatprep.subr.mxu0 0.0
        %4150 = vmatpush1.msra.mxu0 0.0
        %4151 = vmatprep.subr.mxu0 0.0
        %4152 = vmatpush1.msra.mxu0 0.0
        %4153 = vmatprep.subr.mxu0 0.0
        %4154 = vmatpush1.msra.mxu0 0.0
        %4155 = vmatprep.subr.mxu0 0.0
        %4156 = vmatpush1.msra.mxu0 0.0
        %4157 = vmatprep.subr.mxu0 0.0
        %4158 = vmatpush1.msra.mxu0 0.0
        %4159 = vmatprep.subr.mxu0 0.0
        %4160 = vmatpush1.msra.mxu0 0.0
        %4161 = vmatprep.subr.mxu0 0.0
        %4162 = vmatpush1.msra.mxu0 0.0
        %4163 = vmatprep.subr.mxu0 0.0
        %4164 = vmatpush1.msra.mxu0 0.0
        %4165 = vmatprep.subr.mxu0 0.0
        %4166 = vmatpush1.msra.mxu0 0.0
        %4167 = vmatprep.subr.mxu0 0.0
        %4168 = vmatpush1.msra.mxu0 0.0
        %4169 = vmatprep.subr.mxu0 0.0
        %4170 = vmatpush1.msra.mxu0 0.0
        %4171 = vmatprep.subr.mxu0 0.0
        %4172 = vmatpush1.msra.mxu0 0.0
        %4173 = vmatprep.subr.mxu0 0.0
        %4174 = vmatpush1.msra.mxu0 0.0
        %4175 = vmatprep.subr.mxu0 0.0
        %4176 = vmatpush1.msra.mxu0 0.0
        %4177 = vmatprep.subr.mxu0 0.0
        %4178 = vmatpush1.msra.mxu0 0.0
        %4179 = vmatprep.subr.mxu0 0.0
        %4180 = vmatpush1.msra.mxu0 0.0
        %4181 = vmatprep.subr.mxu0 0.0
        %4182 = vmatpush1.msra.mxu0 0.0
        %4183 = vmatprep.subr.mxu0 0.0
        %4184 = vmatpush1.msra.mxu0 0.0
        %4185 = vmatprep.subr.mxu0 0.0
        %4186 = vmatpush1.msra.mxu0 0.0
        %4187 = vmatprep.mubr.f32.mxu0 0.0
        %4188 = vmatmul.mubr.f32.gmra.mrb[0].mxu0 %v4121
        %v4189 = vpop.f32.mrb[0].mxu0
        %v4190 = vadd.f32 0.0, %v4189
        %v4191 = vpop.f32.mrb[0].mxu0
        %4192 = vdwg.mxu0
        %4193 = vrot.lane.b32.xlu0 %v3607, 104
        %v4194 = vpop.permute.xlu0 %4193
        %4195 = vrot.lane.b32.xlu0 %v3697, 104
        %v4196 = vpop.permute.xlu0 %4195
        %v4197 = vsel %vm625, %v4194, 0
        %v4199 = vsel %vm625, %v4196, 0
        %4201 = vmatprep.subr.mxu0 0.0
        %4202 = vmatpush1.xpose.msra.mxu0 %v4199
        %4203 = vmatprep.subr.mxu0 0.0
        %4204 = vmatpush1.xpose.msra.mxu0 0.0
        %4205 = vmatprep.subr.mxu0 0.0
        %4206 = vmatpush1.xpose.msra.mxu0 0.0
        %4207 = vmatprep.subr.mxu0 0.0
        %4208 = vmatpush1.xpose.msra.mxu0 0.0
        %4209 = vmatprep.subr.mxu0 0.0
        %4210 = vmatpush1.xpose.msra.mxu0 0.0
        %4211 = vmatprep.subr.mxu0 0.0
        %4212 = vmatpush1.xpose.msra.mxu0 0.0
        %4213 = vmatprep.subr.mxu0 0.0
        %4214 = vmatpush1.xpose.msra.mxu0 0.0
        %4215 = vmatprep.subr.mxu0 0.0
        %4216 = vmatpush1.xpose.msra.mxu0 0.0
        %4217 = vmatprep.subr.mxu0 0.0
        %4218 = vmatpush1.xpose.msra.mxu0 0.0
        %4219 = vmatprep.subr.mxu0 0.0
        %4220 = vmatpush1.xpose.msra.mxu0 0.0
        %4221 = vmatprep.subr.mxu0 0.0
        %4222 = vmatpush1.xpose.msra.mxu0 0.0
        %4223 = vmatprep.subr.mxu0 0.0
        %4224 = vmatpush1.xpose.msra.mxu0 0.0
        %4225 = vmatprep.subr.mxu0 0.0
        %4226 = vmatpush1.xpose.msra.mxu0 0.0
        %4227 = vmatprep.subr.mxu0 0.0
        %4228 = vmatpush1.xpose.msra.mxu0 0.0
        %4229 = vmatprep.subr.mxu0 0.0
        %4230 = vmatpush1.xpose.msra.mxu0 0.0
        %4231 = vmatprep.subr.mxu0 0.0
        %4232 = vmatpush1.xpose.msra.mxu0 0.0
        %4233 = vmatprep.subr.mxu0 0.0
        %4234 = vmatpush1.xpose.msra.mxu0 0.0
        %4235 = vmatprep.subr.mxu0 0.0
        %4236 = vmatpush1.xpose.msra.mxu0 0.0
        %4237 = vmatprep.subr.mxu0 0.0
        %4238 = vmatpush1.xpose.msra.mxu0 0.0
        %4239 = vmatprep.subr.mxu0 0.0
        %4240 = vmatpush1.xpose.msra.mxu0 0.0
        %4241 = vmatprep.subr.mxu0 0.0
        %4242 = vmatpush1.xpose.msra.mxu0 0.0
        %4243 = vmatprep.subr.mxu0 0.0
        %4244 = vmatpush1.xpose.msra.mxu0 0.0
        %4245 = vmatprep.subr.mxu0 0.0
        %4246 = vmatpush1.xpose.msra.mxu0 0.0
        %4247 = vmatprep.subr.mxu0 0.0
        %4248 = vmatpush1.xpose.msra.mxu0 0.0
        %4249 = vmatprep.subr.mxu0 0.0
        %4250 = vmatpush1.xpose.msra.mxu0 0.0
        %4251 = vmatprep.subr.mxu0 0.0
        %4252 = vmatpush1.xpose.msra.mxu0 0.0
        %4253 = vmatprep.subr.mxu0 0.0
        %4254 = vmatpush1.xpose.msra.mxu0 0.0
        %4255 = vmatprep.subr.mxu0 0.0
        %4256 = vmatpush1.xpose.msra.mxu0 0.0
        %4257 = vmatprep.subr.mxu0 0.0
        %4258 = vmatpush1.xpose.msra.mxu0 0.0
        %4259 = vmatprep.subr.mxu0 0.0
        %4260 = vmatpush1.xpose.msra.mxu0 0.0
        %4261 = vmatprep.subr.mxu0 0.0
        %4262 = vmatpush1.xpose.msra.mxu0 0.0
        %4263 = vmatprep.subr.mxu0 0.0
        %4264 = vmatpush1.xpose.msra.mxu0 0.0
        %4265 = vmatprep.mubr.f32.mxu0 0.0
        %4266 = vmatmul.mubr.f32.gmra.mrb[0].mxu0 %v4197
        %v4267 = vpop.f32.mrb[0].mxu0
        %v4268 = vadd.f32 %v1593, %v4267
        %v4269 = vpop.f32.mrb[0].mxu0
        %4270 = vdwg.mxu0
        %v4271 = vsel %vm625, %v4268, -inf
        %4272 = vmax.xlane.f32.xlu0 %v4271
        %v4273 = vpop.xlane.xlu0 %4272
        %v4274 = vsub.f32 %v4268, %v4273
        %v4275 = vmul.f32 %v4274, 1.442695
        %v4276 = vpow.pop %v4275
        %v4277 = vsel %vm625, %v4276, 0.0
        %4278 = vadd.xlane.f32.xlu0 %v4277
        %v4279 = vpop.xlane.xlu0 %4278
        %v4280 = vrcp.pop %v4279
        %v4281 = vmul.f32 %v4276, %v4280
        %4282 = vrot.lane.b32.xlu0 %v3697, 72
        %v4283 = vpop.permute.xlu0 %4282
        %v4286 = vsel %vm625, %v4281, 0
        %4288 = vmatprep.subr.mxu0 0.0
        %4289 = vmatpush1.msra.mxu0 %v4283
        %4290 = vmatprep.subr.mxu0 0.0
        %4291 = vmatpush1.msra.mxu0 0.0
        %4292 = vmatprep.subr.mxu0 0.0
        %4293 = vmatpush1.msra.mxu0 0.0
        %4294 = vmatprep.subr.mxu0 0.0
        %4295 = vmatpush1.msra.mxu0 0.0
        %4296 = vmatprep.subr.mxu0 0.0
        %4297 = vmatpush1.msra.mxu0 0.0
        %4298 = vmatprep.subr.mxu0 0.0
        %4299 = vmatpush1.msra.mxu0 0.0
        %4300 = vmatprep.subr.mxu0 0.0
        %4301 = vmatpush1.msra.mxu0 0.0
        %4302 = vmatprep.subr.mxu0 0.0
        %4303 = vmatpush1.msra.mxu0 0.0
        %4304 = vmatprep.subr.mxu0 0.0
        %4305 = vmatpush1.msra.mxu0 0.0
        %4306 = vmatprep.subr.mxu0 0.0
        %4307 = vmatpush1.msra.mxu0 0.0
        %4308 = vmatprep.subr.mxu0 0.0
        %4309 = vmatpush1.msra.mxu0 0.0
        %4310 = vmatprep.subr.mxu0 0.0
        %4311 = vmatpush1.msra.mxu0 0.0
        %4312 = vmatprep.subr.mxu0 0.0
        %4313 = vmatpush1.msra.mxu0 0.0
        %4314 = vmatprep.subr.mxu0 0.0
        %4315 = vmatpush1.msra.mxu0 0.0
        %4316 = vmatprep.subr.mxu0 0.0
        %4317 = vmatpush1.msra.mxu0 0.0
        %4318 = vmatprep.subr.mxu0 0.0
        %4319 = vmatpush1.msra.mxu0 0.0
        %4320 = vmatprep.subr.mxu0 0.0
        %4321 = vmatpush1.msra.mxu0 0.0
        %4322 = vmatprep.subr.mxu0 0.0
        %4323 = vmatpush1.msra.mxu0 0.0
        %4324 = vmatprep.subr.mxu0 0.0
        %4325 = vmatpush1.msra.mxu0 0.0
        %4326 = vmatprep.subr.mxu0 0.0
        %4327 = vmatpush1.msra.mxu0 0.0
        %4328 = vmatprep.subr.mxu0 0.0
        %4329 = vmatpush1.msra.mxu0 0.0
        %4330 = vmatprep.subr.mxu0 0.0
        %4331 = vmatpush1.msra.mxu0 0.0
        %4332 = vmatprep.subr.mxu0 0.0
        %4333 = vmatpush1.msra.mxu0 0.0
        %4334 = vmatprep.subr.mxu0 0.0
        %4335 = vmatpush1.msra.mxu0 0.0
        %4336 = vmatprep.subr.mxu0 0.0
        %4337 = vmatpush1.msra.mxu0 0.0
        %4338 = vmatprep.subr.mxu0 0.0
        %4339 = vmatpush1.msra.mxu0 0.0
        %4340 = vmatprep.subr.mxu0 0.0
        %4341 = vmatpush1.msra.mxu0 0.0
        %4342 = vmatprep.subr.mxu0 0.0
        %4343 = vmatpush1.msra.mxu0 0.0
        %4344 = vmatprep.subr.mxu0 0.0
        %4345 = vmatpush1.msra.mxu0 0.0
        %4346 = vmatprep.subr.mxu0 0.0
        %4347 = vmatpush1.msra.mxu0 0.0
        %4348 = vmatprep.subr.mxu0 0.0
        %4349 = vmatpush1.msra.mxu0 0.0
        %4350 = vmatprep.subr.mxu0 0.0
        %4351 = vmatpush1.msra.mxu0 0.0
        %4352 = vmatprep.mubr.f32.mxu0 0.0
        %4353 = vmatmul.mubr.f32.gmra.mrb[0].mxu0 %v4286
        %v4354 = vpop.f32.mrb[0].mxu0
        %v4355 = vadd.f32 0.0, %v4354
        %v4356 = vpop.f32.mrb[0].mxu0
        %4357 = vdwg.mxu0
        %4359 = vrot.lane.b32.xlu0 %v4025, 8
        %v4360 = vpop.permute.xlu0 %4359
        %4363 = vrot.lane.b32.xlu0 %v4190, 16
        %v4364 = vpop.permute.xlu0 %4363
        %4367 = vrot.lane.b32.xlu0 %v4355, 24
        %v4368 = vpop.permute.xlu0 %4367
        %v4370 = vsel %vm625, %v3860, %v4360
        %v4371 = vsel %vm1297, %v4370, %v4364
        %v4372 = vsel %vm1299, %v4371, %v4368
        %4373 = vrot.lane.b32.xlu0 %v3529, 32
        %v4374 = vpop.permute.xlu0 %4373
        %4375 = vrot.lane.b32.xlu0 %v3530, 32
        %v4376 = vpop.permute.xlu0 %4375
        %4377 = vrot.lane.b32.xlu0 %v3531, 32
        %v4378 = vpop.permute.xlu0 %4377
        %4379 = vrot.lane.b32.xlu0 %v3532, 32
        %v4380 = vpop.permute.xlu0 %4379
        %4385 = vrot.lane.b32.xlu0 %v3536, 32
        %v4386 = vpop.permute.xlu0 %4385
        %v4389 = vsel %vm461, %v4372, 0
        %4391 = vmatprep.subr.mxu0 0.0
        %4392 = vmatpush1.msra.mxu0 %v4374
        %4393 = vmatprep.subr.mxu0 0.0
        %4394 = vmatpush1.msra.mxu0 %v4376
        %4395 = vmatprep.subr.mxu0 0.0
        %4396 = vmatpush1.msra.mxu0 %v4378
        %4397 = vmatprep.subr.mxu0 0.0
        %4398 = vmatpush1.msra.mxu0 %v4380
        %4399 = vmatprep.subr.mxu0 0.0
        %4400 = vmatpush1.msra.mxu0 0.0
        %4401 = vmatprep.subr.mxu0 0.0
        %4402 = vmatpush1.msra.mxu0 0.0
        %4403 = vmatprep.subr.mxu0 0.0
        %4404 = vmatpush1.msra.mxu0 0.0
        %4405 = vmatprep.subr.mxu0 0.0
        %4406 = vmatpush1.msra.mxu0 0.0
        %4407 = vmatprep.subr.mxu0 0.0
        %4408 = vmatpush1.msra.mxu0 0.0
        %4409 = vmatprep.subr.mxu0 0.0
        %4410 = vmatpush1.msra.mxu0 0.0
        %4411 = vmatprep.subr.mxu0 0.0
        %4412 = vmatpush1.msra.mxu0 0.0
        %4413 = vmatprep.subr.mxu0 0.0
        %4414 = vmatpush1.msra.mxu0 0.0
        %4415 = vmatprep.subr.mxu0 0.0
        %4416 = vmatpush1.msra.mxu0 0.0
        %4417 = vmatprep.subr.mxu0 0.0
        %4418 = vmatpush1.msra.mxu0 0.0
        %4419 = vmatprep.subr.mxu0 0.0
        %4420 = vmatpush1.msra.mxu0 0.0
        %4421 = vmatprep.subr.mxu0 0.0
        %4422 = vmatpush1.msra.mxu0 0.0
        %4423 = vmatprep.subr.mxu0 0.0
        %4424 = vmatpush1.msra.mxu0 0.0
        %4425 = vmatprep.subr.mxu0 0.0
        %4426 = vmatpush1.msra.mxu0 0.0
        %4427 = vmatprep.subr.mxu0 0.0
        %4428 = vmatpush1.msra.mxu0 0.0
        %4429 = vmatprep.subr.mxu0 0.0
        %4430 = vmatpush1.msra.mxu0 0.0
        %4431 = vmatprep.subr.mxu0 0.0
        %4432 = vmatpush1.msra.mxu0 0.0
        %4433 = vmatprep.subr.mxu0 0.0
        %4434 = vmatpush1.msra.mxu0 0.0
        %4435 = vmatprep.subr.mxu0 0.0
        %4436 = vmatpush1.msra.mxu0 0.0
        %4437 = vmatprep.subr.mxu0 0.0
        %4438 = vmatpush1.msra.mxu0 0.0
        %4439 = vmatprep.subr.mxu0 0.0
        %4440 = vmatpush1.msra.mxu0 0.0
        %4441 = vmatprep.subr.mxu0 0.0
        %4442 = vmatpush1.msra.mxu0 0.0
        %4443 = vmatprep.subr.mxu0 0.0
        %4444 = vmatpush1.msra.mxu0 0.0
        %4445 = vmatprep.subr.mxu0 0.0
        %4446 = vmatpush1.msra.mxu0 0.0
        %4447 = vmatprep.subr.mxu0 0.0
        %4448 = vmatpush1.msra.mxu0 0.0
        %4449 = vmatprep.subr.mxu0 0.0
        %4450 = vmatpush1.msra.mxu0 0.0
        %4451 = vmatprep.subr.mxu0 0.0
        %4452 = vmatpush1.msra.mxu0 0.0
        %4453 = vmatprep.subr.mxu0 0.0
        %4454 = vmatpush1.msra.mxu0 0.0
        %4455 = vmatprep.mubr.f32.mxu0 0.0
        %4456 = vmatmul.mubr.f32.gmra.mrb[0].mxu0 %v4389
        %v4457 = vpop.f32.mrb[0].mxu0
        %v4458 = vadd.f32 %v4386, %v4457
        %v4459 = vpop.f32.mrb[0].mxu0
        %4460 = vdwg.mxu0
        %4461 = vrot.lane.b32.xlu0 %v3951, 8
        %v4462 = vpop.permute.xlu0 %4461
        %4464 = vrot.lane.b32.xlu0 %v4116, 16
        %v4465 = vpop.permute.xlu0 %4464
        %4467 = vrot.lane.b32.xlu0 %v4281, 24
        %v4468 = vpop.permute.xlu0 %4467
        %v4470 = vsel %vm625, %v3786, %v4462
        %v4471 = vsel %vm1297, %v4470, %v4465
        %v4472 = vsel %vm1299, %v4471, %v4468
        %v4473 = vadd.f32 %v3527, %v4458
        %v4474 = vsel %vm461, %v4473, 0.0
        %4475 = vadd.xlane.f32.xlu0 %v4474
        %v4476 = vpop.xlane.xlu0 %4475
        %v4477 = vmul.f32 %v4476, %v1393
        %v4478 = vsub.f32 %v4473, %v4477
        %v4479 = vmul.f32 %v4478, %v4478
        %v4480 = vsel %vm461, %v4479, 0.0
        %4481 = vadd.xlane.f32.xlu0 %v4480
        %v4482 = vpop.xlane.xlu0 %4481
        %v4483 = vmul.f32 %v4482, %v1393
        %v4484 = vadd.f32 %v4483, 1e-05
        %v4485 = vrsqrt.pop %v4484
        %v4486 = vmul.f32 %v4478, %v4485
        %4487 = vrot.lane.b32.xlu0 %v3521, 64
        %v4488 = vpop.permute.xlu0 %4487
        %v4490 = vmul.f32 %v4486, %v4488
        %4491 = vrot.lane.b32.xlu0 %v3521, 32
        %v4492 = vpop.permute.xlu0 %4491
        %v4494 = vadd.f32 %v4490, %v4492
        %s4495 = scalar_lea.vmem %s5, 32
        %v4496 = vld [vmem:[%s4495] sm:$0xff]
        %v4497 = vld [vmem:[%s4495 + $0x8] sm:$0xff]
        %v4498 = vld [vmem:[%s4495 + $0x10] sm:$0xff]
        %v4499 = vld [vmem:[%s4495 + $0x18] sm:$0xff]
        %v4500 = vlaneseq
        %v4501 = vshrl.u32 %v4500, 7
        %v4502 = vsub.s32 4, %v4501
        %v4503 = vrot.slane %v2570, %v4502
        %v4505 = vsel %vm461, %v4494, 0
        %4507 = vmatprep.subr.mxu0 0.0
        %4508 = vmatpush1.msra.mxu0 %v4496
        %4509 = vmatprep.subr.mxu0 0.0
        %4510 = vmatpush1.msra.mxu0 %v4497
        %4511 = vmatprep.subr.mxu0 0.0
        %4512 = vmatpush1.msra.mxu0 %v4498
        %4513 = vmatprep.subr.mxu0 0.0
        %4514 = vmatpush1.msra.mxu0 %v4499
        %4515 = vmatprep.subr.mxu0 0.0
        %4516 = vmatpush1.msra.mxu0 0.0
        %4517 = vmatprep.subr.mxu0 0.0
        %4518 = vmatpush1.msra.mxu0 0.0
        %4519 = vmatprep.subr.mxu0 0.0
        %4520 = vmatpush1.msra.mxu0 0.0
        %4521 = vmatprep.subr.mxu0 0.0
        %4522 = vmatpush1.msra.mxu0 0.0
        %4523 = vmatprep.subr.mxu0 0.0
        %4524 = vmatpush1.msra.mxu0 0.0
        %4525 = vmatprep.subr.mxu0 0.0
        %4526 = vmatpush1.msra.mxu0 0.0
        %4527 = vmatprep.subr.mxu0 0.0
        %4528 = vmatpush1.msra.mxu0 0.0
        %4529 = vmatprep.subr.mxu0 0.0
        %4530 = vmatpush1.msra.mxu0 0.0
        %4531 = vmatprep.subr.mxu0 0.0
        %4532 = vmatpush1.msra.mxu0 0.0
        %4533 = vmatprep.subr.mxu0 0.0
        %4534 = vmatpush1.msra.mxu0 0.0
        %4535 = vmatprep.subr.mxu0 0.0
        %4536 = vmatpush1.msra.mxu0 0.0
        %4537 = vmatprep.subr.mxu0 0.0
        %4538 = vmatpush1.msra.mxu0 0.0
        %4539 = vmatprep.subr.mxu0 0.0
        %4540 = vmatpush1.msra.mxu0 0.0
        %4541 = vmatprep.subr.mxu0 0.0
        %4542 = vmatpush1.msra.mxu0 0.0
        %4543 = vmatprep.subr.mxu0 0.0
        %4544 = vmatpush1.msra.mxu0 0.0
        %4545 = vmatprep.subr.mxu0 0.0
        %4546 = vmatpush1.msra.mxu0 0.0
        %4547 = vmatprep.subr.mxu0 0.0
        %4548 = vmatpush1.msra.mxu0 0.0
        %4549 = vmatprep.subr.mxu0 0.0
        %4550 = vmatpush1.msra.mxu0 0.0
        %4551 = vmatprep.subr.mxu0 0.0
        %4552 = vmatpush1.msra.mxu0 0.0
        %4553 = vmatprep.subr.mxu0 0.0
        %4554 = vmatpush1.msra.mxu0 0.0
        %4555 = vmatprep.subr.mxu0 0.0
        %4556 = vmatpush1.msra.mxu0 0.0
        %4557 = vmatprep.subr.mxu0 0.0
        %4558 = vmatpush1.msra.mxu0 0.0
        %4559 = vmatprep.subr.mxu0 0.0
        %4560 = vmatpush1.msra.mxu0 0.0
        %4561 = vmatprep.subr.mxu0 0.0
        %4562 = vmatpush1.msra.mxu0 0.0
        %4563 = vmatprep.subr.mxu0 0.0
        %4564 = vmatpush1.msra.mxu0 0.0
        %4565 = vmatprep.subr.mxu0 0.0
        %4566 = vmatpush1.msra.mxu0 0.0
        %4567 = vmatprep.subr.mxu0 0.0
        %4568 = vmatpush1.msra.mxu0 0.0
        %4569 = vmatprep.subr.mxu0 0.0
        %4570 = vmatpush1.msra.mxu0 0.0
        %4571 = vmatprep.mubr.f32.mxu0 0.0
        %4572 = vmatmul.mubr.f32.gmra.mrb[0].mxu0 %v4505
        %v4573 = vpop.f32.mrb[0].mxu0
        %v4574 = vadd.f32 %v4503, %v4573
        %v4575 = vpop.f32.mrb[0].mxu0
        %4576 = vdwg.mxu0
        %v4577 = vmax.f32 %v4574, 0.0
        %s4578 = scalar_lea.vmem %s6, 64
        %v4579 = vld [vmem:[%s4578] sm:$0xff]
        %v4580 = vld [vmem:[%s4578 + $0x8] sm:$0xff]
        %v4581 = vld [vmem:[%s4578 + $0x10] sm:$0xff]
        %v4582 = vld [vmem:[%s4578 + $0x18] sm:$0xff]
        %v4583 = vld [vmem:[%s4578 + $0x20] sm:$0xff]
        %v4584 = vld [vmem:[%s4578 + $0x28] sm:$0xff]
        %v4585 = vld [vmem:[%s4578 + $0x30] sm:$0xff]
        %v4586 = vld [vmem:[%s4578 + $0x38] sm:$0xff]
        %v4587 = vlaneseq
        %v4588 = vshrl.u32 %v4587, 7
        %v4589 = vsub.s32 3, %v4588
        %v4590 = vrot.slane %v2570, %v4589
        %4592 = vrot.lane.b32.xlu0 %v4590, 64
        %v4593 = vpop.permute.xlu0 %4592
        %v4596 = vsel %vm2476, %v4577, 0
        %4598 = vmatprep.subr.mxu0 0.0
        %4599 = vmatpush1.msra.mxu0 %v4579
        %4600 = vmatprep.subr.mxu0 0.0
        %4601 = vmatpush1.msra.mxu0 %v4580
        %4602 = vmatprep.subr.mxu0 0.0
        %4603 = vmatpush1.msra.mxu0 %v4581
        %4604 = vmatprep.subr.mxu0 0.0
        %4605 = vmatpush1.msra.mxu0 %v4582
        %4606 = vmatprep.subr.mxu0 0.0
        %4607 = vmatpush1.msra.mxu0 %v4583
        %4608 = vmatprep.subr.mxu0 0.0
        %4609 = vmatpush1.msra.mxu0 %v4584
        %4610 = vmatprep.subr.mxu0 0.0
        %4611 = vmatpush1.msra.mxu0 %v4585
        %4612 = vmatprep.subr.mxu0 0.0
        %4613 = vmatpush1.msra.mxu0 %v4586
        %4614 = vmatprep.subr.mxu0 0.0
        %4615 = vmatpush1.msra.mxu0 0.0
        %4616 = vmatprep.subr.mxu0 0.0
        %4617 = vmatpush1.msra.mxu0 0.0
        %4618 = vmatprep.subr.mxu0 0.0
        %4619 = vmatpush1.msra.mxu0 0.0
        %4620 = vmatprep.subr.mxu0 0.0
        %4621 = vmatpush1.msra.mxu0 0.0
        %4622 = vmatprep.subr.mxu0 0.0
        %4623 = vmatpush1.msra.mxu0 0.0
        %4624 = vmatprep.subr.mxu0 0.0
        %4625 = vmatpush1.msra.mxu0 0.0
        %4626 = vmatprep.subr.mxu0 0.0
        %4627 = vmatpush1.msra.mxu0 0.0
        %4628 = vmatprep.subr.mxu0 0.0
        %4629 = vmatpush1.msra.mxu0 0.0
        %4630 = vmatprep.subr.mxu0 0.0
        %4631 = vmatpush1.msra.mxu0 0.0
        %4632 = vmatprep.subr.mxu0 0.0
        %4633 = vmatpush1.msra.mxu0 0.0
        %4634 = vmatprep.subr.mxu0 0.0
        %4635 = vmatpush1.msra.mxu0 0.0
        %4636 = vmatprep.subr.mxu0 0.0
        %4637 = vmatpush1.msra.mxu0 0.0
        %4638 = vmatprep.subr.mxu0 0.0
        %4639 = vmatpush1.msra.mxu0 0.0
        %4640 = vmatprep.subr.mxu0 0.0
        %4641 = vmatpush1.msra.mxu0 0.0
        %4642 = vmatprep.subr.mxu0 0.0
        %4643 = vmatpush1.msra.mxu0 0.0
        %4644 = vmatprep.subr.mxu0 0.0
        %4645 = vmatpush1.msra.mxu0 0.0
        %4646 = vmatprep.subr.mxu0 0.0
        %4647 = vmatpush1.msra.mxu0 0.0
        %4648 = vmatprep.subr.mxu0 0.0
        %4649 = vmatpush1.msra.mxu0 0.0
        %4650 = vmatprep.subr.mxu0 0.0
        %4651 = vmatpush1.msra.mxu0 0.0
        %4652 = vmatprep.subr.mxu0 0.0
        %4653 = vmatpush1.msra.mxu0 0.0
        %4654 = vmatprep.subr.mxu0 0.0
        %4655 = vmatpush1.msra.mxu0 0.0
        %4656 = vmatprep.subr.mxu0 0.0
        %4657 = vmatpush1.msra.mxu0 0.0
        %4658 = vmatprep.subr.mxu0 0.0
        %4659 = vmatpush1.msra.mxu0 0.0
        %4660 = vmatprep.subr.mxu0 0.0
        %4661 = vmatpush1.msra.mxu0 0.0
        %4662 = vmatprep.mubr.f32.mxu0 0.0
        %4663 = vmatmul.mubr.f32.gmra.mrb[0].mxu0 %v4596
        %v4664 = vpop.f32.mrb[0].mxu0
        %v4665 = vadd.f32 %v4593, %v4664
        %v4666 = vpop.f32.mrb[0].mxu0
        %4667 = vdwg.mxu0
        %v4668 = vadd.f32 %v4494, %v4665
        %v4669 = vsel %vm461, %v4668, 0.0
        %4670 = vadd.xlane.f32.xlu0 %v4669
        %v4671 = vpop.xlane.xlu0 %4670
        %v4672 = vmul.f32 %v4671, %v1393
        %v4673 = vsub.f32 %v4668, %v4672
        %v4674 = vmul.f32 %v4673, %v4673
        %v4675 = vsel %vm461, %v4674, 0.0
        %4676 = vadd.xlane.f32.xlu0 %v4675
        %v4677 = vpop.xlane.xlu0 %4676
        %v4678 = vmul.f32 %v4677, %v1393
        %v4679 = vadd.f32 %v4678, 1e-05
        %v4680 = vrsqrt.pop %v4679
        %v4681 = vmul.f32 %v4673, %v4680
        %v4682 = vmul.f32 %v4681, %v4590
        %4683 = vrot.lane.b32.xlu0 %v4590, 96
        %v4684 = vpop.permute.xlu0 %4683
        %v4686 = vadd.f32 %v4682, %v4684
        %4687 = vst.msk [vmem:[%s433] sm:$0xff] %vm461, %v4686
        %4688 = vst.msk [vmem:[%s440] sm:$0xff] %vm461, %v4472
        %s4689 = sand.u32 %s229, 1
        %s4690 = scalar_lea.sflag [#allocation4], %s4689
        %s4691 = sand.u32 %s229, 1
        %s4692 = smul.addr %s4691, 8
        %s4693 = scalar_lea.vmem [#allocation8], %s4692
        %s4694 = sand.u32 %s255, 1
        %s4695 = scalar_lea.sflag [#allocation10], %s4694
        %s4696 = sand.u32 %s255, 1
        %s4697 = smul.addr %s4696, 8
        %s4698 = scalar_lea.vmem [#allocation9], %s4697
        // Predicated region
        $region65: #{tpu_custom_call.1} parent=51 // pred_check
          %p4699 = pneg %p239
        $region66: #{tpu_custom_call.1} parent=51 // pred_check_branch
          %4701 = sbr.rel (%p4699) target = $region68
        $region67: #{tpu_custom_call.1} parent=51 // pred_region
          %s4703 = ssub.s32 128, 128
          %4704 = vsyncadd %s4690, %s4703
          %s4705 = smul.addr %s33, 128
          %s4706 = scalar_lea.hbm %s8, %s4705
          %s4708 = sshll.u32 %s4693, 4
          %s4709 = int_to_ptr.vmem [resolvable:$true] %s4708
          %4711 = dma.vmem_to_hbm [thread:$0]  %s4709, 128, %s4706, %s4690
        $region68: #{tpu_custom_call.1} parent=51 // pred_fallthru
          _
        // Predicated region
        $region69: #{tpu_custom_call.1} parent=51 // pred_check
          %p4712 = pneg %p265
        $region70: #{tpu_custom_call.1} parent=51 // pred_check_branch
          %4714 = sbr.rel (%p4712) target = $region72
        $region71: #{tpu_custom_call.1} parent=51 // pred_region
          %s4716 = ssub.s32 128, 128
          %4717 = vsyncadd %s4695, %s4716
          %s4718 = smul.addr %s33, 128
          %s4719 = scalar_lea.hbm %s9, %s4718
          %s4721 = sshll.u32 %s4698, 4
          %s4722 = int_to_ptr.vmem [resolvable:$true] %s4721
          %4724 = dma.vmem_to_hbm [thread:$0]  %s4722, 128, %s4719, %s4695
        $region72: #{tpu_custom_call.1} parent=51 // pred_fallthru
          _
      $region52: #{tpu_custom_call.1} parent=5 // pred_fallthru
        _
      %p4725 = scmp.le.s32.totalorder 2, %s28
      // Predicated region
      $region73: #{tpu_custom_call.1} parent=5 // pred_check
        %p4726 = pneg %p4725
      $region74: #{tpu_custom_call.1} parent=5 // pred_check_branch
        %4728 = sbr.rel (%p4726) target = $region76
      $region75: #{tpu_custom_call.1} parent=5 // pred_region
        %s4729 = ssub.s32 %s28, 2
        // Predicated region
        $region77: #{tpu_custom_call.1} parent=75 // pred_check
          %p4730 = pneg %p245
        $region78: #{tpu_custom_call.1} parent=75 // pred_check_branch
          %4732 = sbr.rel (%p4730) target = $region80
        $region79: #{tpu_custom_call.1} parent=75 // pred_region
          %s4733 = sand.u32 %s230, 1
          %s4734 = scalar_lea.sflag [#allocation4], %s4733
          %s4735 = sand.u32 %s230, 1
          %s4736 = smul.addr %s4735, 8
          %s4737 = scalar_lea.vmem [#allocation8], %s4736
          %4738 = dma.done %s4734, 128
        $region80: #{tpu_custom_call.1} parent=75 // pred_fallthru
          _
        // Predicated region
        $region81: #{tpu_custom_call.1} parent=75 // pred_check
          %p4739 = pneg %p271
        $region82: #{tpu_custom_call.1} parent=75 // pred_check_branch
          %4741 = sbr.rel (%p4739) target = $region84
        $region83: #{tpu_custom_call.1} parent=75 // pred_region
          %s4742 = sand.u32 %s256, 1
          %s4743 = scalar_lea.sflag [#allocation10], %s4742
          %s4744 = sand.u32 %s256, 1
          %s4745 = smul.addr %s4744, 8
          %s4746 = scalar_lea.vmem [#allocation9], %s4745
          %4747 = dma.done %s4743, 128
        $region84: #{tpu_custom_call.1} parent=75 // pred_fallthru
          _
      $region76: #{tpu_custom_call.1} parent=5 // pred_fallthru
        _
    $region6: #{tpu_custom_call.1} parent=1 // loop_footer
      %s32 = sadd.s32 1, %s28
    $region7: #{tpu_custom_call.1} parent=1 // loop_footer_branch
      %27 = sbr.rel target = $region3
    $region8: #{tpu_custom_call.1} parent=1 // loop_exit
      _
    %4748 = vsyncpa [#allocation3], 1
    %s4749 = scalar_lea.sflag [#allocation3], 1
    %4750 = vsyncpa %s4749, 1
    %4751 = vsyncpa [#allocation6], 1
    %s4752 = scalar_lea.sflag [#allocation6], 1
    %4753 = vsyncpa %s4752, 1
    %4754 = vsyncpa [#allocation4], 1
    %s4755 = scalar_lea.sflag [#allocation4], 1
    %4756 = vsyncpa %s4755, 1
    %4757 = vsyncpa [#allocation10], 1
    %s4758 = scalar_lea.sflag [#allocation10], 1
    %4759 = vsyncpa %s4758, 1

</llo_original>
